<compile_context>
chip_gen: v5e
topology: v5e:2x2
jax: 0.10.0
libtpu: 0.0.40
codegen_flags: <defaults>
</compile_context>

<pallas_src>
import functools

import jax
import jax.numpy as jnp
from jax.experimental import pallas as pl
from jax.experimental.pallas import tpu as pltpu


def _conv_kernel(x_ref, w_ref, o_ref, p3_ref, p2_ref, *, C_in, K, OH, OW, Kd):
    """One batch image: o = relu(im2col(x) @ W^T), laid out (OH*OW, C_out).

    x_ref : (1, C_in, H, W)    f32   input image block
    w_ref : (Kd_pad, C_out)    bf16  W^T, zero-padded; row Kd holds the bias
    o_ref : (1, OH*OW, C_out)  f32   output block (lane dim = C_out, unmasked)
    p3_ref: (Kd_pad, OH, OW)   f32   scratch: sliding-window slices
    p2_ref: (Kd_pad, OH*OW)    f32   scratch: flat patch matrix (patches^T)
    """
    Kd_pad, M_out = p2_ref.shape

    # Fused im2col, stage 1: row r = (c, kh, kw) of patches^T as an (OH, OW)
    # sliding-window slice of the image (static slices, stays in VMEM).
    # Rows [Kd, Kd_pad) of p3 are never written (their copies in stage 2 are
    # overwritten by the constant rows below before any arithmetic uses them).
    for c in range(C_in):
        for kh in range(K):
            for kw in range(K):
                r = (c * K + kh) * K + kw
                p3_ref[r] = x_ref[0, c, kh:kh + OH, kw:kw + OW]

    # Stage 2: flatten (OH, OW) -> OH*OW lanes of the 2-D patch matrix.
    for oh in range(OH):
        p2_ref[:, oh * OW:(oh + 1) * OW] = p3_ref[:, oh, :]

    # Constant contraction rows: row Kd = 1.0 (folded bias), rows > Kd = 0.0
    # (NaN-safe zero padding).  Rewritten every grid step on purpose: scratch
    # is per-core and a "parallel"-split core may never run program_id == 0.
    if Kd + 1 < Kd_pad:
        p2_ref[Kd + 1:, :] = jnp.zeros((Kd_pad - Kd - 1, M_out), p2_ref.dtype)
    p2_ref[Kd:Kd + 1, :] = jnp.ones((1, M_out), p2_ref.dtype)

    # Flipped MXU matmul: (M_out, Kd_pad) @ (Kd_pad, C_out), bf16 operands,
    # f32 accumulation.  Single f32 transpose + cast in registers (XLU/VPU
    # slots), then relu and a lane-dense store (last dim = C_out).
    patches = jnp.transpose(p2_ref[...]).astype(w_ref.dtype)
    acc = jnp.dot(patches, w_ref[...], preferred_element_type=jnp.float32)
    o_ref[0] = jnp.maximum(acc, 0.0).astype(o_ref.dtype)


@functools.partial(jax.jit, static_argnames=("kernel_size",))
def conv_layer_forward(x, weight, bias, *, kernel_size=9):
    """x: (B, C_in, H, W) f32; weight: (C_out, C_in, K, K); bias: (C_out,).

    Returns relu(conv2d(x, weight, bias, stride=1)) as (B, C_out, OH, OW).
    """
    B, C_in, H, W = x.shape
    C_out = weight.shape[0]
    K = kernel_size
    OH, OW = H - K + 1, W - K + 1
    M_out = OH * OW                       # output pixels per batch element
    Kd = C_in * K * K                     # receptive field, (c, kh, kw) order
    # Pad the contraction dim to a multiple of 128, leaving room for the
    # folded-bias ones row (81 -> 128: exactly one MXU K pass on every chip).
    Kd_pad = ((Kd + 1 + 127) // 128) * 128

    # W^T (Kd_pad, C_out): rows [0,Kd) = flattened conv weight, row Kd = bias,
    # rest zero; bf16 for the native MXU path.  Tiny arrays -> negligible prep.
    w_t = jnp.zeros((Kd_pad, C_out), jnp.float32)
    w_t = w_t.at[:Kd].set(weight.reshape(C_out, Kd).T)
    w_t = w_t.at[Kd].set(bias)
    w_t = w_t.astype(jnp.bfloat16)

    kernel = functools.partial(_conv_kernel, C_in=C_in, K=K, OH=OH, OW=OW, Kd=Kd)

    flops = 2 * B * M_out * Kd_pad * C_out
    bytes_accessed = (B * C_in * H * W * 4        # image read
                      + Kd_pad * C_out * 2        # weight read (resident)
                      + B * M_out * C_out * 4)    # output write

    out = pl.pallas_call(
        kernel,
        out_shape=jax.ShapeDtypeStruct((B, M_out, C_out), jnp.float32),
        grid_spec=pltpu.PrefetchScalarGridSpec(
            num_scalar_prefetch=0,
            grid=(B,),                                              # 1-D grid
            in_specs=[
                pl.BlockSpec((1, C_in, H, W), lambda b: (b, 0, 0, 0)),   # image
                pl.BlockSpec((Kd_pad, C_out), lambda b: (0, 0)),         # W^T (resident)
            ],
            out_specs=pl.BlockSpec((1, M_out, C_out), lambda b: (b, 0, 0)),
            scratch_shapes=[
                pltpu.VMEM((Kd_pad, OH, OW), jnp.float32),   # im2col slices
                pltpu.VMEM((Kd_pad, M_out), jnp.float32),    # flat patch matrix
            ],
        ),
        compiler_params=pltpu.CompilerParams(
            dimension_semantics=("parallel",)),     # B >= 2 -> both v7x TCs busy
        cost_estimate=pl.CostEstimate(
            flops=flops, transcendentals=0, bytes_accessed=bytes_accessed),
    )(x, w_t)

    # (B, OH*OW, C_out) -> NCHW.  The flipped in-kernel layout makes this a
    # real (but small, fused) XLA transpose; see module TODO for consumers
    # that can take the lane-dense layout directly.
    return jnp.transpose(out, (0, 2, 1)).reshape(B, C_out, OH, OW)


if __name__ == "__main__":
    # Module defaults: in_channels=1, out_channels=256, kernel_size=9.
    B, C_in, H, W = 2, 1, 16, 16
    C_out, K = 256, 9

    key = jax.random.PRNGKey(0)
    kx, kw, kb = jax.random.split(key, 3)

    x = jax.random.normal(kx, (B, C_in, H, W), dtype=jnp.float32)
    # Deterministic PyTorch-like (kaiming-uniform-ish) init, synthetic.
    fan_in = C_in * K * K
    bound = 1.0 / (fan_in ** 0.5)
    weight = jax.random.uniform(kw, (C_out, C_in, K, K), jnp.float32,
                                minval=-bound, maxval=bound)
    bias = jax.random.uniform(kb, (C_out,), jnp.float32,
                              minval=-bound, maxval=bound)

    out = conv_layer_forward(x, weight, bias, kernel_size=K)
    jax.block_until_ready(out)

    # Cross-check against XLA's conv + relu (kernel uses bf16 MXU operands,
    # so tolerance is loosened accordingly).
    ref = jax.lax.conv_general_dilated(
        x, weight, window_strides=(1, 1), padding="VALID",
        dimension_numbers=("NCHW", "OIHW", "NCHW"))
    ref = jnp.maximum(ref + bias.reshape(1, C_out, 1, 1), 0.0)
    assert out.shape == (B, C_out, H - K + 1, W - K + 1)
    assert jnp.allclose(out, ref, atol=2e-2, rtol=2e-2)

    print("KERNEL_OK")
</pallas_src>

<mosaic_0001>
module attributes {stable_mosaic.version = 11 : i64} {
  func.func @_conv_kernel(%arg0: i32, %arg1: memref<1x1x16x16xf32, #tpu.memory_space<vmem>>, %arg2: memref<128x256xbf16, #tpu.memory_space<vmem>>, %arg3: memref<1x64x256xf32, #tpu.memory_space<vmem>>, %arg4: memref<128x8x8xf32, #tpu.memory_space<vmem>>, %arg5: memref<128x64xf32, #tpu.memory_space<vmem>>) attributes {dimension_semantics = [#tpu.dimension_semantics<parallel>], iteration_bounds = array<i64: 2>, scalar_prefetch = 0 : i64, scratch_operands = 2 : i64, tpu.core_type = #tpu.core_type<tc>, window_params = [{transform_indices = @transform_0, window_bounds = array<i64: 1, 1, 16, 16>}, {pipeline_mode = #tpu.pipeline_mode<synchronous>, transform_indices = @transform_1, window_bounds = array<i64: 128, 256>}, {transform_indices = @transform_2, window_bounds = array<i64: 1, 64, 256>}]} {
    %c0 = arith.constant 0 : index
    %c0_0 = arith.constant 0 : index
    %c0_1 = arith.constant 0 : index
    %c0_2 = arith.constant 0 : index
    %0 = vector.load %arg1[%c0, %c0_0, %c0_1, %c0_2] : memref<1x1x16x16xf32, #tpu.memory_space<vmem>>, vector<1x1x8x8xf32>
    %1 = vector.shape_cast %0 : vector<1x1x8x8xf32> to vector<8x8xf32>
    %c0_3 = arith.constant 0 : index
    %c0_4 = arith.constant 0 : index
    %c0_5 = arith.constant 0 : index
    %2 = vector.load %arg4[%c0_3, %c0_4, %c0_5] : memref<128x8x8xf32, #tpu.memory_space<vmem>>, vector<1x8x8xf32>
    %3 = vector.shape_cast %2 : vector<1x8x8xf32> to vector<8x8xf32>
    %4 = vector.shape_cast %1 : vector<8x8xf32> to vector<1x8x8xf32>
    tpu.vector_store %arg4[%c0_3, %c0_4, %c0_5], %4 {strides = array<i32>} : memref<128x8x8xf32, #tpu.memory_space<vmem>>, vector<1x8x8xf32>,
    %c0_6 = arith.constant 0 : index
    %c0_7 = arith.constant 0 : index
    %c0_8 = arith.constant 0 : index
    %c1 = arith.constant 1 : index
    %5 = vector.load %arg1[%c0_6, %c0_7, %c0_8, %c1] : memref<1x1x16x16xf32, #tpu.memory_space<vmem>>, vector<1x1x8x8xf32>
    %6 = vector.shape_cast %5 : vector<1x1x8x8xf32> to vector<8x8xf32>
    %c1_9 = arith.constant 1 : index
    %c0_10 = arith.constant 0 : index
    %c0_11 = arith.constant 0 : index
    %7 = vector.load %arg4[%c1_9, %c0_10, %c0_11] : memref<128x8x8xf32, #tpu.memory_space<vmem>>, vector<1x8x8xf32>
    %8 = vector.shape_cast %7 : vector<1x8x8xf32> to vector<8x8xf32>
    %9 = vector.shape_cast %6 : vector<8x8xf32> to vector<1x8x8xf32>
    tpu.vector_store %arg4[%c1_9, %c0_10, %c0_11], %9 {strides = array<i32>} : memref<128x8x8xf32, #tpu.memory_space<vmem>>, vector<1x8x8xf32>,
    %c0_12 = arith.constant 0 : index
    %c0_13 = arith.constant 0 : index
    %c0_14 = arith.constant 0 : index
    %c2 = arith.constant 2 : index
    %10 = vector.load %arg1[%c0_12, %c0_13, %c0_14, %c2] : memref<1x1x16x16xf32, #tpu.memory_space<vmem>>, vector<1x1x8x8xf32>
    %11 = vector.shape_cast %10 : vector<1x1x8x8xf32> to vector<8x8xf32>
    %c2_15 = arith.constant 2 : index
    %c0_16 = arith.constant 0 : index
    %c0_17 = arith.constant 0 : index
    %12 = vector.load %arg4[%c2_15, %c0_16, %c0_17] : memref<128x8x8xf32, #tpu.memory_space<vmem>>, vector<1x8x8xf32>
    %13 = vector.shape_cast %12 : vector<1x8x8xf32> to vector<8x8xf32>
    %14 = vector.shape_cast %11 : vector<8x8xf32> to vector<1x8x8xf32>
    tpu.vector_store %arg4[%c2_15, %c0_16, %c0_17], %14 {strides = array<i32>} : memref<128x8x8xf32, #tpu.memory_space<vmem>>, vector<1x8x8xf32>,
    %c0_18 = arith.constant 0 : index
    %c0_19 = arith.constant 0 : index
    %c0_20 = arith.constant 0 : index
    %c3 = arith.constant 3 : index
    %15 = vector.load %arg1[%c0_18, %c0_19, %c0_20, %c3] : memref<1x1x16x16xf32, #tpu.memory_space<vmem>>, vector<1x1x8x8xf32>
    %16 = vector.shape_cast %15 : vector<1x1x8x8xf32> to vector<8x8xf32>
    %c3_21 = arith.constant 3 : index
    %c0_22 = arith.constant 0 : index
    %c0_23 = arith.constant 0 : index
    %17 = vector.load %arg4[%c3_21, %c0_22, %c0_23] : memref<128x8x8xf32, #tpu.memory_space<vmem>>, vector<1x8x8xf32>
    %18 = vector.shape_cast %17 : vector<1x8x8xf32> to vector<8x8xf32>
    %19 = vector.shape_cast %16 : vector<8x8xf32> to vector<1x8x8xf32>
    tpu.vector_store %arg4[%c3_21, %c0_22, %c0_23], %19 {strides = array<i32>} : memref<128x8x8xf32, #tpu.memory_space<vmem>>, vector<1x8x8xf32>,
    %c0_24 = arith.constant 0 : index
    %c0_25 = arith.constant 0 : index
    %c0_26 = arith.constant 0 : index
    %c4 = arith.constant 4 : index
    %20 = vector.load %arg1[%c0_24, %c0_25, %c0_26, %c4] : memref<1x1x16x16xf32, #tpu.memory_space<vmem>>, vector<1x1x8x8xf32>
    %21 = vector.shape_cast %20 : vector<1x1x8x8xf32> to vector<8x8xf32>
    %c4_27 = arith.constant 4 : index
    %c0_28 = arith.constant 0 : index
    %c0_29 = arith.constant 0 : index
    %22 = vector.load %arg4[%c4_27, %c0_28, %c0_29] : memref<128x8x8xf32, #tpu.memory_space<vmem>>, vector<1x8x8xf32>
    %23 = vector.shape_cast %22 : vector<1x8x8xf32> to vector<8x8xf32>
    %24 = vector.shape_cast %21 : vector<8x8xf32> to vector<1x8x8xf32>
    tpu.vector_store %arg4[%c4_27, %c0_28, %c0_29], %24 {strides = array<i32>} : memref<128x8x8xf32, #tpu.memory_space<vmem>>, vector<1x8x8xf32>,
    %c0_30 = arith.constant 0 : index
    %c0_31 = arith.constant 0 : index
    %c0_32 = arith.constant 0 : index
    %c5 = arith.constant 5 : index
    %25 = vector.load %arg1[%c0_30, %c0_31, %c0_32, %c5] : memref<1x1x16x16xf32, #tpu.memory_space<vmem>>, vector<1x1x8x8xf32>
    %26 = vector.shape_cast %25 : vector<1x1x8x8xf32> to vector<8x8xf32>
    %c5_33 = arith.constant 5 : index
    %c0_34 = arith.constant 0 : index
    %c0_35 = arith.constant 0 : index
    %27 = vector.load %arg4[%c5_33, %c0_34, %c0_35] : memref<128x8x8xf32, #tpu.memory_space<vmem>>, vector<1x8x8xf32>
    %28 = vector.shape_cast %27 : vector<1x8x8xf32> to vector<8x8xf32>
    %29 = vector.shape_cast %26 : vector<8x8xf32> to vector<1x8x8xf32>
    tpu.vector_store %arg4[%c5_33, %c0_34, %c0_35], %29 {strides = array<i32>} : memref<128x8x8xf32, #tpu.memory_space<vmem>>, vector<1x8x8xf32>,
    %c0_36 = arith.constant 0 : index
    %c0_37 = arith.constant 0 : index
    %c0_38 = arith.constant 0 : index
    %c6 = arith.constant 6 : index
    %30 = vector.load %arg1[%c0_36, %c0_37, %c0_38, %c6] : memref<1x1x16x16xf32, #tpu.memory_space<vmem>>, vector<1x1x8x8xf32>
    %31 = vector.shape_cast %30 : vector<1x1x8x8xf32> to vector<8x8xf32>
    %c6_39 = arith.constant 6 : index
    %c0_40 = arith.constant 0 : index
    %c0_41 = arith.constant 0 : index
    %32 = vector.load %arg4[%c6_39, %c0_40, %c0_41] : memref<128x8x8xf32, #tpu.memory_space<vmem>>, vector<1x8x8xf32>
    %33 = vector.shape_cast %32 : vector<1x8x8xf32> to vector<8x8xf32>
    %34 = vector.shape_cast %31 : vector<8x8xf32> to vector<1x8x8xf32>
    tpu.vector_store %arg4[%c6_39, %c0_40, %c0_41], %34 {strides = array<i32>} : memref<128x8x8xf32, #tpu.memory_space<vmem>>, vector<1x8x8xf32>,
    %c0_42 = arith.constant 0 : index
    %c0_43 = arith.constant 0 : index
    %c0_44 = arith.constant 0 : index
    %c7 = arith.constant 7 : index
    %35 = vector.load %arg1[%c0_42, %c0_43, %c0_44, %c7] : memref<1x1x16x16xf32, #tpu.memory_space<vmem>>, vector<1x1x8x8xf32>
    %36 = vector.shape_cast %35 : vector<1x1x8x8xf32> to vector<8x8xf32>
    %c7_45 = arith.constant 7 : index
    %c0_46 = arith.constant 0 : index
    %c0_47 = arith.constant 0 : index
    %37 = vector.load %arg4[%c7_45, %c0_46, %c0_47] : memref<128x8x8xf32, #tpu.memory_space<vmem>>, vector<1x8x8xf32>
    %38 = vector.shape_cast %37 : vector<1x8x8xf32> to vector<8x8xf32>
    %39 = vector.shape_cast %36 : vector<8x8xf32> to vector<1x8x8xf32>
    tpu.vector_store %arg4[%c7_45, %c0_46, %c0_47], %39 {strides = array<i32>} : memref<128x8x8xf32, #tpu.memory_space<vmem>>, vector<1x8x8xf32>,
    %c0_48 = arith.constant 0 : index
    %c0_49 = arith.constant 0 : index
    %c0_50 = arith.constant 0 : index
    %c8 = arith.constant 8 : index
    %40 = vector.load %arg1[%c0_48, %c0_49, %c0_50, %c8] : memref<1x1x16x16xf32, #tpu.memory_space<vmem>>, vector<1x1x8x8xf32>
    %41 = vector.shape_cast %40 : vector<1x1x8x8xf32> to vector<8x8xf32>
    %c8_51 = arith.constant 8 : index
    %c0_52 = arith.constant 0 : index
    %c0_53 = arith.constant 0 : index
    %42 = vector.load %arg4[%c8_51, %c0_52, %c0_53] : memref<128x8x8xf32, #tpu.memory_space<vmem>>, vector<1x8x8xf32>
    %43 = vector.shape_cast %42 : vector<1x8x8xf32> to vector<8x8xf32>
    %44 = vector.shape_cast %41 : vector<8x8xf32> to vector<1x8x8xf32>
    tpu.vector_store %arg4[%c8_51, %c0_52, %c0_53], %44 {strides = array<i32>} : memref<128x8x8xf32, #tpu.memory_space<vmem>>, vector<1x8x8xf32>,
    %c0_54 = arith.constant 0 : index
    %c0_55 = arith.constant 0 : index
    %c1_56 = arith.constant 1 : index
    %c0_57 = arith.constant 0 : index
    %45 = vector.load %arg1[%c0_54, %c0_55, %c1_56, %c0_57] : memref<1x1x16x16xf32, #tpu.memory_space<vmem>>, vector<1x1x8x8xf32>
    %46 = vector.shape_cast %45 : vector<1x1x8x8xf32> to vector<8x8xf32>
    %c9 = arith.constant 9 : index
    %c0_58 = arith.constant 0 : index
    %c0_59 = arith.constant 0 : index
    %47 = vector.load %arg4[%c9, %c0_58, %c0_59] : memref<128x8x8xf32, #tpu.memory_space<vmem>>, vector<1x8x8xf32>
    %48 = vector.shape_cast %47 : vector<1x8x8xf32> to vector<8x8xf32>
    %49 = vector.shape_cast %46 : vector<8x8xf32> to vector<1x8x8xf32>
    tpu.vector_store %arg4[%c9, %c0_58, %c0_59], %49 {strides = array<i32>} : memref<128x8x8xf32, #tpu.memory_space<vmem>>, vector<1x8x8xf32>,
    %c0_60 = arith.constant 0 : index
    %c0_61 = arith.constant 0 : index
    %c1_62 = arith.constant 1 : index
    %c1_63 = arith.constant 1 : index
    %50 = vector.load %arg1[%c0_60, %c0_61, %c1_62, %c1_63] : memref<1x1x16x16xf32, #tpu.memory_space<vmem>>, vector<1x1x8x8xf32>
    %51 = vector.shape_cast %50 : vector<1x1x8x8xf32> to vector<8x8xf32>
    %c10 = arith.constant 10 : index
    %c0_64 = arith.constant 0 : index
    %c0_65 = arith.constant 0 : index
    %52 = vector.load %arg4[%c10, %c0_64, %c0_65] : memref<128x8x8xf32, #tpu.memory_space<vmem>>, vector<1x8x8xf32>
    %53 = vector.shape_cast %52 : vector<1x8x8xf32> to vector<8x8xf32>
    %54 = vector.shape_cast %51 : vector<8x8xf32> to vector<1x8x8xf32>
    tpu.vector_store %arg4[%c10, %c0_64, %c0_65], %54 {strides = array<i32>} : memref<128x8x8xf32, #tpu.memory_space<vmem>>, vector<1x8x8xf32>,
    %c0_66 = arith.constant 0 : index
    %c0_67 = arith.constant 0 : index
    %c1_68 = arith.constant 1 : index
    %c2_69 = arith.constant 2 : index
    %55 = vector.load %arg1[%c0_66, %c0_67, %c1_68, %c2_69] : memref<1x1x16x16xf32, #tpu.memory_space<vmem>>, vector<1x1x8x8xf32>
    %56 = vector.shape_cast %55 : vector<1x1x8x8xf32> to vector<8x8xf32>
    %c11 = arith.constant 11 : index
    %c0_70 = arith.constant 0 : index
    %c0_71 = arith.constant 0 : index
    %57 = vector.load %arg4[%c11, %c0_70, %c0_71] : memref<128x8x8xf32, #tpu.memory_space<vmem>>, vector<1x8x8xf32>
    %58 = vector.shape_cast %57 : vector<1x8x8xf32> to vector<8x8xf32>
    %59 = vector.shape_cast %56 : vector<8x8xf32> to vector<1x8x8xf32>
    tpu.vector_store %arg4[%c11, %c0_70, %c0_71], %59 {strides = array<i32>} : memref<128x8x8xf32, #tpu.memory_space<vmem>>, vector<1x8x8xf32>,
    %c0_72 = arith.constant 0 : index
    %c0_73 = arith.constant 0 : index
    %c1_74 = arith.constant 1 : index
    %c3_75 = arith.constant 3 : index
    %60 = vector.load %arg1[%c0_72, %c0_73, %c1_74, %c3_75] : memref<1x1x16x16xf32, #tpu.memory_space<vmem>>, vector<1x1x8x8xf32>
    %61 = vector.shape_cast %60 : vector<1x1x8x8xf32> to vector<8x8xf32>
    %c12 = arith.constant 12 : index
    %c0_76 = arith.constant 0 : index
    %c0_77 = arith.constant 0 : index
    %62 = vector.load %arg4[%c12, %c0_76, %c0_77] : memref<128x8x8xf32, #tpu.memory_space<vmem>>, vector<1x8x8xf32>
    %63 = vector.shape_cast %62 : vector<1x8x8xf32> to vector<8x8xf32>
    %64 = vector.shape_cast %61 : vector<8x8xf32> to vector<1x8x8xf32>
    tpu.vector_store %arg4[%c12, %c0_76, %c0_77], %64 {strides = array<i32>} : memref<128x8x8xf32, #tpu.memory_space<vmem>>, vector<1x8x8xf32>,
    %c0_78 = arith.constant 0 : index
    %c0_79 = arith.constant 0 : index
    %c1_80 = arith.constant 1 : index
    %c4_81 = arith.constant 4 : index
    %65 = vector.load %arg1[%c0_78, %c0_79, %c1_80, %c4_81] : memref<1x1x16x16xf32, #tpu.memory_space<vmem>>, vector<1x1x8x8xf32>
    %66 = vector.shape_cast %65 : vector<1x1x8x8xf32> to vector<8x8xf32>
    %c13 = arith.constant 13 : index
    %c0_82 = arith.constant 0 : index
    %c0_83 = arith.constant 0 : index
    %67 = vector.load %arg4[%c13, %c0_82, %c0_83] : memref<128x8x8xf32, #tpu.memory_space<vmem>>, vector<1x8x8xf32>
    %68 = vector.shape_cast %67 : vector<1x8x8xf32> to vector<8x8xf32>
    %69 = vector.shape_cast %66 : vector<8x8xf32> to vector<1x8x8xf32>
    tpu.vector_store %arg4[%c13, %c0_82, %c0_83], %69 {strides = array<i32>} : memref<128x8x8xf32, #tpu.memory_space<vmem>>, vector<1x8x8xf32>,
    %c0_84 = arith.constant 0 : index
    %c0_85 = arith.constant 0 : index
    %c1_86 = arith.constant 1 : index
    %c5_87 = arith.constant 5 : index
    %70 = vector.load %arg1[%c0_84, %c0_85, %c1_86, %c5_87] : memref<1x1x16x16xf32, #tpu.memory_space<vmem>>, vector<1x1x8x8xf32>
    %71 = vector.shape_cast %70 : vector<1x1x8x8xf32> to vector<8x8xf32>
    %c14 = arith.constant 14 : index
    %c0_88 = arith.constant 0 : index
    %c0_89 = arith.constant 0 : index
    %72 = vector.load %arg4[%c14, %c0_88, %c0_89] : memref<128x8x8xf32, #tpu.memory_space<vmem>>, vector<1x8x8xf32>
    %73 = vector.shape_cast %72 : vector<1x8x8xf32> to vector<8x8xf32>
    %74 = vector.shape_cast %71 : vector<8x8xf32> to vector<1x8x8xf32>
    tpu.vector_store %arg4[%c14, %c0_88, %c0_89], %74 {strides = array<i32>} : memref<128x8x8xf32, #tpu.memory_space<vmem>>, vector<1x8x8xf32>,
    %c0_90 = arith.constant 0 : index
    %c0_91 = arith.constant 0 : index
    %c1_92 = arith.constant 1 : index
    %c6_93 = arith.constant 6 : index
    %75 = vector.load %arg1[%c0_90, %c0_91, %c1_92, %c6_93] : memref<1x1x16x16xf32, #tpu.memory_space<vmem>>, vector<1x1x8x8xf32>
    %76 = vector.shape_cast %75 : vector<1x1x8x8xf32> to vector<8x8xf32>
    %c15 = arith.constant 15 : index
    %c0_94 = arith.constant 0 : index
    %c0_95 = arith.constant 0 : index
    %77 = vector.load %arg4[%c15, %c0_94, %c0_95] : memref<128x8x8xf32, #tpu.memory_space<vmem>>, vector<1x8x8xf32>
    %78 = vector.shape_cast %77 : vector<1x8x8xf32> to vector<8x8xf32>
    %79 = vector.shape_cast %76 : vector<8x8xf32> to vector<1x8x8xf32>
    tpu.vector_store %arg4[%c15, %c0_94, %c0_95], %79 {strides = array<i32>} : memref<128x8x8xf32, #tpu.memory_space<vmem>>, vector<1x8x8xf32>,
    %c0_96 = arith.constant 0 : index
    %c0_97 = arith.constant 0 : index
    %c1_98 = arith.constant 1 : index
    %c7_99 = arith.constant 7 : index
    %80 = vector.load %arg1[%c0_96, %c0_97, %c1_98, %c7_99] : memref<1x1x16x16xf32, #tpu.memory_space<vmem>>, vector<1x1x8x8xf32>
    %81 = vector.shape_cast %80 : vector<1x1x8x8xf32> to vector<8x8xf32>
    %c16 = arith.constant 16 : index
    %c0_100 = arith.constant 0 : index
    %c0_101 = arith.constant 0 : index
    %82 = vector.load %arg4[%c16, %c0_100, %c0_101] : memref<128x8x8xf32, #tpu.memory_space<vmem>>, vector<1x8x8xf32>
    %83 = vector.shape_cast %82 : vector<1x8x8xf32> to vector<8x8xf32>
    %84 = vector.shape_cast %81 : vector<8x8xf32> to vector<1x8x8xf32>
    tpu.vector_store %arg4[%c16, %c0_100, %c0_101], %84 {strides = array<i32>} : memref<128x8x8xf32, #tpu.memory_space<vmem>>, vector<1x8x8xf32>,
    %c0_102 = arith.constant 0 : index
    %c0_103 = arith.constant 0 : index
    %c1_104 = arith.constant 1 : index
    %c8_105 = arith.constant 8 : index
    %85 = vector.load %arg1[%c0_102, %c0_103, %c1_104, %c8_105] : memref<1x1x16x16xf32, #tpu.memory_space<vmem>>, vector<1x1x8x8xf32>
    %86 = vector.shape_cast %85 : vector<1x1x8x8xf32> to vector<8x8xf32>
    %c17 = arith.constant 17 : index
    %c0_106 = arith.constant 0 : index
    %c0_107 = arith.constant 0 : index
    %87 = vector.load %arg4[%c17, %c0_106, %c0_107] : memref<128x8x8xf32, #tpu.memory_space<vmem>>, vector<1x8x8xf32>
    %88 = vector.shape_cast %87 : vector<1x8x8xf32> to vector<8x8xf32>
    %89 = vector.shape_cast %86 : vector<8x8xf32> to vector<1x8x8xf32>
    tpu.vector_store %arg4[%c17, %c0_106, %c0_107], %89 {strides = array<i32>} : memref<128x8x8xf32, #tpu.memory_space<vmem>>, vector<1x8x8xf32>,
    %c0_108 = arith.constant 0 : index
    %c0_109 = arith.constant 0 : index
    %c2_110 = arith.constant 2 : index
    %c0_111 = arith.constant 0 : index
    %90 = vector.load %arg1[%c0_108, %c0_109, %c2_110, %c0_111] : memref<1x1x16x16xf32, #tpu.memory_space<vmem>>, vector<1x1x8x8xf32>
    %91 = vector.shape_cast %90 : vector<1x1x8x8xf32> to vector<8x8xf32>
    %c18 = arith.constant 18 : index
    %c0_112 = arith.constant 0 : index
    %c0_113 = arith.constant 0 : index
    %92 = vector.load %arg4[%c18, %c0_112, %c0_113] : memref<128x8x8xf32, #tpu.memory_space<vmem>>, vector<1x8x8xf32>
    %93 = vector.shape_cast %92 : vector<1x8x8xf32> to vector<8x8xf32>
    %94 = vector.shape_cast %91 : vector<8x8xf32> to vector<1x8x8xf32>
    tpu.vector_store %arg4[%c18, %c0_112, %c0_113], %94 {strides = array<i32>} : memref<128x8x8xf32, #tpu.memory_space<vmem>>, vector<1x8x8xf32>,
    %c0_114 = arith.constant 0 : index
    %c0_115 = arith.constant 0 : index
    %c2_116 = arith.constant 2 : index
    %c1_117 = arith.constant 1 : index
    %95 = vector.load %arg1[%c0_114, %c0_115, %c2_116, %c1_117] : memref<1x1x16x16xf32, #tpu.memory_space<vmem>>, vector<1x1x8x8xf32>
    %96 = vector.shape_cast %95 : vector<1x1x8x8xf32> to vector<8x8xf32>
    %c19 = arith.constant 19 : index
    %c0_118 = arith.constant 0 : index
    %c0_119 = arith.constant 0 : index
    %97 = vector.load %arg4[%c19, %c0_118, %c0_119] : memref<128x8x8xf32, #tpu.memory_space<vmem>>, vector<1x8x8xf32>
    %98 = vector.shape_cast %97 : vector<1x8x8xf32> to vector<8x8xf32>
    %99 = vector.shape_cast %96 : vector<8x8xf32> to vector<1x8x8xf32>
    tpu.vector_store %arg4[%c19, %c0_118, %c0_119], %99 {strides = array<i32>} : memref<128x8x8xf32, #tpu.memory_space<vmem>>, vector<1x8x8xf32>,
    %c0_120 = arith.constant 0 : index
    %c0_121 = arith.constant 0 : index
    %c2_122 = arith.constant 2 : index
    %c2_123 = arith.constant 2 : index
    %100 = vector.load %arg1[%c0_120, %c0_121, %c2_122, %c2_123] : memref<1x1x16x16xf32, #tpu.memory_space<vmem>>, vector<1x1x8x8xf32>
    %101 = vector.shape_cast %100 : vector<1x1x8x8xf32> to vector<8x8xf32>
    %c20 = arith.constant 20 : index
    %c0_124 = arith.constant 0 : index
    %c0_125 = arith.constant 0 : index
    %102 = vector.load %arg4[%c20, %c0_124, %c0_125] : memref<128x8x8xf32, #tpu.memory_space<vmem>>, vector<1x8x8xf32>
    %103 = vector.shape_cast %102 : vector<1x8x8xf32> to vector<8x8xf32>
    %104 = vector.shape_cast %101 : vector<8x8xf32> to vector<1x8x8xf32>
    tpu.vector_store %arg4[%c20, %c0_124, %c0_125], %104 {strides = array<i32>} : memref<128x8x8xf32, #tpu.memory_space<vmem>>, vector<1x8x8xf32>,
    %c0_126 = arith.constant 0 : index
    %c0_127 = arith.constant 0 : index
    %c2_128 = arith.constant 2 : index
    %c3_129 = arith.constant 3 : index
    %105 = vector.load %arg1[%c0_126, %c0_127, %c2_128, %c3_129] : memref<1x1x16x16xf32, #tpu.memory_space<vmem>>, vector<1x1x8x8xf32>
    %106 = vector.shape_cast %105 : vector<1x1x8x8xf32> to vector<8x8xf32>
    %c21 = arith.constant 21 : index
    %c0_130 = arith.constant 0 : index
    %c0_131 = arith.constant 0 : index
    %107 = vector.load %arg4[%c21, %c0_130, %c0_131] : memref<128x8x8xf32, #tpu.memory_space<vmem>>, vector<1x8x8xf32>
    %108 = vector.shape_cast %107 : vector<1x8x8xf32> to vector<8x8xf32>
    %109 = vector.shape_cast %106 : vector<8x8xf32> to vector<1x8x8xf32>
    tpu.vector_store %arg4[%c21, %c0_130, %c0_131], %109 {strides = array<i32>} : memref<128x8x8xf32, #tpu.memory_space<vmem>>, vector<1x8x8xf32>,
    %c0_132 = arith.constant 0 : index
    %c0_133 = arith.constant 0 : index
    %c2_134 = arith.constant 2 : index
    %c4_135 = arith.constant 4 : index
    %110 = vector.load %arg1[%c0_132, %c0_133, %c2_134, %c4_135] : memref<1x1x16x16xf32, #tpu.memory_space<vmem>>, vector<1x1x8x8xf32>
    %111 = vector.shape_cast %110 : vector<1x1x8x8xf32> to vector<8x8xf32>
    %c22 = arith.constant 22 : index
    %c0_136 = arith.constant 0 : index
    %c0_137 = arith.constant 0 : index
    %112 = vector.load %arg4[%c22, %c0_136, %c0_137] : memref<128x8x8xf32, #tpu.memory_space<vmem>>, vector<1x8x8xf32>
    %113 = vector.shape_cast %112 : vector<1x8x8xf32> to vector<8x8xf32>
    %114 = vector.shape_cast %111 : vector<8x8xf32> to vector<1x8x8xf32>
    tpu.vector_store %arg4[%c22, %c0_136, %c0_137], %114 {strides = array<i32>} : memref<128x8x8xf32, #tpu.memory_space<vmem>>, vector<1x8x8xf32>,
    %c0_138 = arith.constant 0 : index
    %c0_139 = arith.constant 0 : index
    %c2_140 = arith.constant 2 : index
    %c5_141 = arith.constant 5 : index
    %115 = vector.load %arg1[%c0_138, %c0_139, %c2_140, %c5_141] : memref<1x1x16x16xf32, #tpu.memory_space<vmem>>, vector<1x1x8x8xf32>
    %116 = vector.shape_cast %115 : vector<1x1x8x8xf32> to vector<8x8xf32>
    %c23 = arith.constant 23 : index
    %c0_142 = arith.constant 0 : index
    %c0_143 = arith.constant 0 : index
    %117 = vector.load %arg4[%c23, %c0_142, %c0_143] : memref<128x8x8xf32, #tpu.memory_space<vmem>>, vector<1x8x8xf32>
    %118 = vector.shape_cast %117 : vector<1x8x8xf32> to vector<8x8xf32>
    %119 = vector.shape_cast %116 : vector<8x8xf32> to vector<1x8x8xf32>
    tpu.vector_store %arg4[%c23, %c0_142, %c0_143], %119 {strides = array<i32>} : memref<128x8x8xf32, #tpu.memory_space<vmem>>, vector<1x8x8xf32>,
    %c0_144 = arith.constant 0 : index
    %c0_145 = arith.constant 0 : index
    %c2_146 = arith.constant 2 : index
    %c6_147 = arith.constant 6 : index
    %120 = vector.load %arg1[%c0_144, %c0_145, %c2_146, %c6_147] : memref<1x1x16x16xf32, #tpu.memory_space<vmem>>, vector<1x1x8x8xf32>
    %121 = vector.shape_cast %120 : vector<1x1x8x8xf32> to vector<8x8xf32>
    %c24 = arith.constant 24 : index
    %c0_148 = arith.constant 0 : index
    %c0_149 = arith.constant 0 : index
    %122 = vector.load %arg4[%c24, %c0_148, %c0_149] : memref<128x8x8xf32, #tpu.memory_space<vmem>>, vector<1x8x8xf32>
    %123 = vector.shape_cast %122 : vector<1x8x8xf32> to vector<8x8xf32>
    %124 = vector.shape_cast %121 : vector<8x8xf32> to vector<1x8x8xf32>
    tpu.vector_store %arg4[%c24, %c0_148, %c0_149], %124 {strides = array<i32>} : memref<128x8x8xf32, #tpu.memory_space<vmem>>, vector<1x8x8xf32>,
    %c0_150 = arith.constant 0 : index
    %c0_151 = arith.constant 0 : index
    %c2_152 = arith.constant 2 : index
    %c7_153 = arith.constant 7 : index
    %125 = vector.load %arg1[%c0_150, %c0_151, %c2_152, %c7_153] : memref<1x1x16x16xf32, #tpu.memory_space<vmem>>, vector<1x1x8x8xf32>
    %126 = vector.shape_cast %125 : vector<1x1x8x8xf32> to vector<8x8xf32>
    %c25 = arith.constant 25 : index
    %c0_154 = arith.constant 0 : index
    %c0_155 = arith.constant 0 : index
    %127 = vector.load %arg4[%c25, %c0_154, %c0_155] : memref<128x8x8xf32, #tpu.memory_space<vmem>>, vector<1x8x8xf32>
    %128 = vector.shape_cast %127 : vector<1x8x8xf32> to vector<8x8xf32>
    %129 = vector.shape_cast %126 : vector<8x8xf32> to vector<1x8x8xf32>
    tpu.vector_store %arg4[%c25, %c0_154, %c0_155], %129 {strides = array<i32>} : memref<128x8x8xf32, #tpu.memory_space<vmem>>, vector<1x8x8xf32>,
    %c0_156 = arith.constant 0 : index
    %c0_157 = arith.constant 0 : index
    %c2_158 = arith.constant 2 : index
    %c8_159 = arith.constant 8 : index
    %130 = vector.load %arg1[%c0_156, %c0_157, %c2_158, %c8_159] : memref<1x1x16x16xf32, #tpu.memory_space<vmem>>, vector<1x1x8x8xf32>
    %131 = vector.shape_cast %130 : vector<1x1x8x8xf32> to vector<8x8xf32>
    %c26 = arith.constant 26 : index
    %c0_160 = arith.constant 0 : index
    %c0_161 = arith.constant 0 : index
    %132 = vector.load %arg4[%c26, %c0_160, %c0_161] : memref<128x8x8xf32, #tpu.memory_space<vmem>>, vector<1x8x8xf32>
    %133 = vector.shape_cast %132 : vector<1x8x8xf32> to vector<8x8xf32>
    %134 = vector.shape_cast %131 : vector<8x8xf32> to vector<1x8x8xf32>
    tpu.vector_store %arg4[%c26, %c0_160, %c0_161], %134 {strides = array<i32>} : memref<128x8x8xf32, #tpu.memory_space<vmem>>, vector<1x8x8xf32>,
    %c0_162 = arith.constant 0 : index
    %c0_163 = arith.constant 0 : index
    %c3_164 = arith.constant 3 : index
    %c0_165 = arith.constant 0 : index
    %135 = vector.load %arg1[%c0_162, %c0_163, %c3_164, %c0_165] : memref<1x1x16x16xf32, #tpu.memory_space<vmem>>, vector<1x1x8x8xf32>
    %136 = vector.shape_cast %135 : vector<1x1x8x8xf32> to vector<8x8xf32>
    %c27 = arith.constant 27 : index
    %c0_166 = arith.constant 0 : index
    %c0_167 = arith.constant 0 : index
    %137 = vector.load %arg4[%c27, %c0_166, %c0_167] : memref<128x8x8xf32, #tpu.memory_space<vmem>>, vector<1x8x8xf32>
    %138 = vector.shape_cast %137 : vector<1x8x8xf32> to vector<8x8xf32>
    %139 = vector.shape_cast %136 : vector<8x8xf32> to vector<1x8x8xf32>
    tpu.vector_store %arg4[%c27, %c0_166, %c0_167], %139 {strides = array<i32>} : memref<128x8x8xf32, #tpu.memory_space<vmem>>, vector<1x8x8xf32>,
    %c0_168 = arith.constant 0 : index
    %c0_169 = arith.constant 0 : index
    %c3_170 = arith.constant 3 : index
    %c1_171 = arith.constant 1 : index
    %140 = vector.load %arg1[%c0_168, %c0_169, %c3_170, %c1_171] : memref<1x1x16x16xf32, #tpu.memory_space<vmem>>, vector<1x1x8x8xf32>
    %141 = vector.shape_cast %140 : vector<1x1x8x8xf32> to vector<8x8xf32>
    %c28 = arith.constant 28 : index
    %c0_172 = arith.constant 0 : index
    %c0_173 = arith.constant 0 : index
    %142 = vector.load %arg4[%c28, %c0_172, %c0_173] : memref<128x8x8xf32, #tpu.memory_space<vmem>>, vector<1x8x8xf32>
    %143 = vector.shape_cast %142 : vector<1x8x8xf32> to vector<8x8xf32>
    %144 = vector.shape_cast %141 : vector<8x8xf32> to vector<1x8x8xf32>
    tpu.vector_store %arg4[%c28, %c0_172, %c0_173], %144 {strides = array<i32>} : memref<128x8x8xf32, #tpu.memory_space<vmem>>, vector<1x8x8xf32>,
    %c0_174 = arith.constant 0 : index
    %c0_175 = arith.constant 0 : index
    %c3_176 = arith.constant 3 : index
    %c2_177 = arith.constant 2 : index
    %145 = vector.load %arg1[%c0_174, %c0_175, %c3_176, %c2_177] : memref<1x1x16x16xf32, #tpu.memory_space<vmem>>, vector<1x1x8x8xf32>
    %146 = vector.shape_cast %145 : vector<1x1x8x8xf32> to vector<8x8xf32>
    %c29 = arith.constant 29 : index
    %c0_178 = arith.constant 0 : index
    %c0_179 = arith.constant 0 : index
    %147 = vector.load %arg4[%c29, %c0_178, %c0_179] : memref<128x8x8xf32, #tpu.memory_space<vmem>>, vector<1x8x8xf32>
    %148 = vector.shape_cast %147 : vector<1x8x8xf32> to vector<8x8xf32>
    %149 = vector.shape_cast %146 : vector<8x8xf32> to vector<1x8x8xf32>
    tpu.vector_store %arg4[%c29, %c0_178, %c0_179], %149 {strides = array<i32>} : memref<128x8x8xf32, #tpu.memory_space<vmem>>, vector<1x8x8xf32>,
    %c0_180 = arith.constant 0 : index
    %c0_181 = arith.constant 0 : index
    %c3_182 = arith.constant 3 : index
    %c3_183 = arith.constant 3 : index
    %150 = vector.load %arg1[%c0_180, %c0_181, %c3_182, %c3_183] : memref<1x1x16x16xf32, #tpu.memory_space<vmem>>, vector<1x1x8x8xf32>
    %151 = vector.shape_cast %150 : vector<1x1x8x8xf32> to vector<8x8xf32>
    %c30 = arith.constant 30 : index
    %c0_184 = arith.constant 0 : index
    %c0_185 = arith.constant 0 : index
    %152 = vector.load %arg4[%c30, %c0_184, %c0_185] : memref<128x8x8xf32, #tpu.memory_space<vmem>>, vector<1x8x8xf32>
    %153 = vector.shape_cast %152 : vector<1x8x8xf32> to vector<8x8xf32>
    %154 = vector.shape_cast %151 : vector<8x8xf32> to vector<1x8x8xf32>
    tpu.vector_store %arg4[%c30, %c0_184, %c0_185], %154 {strides = array<i32>} : memref<128x8x8xf32, #tpu.memory_space<vmem>>, vector<1x8x8xf32>,
    %c0_186 = arith.constant 0 : index
    %c0_187 = arith.constant 0 : index
    %c3_188 = arith.constant 3 : index
    %c4_189 = arith.constant 4 : index
    %155 = vector.load %arg1[%c0_186, %c0_187, %c3_188, %c4_189] : memref<1x1x16x16xf32, #tpu.memory_space<vmem>>, vector<1x1x8x8xf32>
    %156 = vector.shape_cast %155 : vector<1x1x8x8xf32> to vector<8x8xf32>
    %c31 = arith.constant 31 : index
    %c0_190 = arith.constant 0 : index
    %c0_191 = arith.constant 0 : index
    %157 = vector.load %arg4[%c31, %c0_190, %c0_191] : memref<128x8x8xf32, #tpu.memory_space<vmem>>, vector<1x8x8xf32>
    %158 = vector.shape_cast %157 : vector<1x8x8xf32> to vector<8x8xf32>
    %159 = vector.shape_cast %156 : vector<8x8xf32> to vector<1x8x8xf32>
    tpu.vector_store %arg4[%c31, %c0_190, %c0_191], %159 {strides = array<i32>} : memref<128x8x8xf32, #tpu.memory_space<vmem>>, vector<1x8x8xf32>,
    %c0_192 = arith.constant 0 : index
    %c0_193 = arith.constant 0 : index
    %c3_194 = arith.constant 3 : index
    %c5_195 = arith.constant 5 : index
    %160 = vector.load %arg1[%c0_192, %c0_193, %c3_194, %c5_195] : memref<1x1x16x16xf32, #tpu.memory_space<vmem>>, vector<1x1x8x8xf32>
    %161 = vector.shape_cast %160 : vector<1x1x8x8xf32> to vector<8x8xf32>
    %c32 = arith.constant 32 : index
    %c0_196 = arith.constant 0 : index
    %c0_197 = arith.constant 0 : index
    %162 = vector.load %arg4[%c32, %c0_196, %c0_197] : memref<128x8x8xf32, #tpu.memory_space<vmem>>, vector<1x8x8xf32>
    %163 = vector.shape_cast %162 : vector<1x8x8xf32> to vector<8x8xf32>
    %164 = vector.shape_cast %161 : vector<8x8xf32> to vector<1x8x8xf32>
    tpu.vector_store %arg4[%c32, %c0_196, %c0_197], %164 {strides = array<i32>} : memref<128x8x8xf32, #tpu.memory_space<vmem>>, vector<1x8x8xf32>,
    %c0_198 = arith.constant 0 : index
    %c0_199 = arith.constant 0 : index
    %c3_200 = arith.constant 3 : index
    %c6_201 = arith.constant 6 : index
    %165 = vector.load %arg1[%c0_198, %c0_199, %c3_200, %c6_201] : memref<1x1x16x16xf32, #tpu.memory_space<vmem>>, vector<1x1x8x8xf32>
    %166 = vector.shape_cast %165 : vector<1x1x8x8xf32> to vector<8x8xf32>
    %c33 = arith.constant 33 : index
    %c0_202 = arith.constant 0 : index
    %c0_203 = arith.constant 0 : index
    %167 = vector.load %arg4[%c33, %c0_202, %c0_203] : memref<128x8x8xf32, #tpu.memory_space<vmem>>, vector<1x8x8xf32>
    %168 = vector.shape_cast %167 : vector<1x8x8xf32> to vector<8x8xf32>
    %169 = vector.shape_cast %166 : vector<8x8xf32> to vector<1x8x8xf32>
    tpu.vector_store %arg4[%c33, %c0_202, %c0_203], %169 {strides = array<i32>} : memref<128x8x8xf32, #tpu.memory_space<vmem>>, vector<1x8x8xf32>,
    %c0_204 = arith.constant 0 : index
    %c0_205 = arith.constant 0 : index
    %c3_206 = arith.constant 3 : index
    %c7_207 = arith.constant 7 : index
    %170 = vector.load %arg1[%c0_204, %c0_205, %c3_206, %c7_207] : memref<1x1x16x16xf32, #tpu.memory_space<vmem>>, vector<1x1x8x8xf32>
    %171 = vector.shape_cast %170 : vector<1x1x8x8xf32> to vector<8x8xf32>
    %c34 = arith.constant 34 : index
    %c0_208 = arith.constant 0 : index
    %c0_209 = arith.constant 0 : index
    %172 = vector.load %arg4[%c34, %c0_208, %c0_209] : memref<128x8x8xf32, #tpu.memory_space<vmem>>, vector<1x8x8xf32>
    %173 = vector.shape_cast %172 : vector<1x8x8xf32> to vector<8x8xf32>
    %174 = vector.shape_cast %171 : vector<8x8xf32> to vector<1x8x8xf32>
    tpu.vector_store %arg4[%c34, %c0_208, %c0_209], %174 {strides = array<i32>} : memref<128x8x8xf32, #tpu.memory_space<vmem>>, vector<1x8x8xf32>,
    %c0_210 = arith.constant 0 : index
    %c0_211 = arith.constant 0 : index
    %c3_212 = arith.constant 3 : index
    %c8_213 = arith.constant 8 : index
    %175 = vector.load %arg1[%c0_210, %c0_211, %c3_212, %c8_213] : memref<1x1x16x16xf32, #tpu.memory_space<vmem>>, vector<1x1x8x8xf32>
    %176 = vector.shape_cast %175 : vector<1x1x8x8xf32> to vector<8x8xf32>
    %c35 = arith.constant 35 : index
    %c0_214 = arith.constant 0 : index
    %c0_215 = arith.constant 0 : index
    %177 = vector.load %arg4[%c35, %c0_214, %c0_215] : memref<128x8x8xf32, #tpu.memory_space<vmem>>, vector<1x8x8xf32>
    %178 = vector.shape_cast %177 : vector<1x8x8xf32> to vector<8x8xf32>
    %179 = vector.shape_cast %176 : vector<8x8xf32> to vector<1x8x8xf32>
    tpu.vector_store %arg4[%c35, %c0_214, %c0_215], %179 {strides = array<i32>} : memref<128x8x8xf32, #tpu.memory_space<vmem>>, vector<1x8x8xf32>,
    %c0_216 = arith.constant 0 : index
    %c0_217 = arith.constant 0 : index
    %c4_218 = arith.constant 4 : index
    %c0_219 = arith.constant 0 : index
    %180 = vector.load %arg1[%c0_216, %c0_217, %c4_218, %c0_219] : memref<1x1x16x16xf32, #tpu.memory_space<vmem>>, vector<1x1x8x8xf32>
    %181 = vector.shape_cast %180 : vector<1x1x8x8xf32> to vector<8x8xf32>
    %c36 = arith.constant 36 : index
    %c0_220 = arith.constant 0 : index
    %c0_221 = arith.constant 0 : index
    %182 = vector.load %arg4[%c36, %c0_220, %c0_221] : memref<128x8x8xf32, #tpu.memory_space<vmem>>, vector<1x8x8xf32>
    %183 = vector.shape_cast %182 : vector<1x8x8xf32> to vector<8x8xf32>
    %184 = vector.shape_cast %181 : vector<8x8xf32> to vector<1x8x8xf32>
    tpu.vector_store %arg4[%c36, %c0_220, %c0_221], %184 {strides = array<i32>} : memref<128x8x8xf32, #tpu.memory_space<vmem>>, vector<1x8x8xf32>,
    %c0_222 = arith.constant 0 : index
    %c0_223 = arith.constant 0 : index
    %c4_224 = arith.constant 4 : index
    %c1_225 = arith.constant 1 : index
    %185 = vector.load %arg1[%c0_222, %c0_223, %c4_224, %c1_225] : memref<1x1x16x16xf32, #tpu.memory_space<vmem>>, vector<1x1x8x8xf32>
    %186 = vector.shape_cast %185 : vector<1x1x8x8xf32> to vector<8x8xf32>
    %c37 = arith.constant 37 : index
    %c0_226 = arith.constant 0 : index
    %c0_227 = arith.constant 0 : index
    %187 = vector.load %arg4[%c37, %c0_226, %c0_227] : memref<128x8x8xf32, #tpu.memory_space<vmem>>, vector<1x8x8xf32>
    %188 = vector.shape_cast %187 : vector<1x8x8xf32> to vector<8x8xf32>
    %189 = vector.shape_cast %186 : vector<8x8xf32> to vector<1x8x8xf32>
    tpu.vector_store %arg4[%c37, %c0_226, %c0_227], %189 {strides = array<i32>} : memref<128x8x8xf32, #tpu.memory_space<vmem>>, vector<1x8x8xf32>,
    %c0_228 = arith.constant 0 : index
    %c0_229 = arith.constant 0 : index
    %c4_230 = arith.constant 4 : index
    %c2_231 = arith.constant 2 : index
    %190 = vector.load %arg1[%c0_228, %c0_229, %c4_230, %c2_231] : memref<1x1x16x16xf32, #tpu.memory_space<vmem>>, vector<1x1x8x8xf32>
    %191 = vector.shape_cast %190 : vector<1x1x8x8xf32> to vector<8x8xf32>
    %c38 = arith.constant 38 : index
    %c0_232 = arith.constant 0 : index
    %c0_233 = arith.constant 0 : index
    %192 = vector.load %arg4[%c38, %c0_232, %c0_233] : memref<128x8x8xf32, #tpu.memory_space<vmem>>, vector<1x8x8xf32>
    %193 = vector.shape_cast %192 : vector<1x8x8xf32> to vector<8x8xf32>
    %194 = vector.shape_cast %191 : vector<8x8xf32> to vector<1x8x8xf32>
    tpu.vector_store %arg4[%c38, %c0_232, %c0_233], %194 {strides = array<i32>} : memref<128x8x8xf32, #tpu.memory_space<vmem>>, vector<1x8x8xf32>,
    %c0_234 = arith.constant 0 : index
    %c0_235 = arith.constant 0 : index
    %c4_236 = arith.constant 4 : index
    %c3_237 = arith.constant 3 : index
    %195 = vector.load %arg1[%c0_234, %c0_235, %c4_236, %c3_237] : memref<1x1x16x16xf32, #tpu.memory_space<vmem>>, vector<1x1x8x8xf32>
    %196 = vector.shape_cast %195 : vector<1x1x8x8xf32> to vector<8x8xf32>
    %c39 = arith.constant 39 : index
    %c0_238 = arith.constant 0 : index
    %c0_239 = arith.constant 0 : index
    %197 = vector.load %arg4[%c39, %c0_238, %c0_239] : memref<128x8x8xf32, #tpu.memory_space<vmem>>, vector<1x8x8xf32>
    %198 = vector.shape_cast %197 : vector<1x8x8xf32> to vector<8x8xf32>
    %199 = vector.shape_cast %196 : vector<8x8xf32> to vector<1x8x8xf32>
    tpu.vector_store %arg4[%c39, %c0_238, %c0_239], %199 {strides = array<i32>} : memref<128x8x8xf32, #tpu.memory_space<vmem>>, vector<1x8x8xf32>,
    %c0_240 = arith.constant 0 : index
    %c0_241 = arith.constant 0 : index
    %c4_242 = arith.constant 4 : index
    %c4_243 = arith.constant 4 : index
    %200 = vector.load %arg1[%c0_240, %c0_241, %c4_242, %c4_243] : memref<1x1x16x16xf32, #tpu.memory_space<vmem>>, vector<1x1x8x8xf32>
    %201 = vector.shape_cast %200 : vector<1x1x8x8xf32> to vector<8x8xf32>
    %c40 = arith.constant 40 : index
    %c0_244 = arith.constant 0 : index
    %c0_245 = arith.constant 0 : index
    %202 = vector.load %arg4[%c40, %c0_244, %c0_245] : memref<128x8x8xf32, #tpu.memory_space<vmem>>, vector<1x8x8xf32>
    %203 = vector.shape_cast %202 : vector<1x8x8xf32> to vector<8x8xf32>
    %204 = vector.shape_cast %201 : vector<8x8xf32> to vector<1x8x8xf32>
    tpu.vector_store %arg4[%c40, %c0_244, %c0_245], %204 {strides = array<i32>} : memref<128x8x8xf32, #tpu.memory_space<vmem>>, vector<1x8x8xf32>,
    %c0_246 = arith.constant 0 : index
    %c0_247 = arith.constant 0 : index
    %c4_248 = arith.constant 4 : index
    %c5_249 = arith.constant 5 : index
    %205 = vector.load %arg1[%c0_246, %c0_247, %c4_248, %c5_249] : memref<1x1x16x16xf32, #tpu.memory_space<vmem>>, vector<1x1x8x8xf32>
    %206 = vector.shape_cast %205 : vector<1x1x8x8xf32> to vector<8x8xf32>
    %c41 = arith.constant 41 : index
    %c0_250 = arith.constant 0 : index
    %c0_251 = arith.constant 0 : index
    %207 = vector.load %arg4[%c41, %c0_250, %c0_251] : memref<128x8x8xf32, #tpu.memory_space<vmem>>, vector<1x8x8xf32>
    %208 = vector.shape_cast %207 : vector<1x8x8xf32> to vector<8x8xf32>
    %209 = vector.shape_cast %206 : vector<8x8xf32> to vector<1x8x8xf32>
    tpu.vector_store %arg4[%c41, %c0_250, %c0_251], %209 {strides = array<i32>} : memref<128x8x8xf32, #tpu.memory_space<vmem>>, vector<1x8x8xf32>,
    %c0_252 = arith.constant 0 : index
    %c0_253 = arith.constant 0 : index
    %c4_254 = arith.constant 4 : index
    %c6_255 = arith.constant 6 : index
    %210 = vector.load %arg1[%c0_252, %c0_253, %c4_254, %c6_255] : memref<1x1x16x16xf32, #tpu.memory_space<vmem>>, vector<1x1x8x8xf32>
    %211 = vector.shape_cast %210 : vector<1x1x8x8xf32> to vector<8x8xf32>
    %c42 = arith.constant 42 : index
    %c0_256 = arith.constant 0 : index
    %c0_257 = arith.constant 0 : index
    %212 = vector.load %arg4[%c42, %c0_256, %c0_257] : memref<128x8x8xf32, #tpu.memory_space<vmem>>, vector<1x8x8xf32>
    %213 = vector.shape_cast %212 : vector<1x8x8xf32> to vector<8x8xf32>
    %214 = vector.shape_cast %211 : vector<8x8xf32> to vector<1x8x8xf32>
    tpu.vector_store %arg4[%c42, %c0_256, %c0_257], %214 {strides = array<i32>} : memref<128x8x8xf32, #tpu.memory_space<vmem>>, vector<1x8x8xf32>,
    %c0_258 = arith.constant 0 : index
    %c0_259 = arith.constant 0 : index
    %c4_260 = arith.constant 4 : index
    %c7_261 = arith.constant 7 : index
    %215 = vector.load %arg1[%c0_258, %c0_259, %c4_260, %c7_261] : memref<1x1x16x16xf32, #tpu.memory_space<vmem>>, vector<1x1x8x8xf32>
    %216 = vector.shape_cast %215 : vector<1x1x8x8xf32> to vector<8x8xf32>
    %c43 = arith.constant 43 : index
    %c0_262 = arith.constant 0 : index
    %c0_263 = arith.constant 0 : index
    %217 = vector.load %arg4[%c43, %c0_262, %c0_263] : memref<128x8x8xf32, #tpu.memory_space<vmem>>, vector<1x8x8xf32>
    %218 = vector.shape_cast %217 : vector<1x8x8xf32> to vector<8x8xf32>
    %219 = vector.shape_cast %216 : vector<8x8xf32> to vector<1x8x8xf32>
    tpu.vector_store %arg4[%c43, %c0_262, %c0_263], %219 {strides = array<i32>} : memref<128x8x8xf32, #tpu.memory_space<vmem>>, vector<1x8x8xf32>,
    %c0_264 = arith.constant 0 : index
    %c0_265 = arith.constant 0 : index
    %c4_266 = arith.constant 4 : index
    %c8_267 = arith.constant 8 : index
    %220 = vector.load %arg1[%c0_264, %c0_265, %c4_266, %c8_267] : memref<1x1x16x16xf32, #tpu.memory_space<vmem>>, vector<1x1x8x8xf32>
    %221 = vector.shape_cast %220 : vector<1x1x8x8xf32> to vector<8x8xf32>
    %c44 = arith.constant 44 : index
    %c0_268 = arith.constant 0 : index
    %c0_269 = arith.constant 0 : index
    %222 = vector.load %arg4[%c44, %c0_268, %c0_269] : memref<128x8x8xf32, #tpu.memory_space<vmem>>, vector<1x8x8xf32>
    %223 = vector.shape_cast %222 : vector<1x8x8xf32> to vector<8x8xf32>
    %224 = vector.shape_cast %221 : vector<8x8xf32> to vector<1x8x8xf32>
    tpu.vector_store %arg4[%c44, %c0_268, %c0_269], %224 {strides = array<i32>} : memref<128x8x8xf32, #tpu.memory_space<vmem>>, vector<1x8x8xf32>,
    %c0_270 = arith.constant 0 : index
    %c0_271 = arith.constant 0 : index
    %c5_272 = arith.constant 5 : index
    %c0_273 = arith.constant 0 : index
    %225 = vector.load %arg1[%c0_270, %c0_271, %c5_272, %c0_273] : memref<1x1x16x16xf32, #tpu.memory_space<vmem>>, vector<1x1x8x8xf32>
    %226 = vector.shape_cast %225 : vector<1x1x8x8xf32> to vector<8x8xf32>
    %c45 = arith.constant 45 : index
    %c0_274 = arith.constant 0 : index
    %c0_275 = arith.constant 0 : index
    %227 = vector.load %arg4[%c45, %c0_274, %c0_275] : memref<128x8x8xf32, #tpu.memory_space<vmem>>, vector<1x8x8xf32>
    %228 = vector.shape_cast %227 : vector<1x8x8xf32> to vector<8x8xf32>
    %229 = vector.shape_cast %226 : vector<8x8xf32> to vector<1x8x8xf32>
    tpu.vector_store %arg4[%c45, %c0_274, %c0_275], %229 {strides = array<i32>} : memref<128x8x8xf32, #tpu.memory_space<vmem>>, vector<1x8x8xf32>,
    %c0_276 = arith.constant 0 : index
    %c0_277 = arith.constant 0 : index
    %c5_278 = arith.constant 5 : index
    %c1_279 = arith.constant 1 : index
    %230 = vector.load %arg1[%c0_276, %c0_277, %c5_278, %c1_279] : memref<1x1x16x16xf32, #tpu.memory_space<vmem>>, vector<1x1x8x8xf32>
    %231 = vector.shape_cast %230 : vector<1x1x8x8xf32> to vector<8x8xf32>
    %c46 = arith.constant 46 : index
    %c0_280 = arith.constant 0 : index
    %c0_281 = arith.constant 0 : index
    %232 = vector.load %arg4[%c46, %c0_280, %c0_281] : memref<128x8x8xf32, #tpu.memory_space<vmem>>, vector<1x8x8xf32>
    %233 = vector.shape_cast %232 : vector<1x8x8xf32> to vector<8x8xf32>
    %234 = vector.shape_cast %231 : vector<8x8xf32> to vector<1x8x8xf32>
    tpu.vector_store %arg4[%c46, %c0_280, %c0_281], %234 {strides = array<i32>} : memref<128x8x8xf32, #tpu.memory_space<vmem>>, vector<1x8x8xf32>,
    %c0_282 = arith.constant 0 : index
    %c0_283 = arith.constant 0 : index
    %c5_284 = arith.constant 5 : index
    %c2_285 = arith.constant 2 : index
    %235 = vector.load %arg1[%c0_282, %c0_283, %c5_284, %c2_285] : memref<1x1x16x16xf32, #tpu.memory_space<vmem>>, vector<1x1x8x8xf32>
    %236 = vector.shape_cast %235 : vector<1x1x8x8xf32> to vector<8x8xf32>
    %c47 = arith.constant 47 : index
    %c0_286 = arith.constant 0 : index
    %c0_287 = arith.constant 0 : index
    %237 = vector.load %arg4[%c47, %c0_286, %c0_287] : memref<128x8x8xf32, #tpu.memory_space<vmem>>, vector<1x8x8xf32>
    %238 = vector.shape_cast %237 : vector<1x8x8xf32> to vector<8x8xf32>
    %239 = vector.shape_cast %236 : vector<8x8xf32> to vector<1x8x8xf32>
    tpu.vector_store %arg4[%c47, %c0_286, %c0_287], %239 {strides = array<i32>} : memref<128x8x8xf32, #tpu.memory_space<vmem>>, vector<1x8x8xf32>,
    %c0_288 = arith.constant 0 : index
    %c0_289 = arith.constant 0 : index
    %c5_290 = arith.constant 5 : index
    %c3_291 = arith.constant 3 : index
    %240 = vector.load %arg1[%c0_288, %c0_289, %c5_290, %c3_291] : memref<1x1x16x16xf32, #tpu.memory_space<vmem>>, vector<1x1x8x8xf32>
    %241 = vector.shape_cast %240 : vector<1x1x8x8xf32> to vector<8x8xf32>
    %c48 = arith.constant 48 : index
    %c0_292 = arith.constant 0 : index
    %c0_293 = arith.constant 0 : index
    %242 = vector.load %arg4[%c48, %c0_292, %c0_293] : memref<128x8x8xf32, #tpu.memory_space<vmem>>, vector<1x8x8xf32>
    %243 = vector.shape_cast %242 : vector<1x8x8xf32> to vector<8x8xf32>
    %244 = vector.shape_cast %241 : vector<8x8xf32> to vector<1x8x8xf32>
    tpu.vector_store %arg4[%c48, %c0_292, %c0_293], %244 {strides = array<i32>} : memref<128x8x8xf32, #tpu.memory_space<vmem>>, vector<1x8x8xf32>,
    %c0_294 = arith.constant 0 : index
    %c0_295 = arith.constant 0 : index
    %c5_296 = arith.constant 5 : index
    %c4_297 = arith.constant 4 : index
    %245 = vector.load %arg1[%c0_294, %c0_295, %c5_296, %c4_297] : memref<1x1x16x16xf32, #tpu.memory_space<vmem>>, vector<1x1x8x8xf32>
    %246 = vector.shape_cast %245 : vector<1x1x8x8xf32> to vector<8x8xf32>
    %c49 = arith.constant 49 : index
    %c0_298 = arith.constant 0 : index
    %c0_299 = arith.constant 0 : index
    %247 = vector.load %arg4[%c49, %c0_298, %c0_299] : memref<128x8x8xf32, #tpu.memory_space<vmem>>, vector<1x8x8xf32>
    %248 = vector.shape_cast %247 : vector<1x8x8xf32> to vector<8x8xf32>
    %249 = vector.shape_cast %246 : vector<8x8xf32> to vector<1x8x8xf32>
    tpu.vector_store %arg4[%c49, %c0_298, %c0_299], %249 {strides = array<i32>} : memref<128x8x8xf32, #tpu.memory_space<vmem>>, vector<1x8x8xf32>,
    %c0_300 = arith.constant 0 : index
    %c0_301 = arith.constant 0 : index
    %c5_302 = arith.constant 5 : index
    %c5_303 = arith.constant 5 : index
    %250 = vector.load %arg1[%c0_300, %c0_301, %c5_302, %c5_303] : memref<1x1x16x16xf32, #tpu.memory_space<vmem>>, vector<1x1x8x8xf32>
    %251 = vector.shape_cast %250 : vector<1x1x8x8xf32> to vector<8x8xf32>
    %c50 = arith.constant 50 : index
    %c0_304 = arith.constant 0 : index
    %c0_305 = arith.constant 0 : index
    %252 = vector.load %arg4[%c50, %c0_304, %c0_305] : memref<128x8x8xf32, #tpu.memory_space<vmem>>, vector<1x8x8xf32>
    %253 = vector.shape_cast %252 : vector<1x8x8xf32> to vector<8x8xf32>
    %254 = vector.shape_cast %251 : vector<8x8xf32> to vector<1x8x8xf32>
    tpu.vector_store %arg4[%c50, %c0_304, %c0_305], %254 {strides = array<i32>} : memref<128x8x8xf32, #tpu.memory_space<vmem>>, vector<1x8x8xf32>,
    %c0_306 = arith.constant 0 : index
    %c0_307 = arith.constant 0 : index
    %c5_308 = arith.constant 5 : index
    %c6_309 = arith.constant 6 : index
    %255 = vector.load %arg1[%c0_306, %c0_307, %c5_308, %c6_309] : memref<1x1x16x16xf32, #tpu.memory_space<vmem>>, vector<1x1x8x8xf32>
    %256 = vector.shape_cast %255 : vector<1x1x8x8xf32> to vector<8x8xf32>
    %c51 = arith.constant 51 : index
    %c0_310 = arith.constant 0 : index
    %c0_311 = arith.constant 0 : index
    %257 = vector.load %arg4[%c51, %c0_310, %c0_311] : memref<128x8x8xf32, #tpu.memory_space<vmem>>, vector<1x8x8xf32>
    %258 = vector.shape_cast %257 : vector<1x8x8xf32> to vector<8x8xf32>
    %259 = vector.shape_cast %256 : vector<8x8xf32> to vector<1x8x8xf32>
    tpu.vector_store %arg4[%c51, %c0_310, %c0_311], %259 {strides = array<i32>} : memref<128x8x8xf32, #tpu.memory_space<vmem>>, vector<1x8x8xf32>,
    %c0_312 = arith.constant 0 : index
    %c0_313 = arith.constant 0 : index
    %c5_314 = arith.constant 5 : index
    %c7_315 = arith.constant 7 : index
    %260 = vector.load %arg1[%c0_312, %c0_313, %c5_314, %c7_315] : memref<1x1x16x16xf32, #tpu.memory_space<vmem>>, vector<1x1x8x8xf32>
    %261 = vector.shape_cast %260 : vector<1x1x8x8xf32> to vector<8x8xf32>
    %c52 = arith.constant 52 : index
    %c0_316 = arith.constant 0 : index
    %c0_317 = arith.constant 0 : index
    %262 = vector.load %arg4[%c52, %c0_316, %c0_317] : memref<128x8x8xf32, #tpu.memory_space<vmem>>, vector<1x8x8xf32>
    %263 = vector.shape_cast %262 : vector<1x8x8xf32> to vector<8x8xf32>
    %264 = vector.shape_cast %261 : vector<8x8xf32> to vector<1x8x8xf32>
    tpu.vector_store %arg4[%c52, %c0_316, %c0_317], %264 {strides = array<i32>} : memref<128x8x8xf32, #tpu.memory_space<vmem>>, vector<1x8x8xf32>,
    %c0_318 = arith.constant 0 : index
    %c0_319 = arith.constant 0 : index
    %c5_320 = arith.constant 5 : index
    %c8_321 = arith.constant 8 : index
    %265 = vector.load %arg1[%c0_318, %c0_319, %c5_320, %c8_321] : memref<1x1x16x16xf32, #tpu.memory_space<vmem>>, vector<1x1x8x8xf32>
    %266 = vector.shape_cast %265 : vector<1x1x8x8xf32> to vector<8x8xf32>
    %c53 = arith.constant 53 : index
    %c0_322 = arith.constant 0 : index
    %c0_323 = arith.constant 0 : index
    %267 = vector.load %arg4[%c53, %c0_322, %c0_323] : memref<128x8x8xf32, #tpu.memory_space<vmem>>, vector<1x8x8xf32>
    %268 = vector.shape_cast %267 : vector<1x8x8xf32> to vector<8x8xf32>
    %269 = vector.shape_cast %266 : vector<8x8xf32> to vector<1x8x8xf32>
    tpu.vector_store %arg4[%c53, %c0_322, %c0_323], %269 {strides = array<i32>} : memref<128x8x8xf32, #tpu.memory_space<vmem>>, vector<1x8x8xf32>,
    %c0_324 = arith.constant 0 : index
    %c0_325 = arith.constant 0 : index
    %c6_326 = arith.constant 6 : index
    %c0_327 = arith.constant 0 : index
    %270 = vector.load %arg1[%c0_324, %c0_325, %c6_326, %c0_327] : memref<1x1x16x16xf32, #tpu.memory_space<vmem>>, vector<1x1x8x8xf32>
    %271 = vector.shape_cast %270 : vector<1x1x8x8xf32> to vector<8x8xf32>
    %c54 = arith.constant 54 : index
    %c0_328 = arith.constant 0 : index
    %c0_329 = arith.constant 0 : index
    %272 = vector.load %arg4[%c54, %c0_328, %c0_329] : memref<128x8x8xf32, #tpu.memory_space<vmem>>, vector<1x8x8xf32>
    %273 = vector.shape_cast %272 : vector<1x8x8xf32> to vector<8x8xf32>
    %274 = vector.shape_cast %271 : vector<8x8xf32> to vector<1x8x8xf32>
    tpu.vector_store %arg4[%c54, %c0_328, %c0_329], %274 {strides = array<i32>} : memref<128x8x8xf32, #tpu.memory_space<vmem>>, vector<1x8x8xf32>,
    %c0_330 = arith.constant 0 : index
    %c0_331 = arith.constant 0 : index
    %c6_332 = arith.constant 6 : index
    %c1_333 = arith.constant 1 : index
    %275 = vector.load %arg1[%c0_330, %c0_331, %c6_332, %c1_333] : memref<1x1x16x16xf32, #tpu.memory_space<vmem>>, vector<1x1x8x8xf32>
    %276 = vector.shape_cast %275 : vector<1x1x8x8xf32> to vector<8x8xf32>
    %c55 = arith.constant 55 : index
    %c0_334 = arith.constant 0 : index
    %c0_335 = arith.constant 0 : index
    %277 = vector.load %arg4[%c55, %c0_334, %c0_335] : memref<128x8x8xf32, #tpu.memory_space<vmem>>, vector<1x8x8xf32>
    %278 = vector.shape_cast %277 : vector<1x8x8xf32> to vector<8x8xf32>
    %279 = vector.shape_cast %276 : vector<8x8xf32> to vector<1x8x8xf32>
    tpu.vector_store %arg4[%c55, %c0_334, %c0_335], %279 {strides = array<i32>} : memref<128x8x8xf32, #tpu.memory_space<vmem>>, vector<1x8x8xf32>,
    %c0_336 = arith.constant 0 : index
    %c0_337 = arith.constant 0 : index
    %c6_338 = arith.constant 6 : index
    %c2_339 = arith.constant 2 : index
    %280 = vector.load %arg1[%c0_336, %c0_337, %c6_338, %c2_339] : memref<1x1x16x16xf32, #tpu.memory_space<vmem>>, vector<1x1x8x8xf32>
    %281 = vector.shape_cast %280 : vector<1x1x8x8xf32> to vector<8x8xf32>
    %c56 = arith.constant 56 : index
    %c0_340 = arith.constant 0 : index
    %c0_341 = arith.constant 0 : index
    %282 = vector.load %arg4[%c56, %c0_340, %c0_341] : memref<128x8x8xf32, #tpu.memory_space<vmem>>, vector<1x8x8xf32>
    %283 = vector.shape_cast %282 : vector<1x8x8xf32> to vector<8x8xf32>
    %284 = vector.shape_cast %281 : vector<8x8xf32> to vector<1x8x8xf32>
    tpu.vector_store %arg4[%c56, %c0_340, %c0_341], %284 {strides = array<i32>} : memref<128x8x8xf32, #tpu.memory_space<vmem>>, vector<1x8x8xf32>,
    %c0_342 = arith.constant 0 : index
    %c0_343 = arith.constant 0 : index
    %c6_344 = arith.constant 6 : index
    %c3_345 = arith.constant 3 : index
    %285 = vector.load %arg1[%c0_342, %c0_343, %c6_344, %c3_345] : memref<1x1x16x16xf32, #tpu.memory_space<vmem>>, vector<1x1x8x8xf32>
    %286 = vector.shape_cast %285 : vector<1x1x8x8xf32> to vector<8x8xf32>
    %c57 = arith.constant 57 : index
    %c0_346 = arith.constant 0 : index
    %c0_347 = arith.constant 0 : index
    %287 = vector.load %arg4[%c57, %c0_346, %c0_347] : memref<128x8x8xf32, #tpu.memory_space<vmem>>, vector<1x8x8xf32>
    %288 = vector.shape_cast %287 : vector<1x8x8xf32> to vector<8x8xf32>
    %289 = vector.shape_cast %286 : vector<8x8xf32> to vector<1x8x8xf32>
    tpu.vector_store %arg4[%c57, %c0_346, %c0_347], %289 {strides = array<i32>} : memref<128x8x8xf32, #tpu.memory_space<vmem>>, vector<1x8x8xf32>,
    %c0_348 = arith.constant 0 : index
    %c0_349 = arith.constant 0 : index
    %c6_350 = arith.constant 6 : index
    %c4_351 = arith.constant 4 : index
    %290 = vector.load %arg1[%c0_348, %c0_349, %c6_350, %c4_351] : memref<1x1x16x16xf32, #tpu.memory_space<vmem>>, vector<1x1x8x8xf32>
    %291 = vector.shape_cast %290 : vector<1x1x8x8xf32> to vector<8x8xf32>
    %c58 = arith.constant 58 : index
    %c0_352 = arith.constant 0 : index
    %c0_353 = arith.constant 0 : index
    %292 = vector.load %arg4[%c58, %c0_352, %c0_353] : memref<128x8x8xf32, #tpu.memory_space<vmem>>, vector<1x8x8xf32>
    %293 = vector.shape_cast %292 : vector<1x8x8xf32> to vector<8x8xf32>
    %294 = vector.shape_cast %291 : vector<8x8xf32> to vector<1x8x8xf32>
    tpu.vector_store %arg4[%c58, %c0_352, %c0_353], %294 {strides = array<i32>} : memref<128x8x8xf32, #tpu.memory_space<vmem>>, vector<1x8x8xf32>,
    %c0_354 = arith.constant 0 : index
    %c0_355 = arith.constant 0 : index
    %c6_356 = arith.constant 6 : index
    %c5_357 = arith.constant 5 : index
    %295 = vector.load %arg1[%c0_354, %c0_355, %c6_356, %c5_357] : memref<1x1x16x16xf32, #tpu.memory_space<vmem>>, vector<1x1x8x8xf32>
    %296 = vector.shape_cast %295 : vector<1x1x8x8xf32> to vector<8x8xf32>
    %c59 = arith.constant 59 : index
    %c0_358 = arith.constant 0 : index
    %c0_359 = arith.constant 0 : index
    %297 = vector.load %arg4[%c59, %c0_358, %c0_359] : memref<128x8x8xf32, #tpu.memory_space<vmem>>, vector<1x8x8xf32>
    %298 = vector.shape_cast %297 : vector<1x8x8xf32> to vector<8x8xf32>
    %299 = vector.shape_cast %296 : vector<8x8xf32> to vector<1x8x8xf32>
    tpu.vector_store %arg4[%c59, %c0_358, %c0_359], %299 {strides = array<i32>} : memref<128x8x8xf32, #tpu.memory_space<vmem>>, vector<1x8x8xf32>,
    %c0_360 = arith.constant 0 : index
    %c0_361 = arith.constant 0 : index
    %c6_362 = arith.constant 6 : index
    %c6_363 = arith.constant 6 : index
    %300 = vector.load %arg1[%c0_360, %c0_361, %c6_362, %c6_363] : memref<1x1x16x16xf32, #tpu.memory_space<vmem>>, vector<1x1x8x8xf32>
    %301 = vector.shape_cast %300 : vector<1x1x8x8xf32> to vector<8x8xf32>
    %c60 = arith.constant 60 : index
    %c0_364 = arith.constant 0 : index
    %c0_365 = arith.constant 0 : index
    %302 = vector.load %arg4[%c60, %c0_364, %c0_365] : memref<128x8x8xf32, #tpu.memory_space<vmem>>, vector<1x8x8xf32>
    %303 = vector.shape_cast %302 : vector<1x8x8xf32> to vector<8x8xf32>
    %304 = vector.shape_cast %301 : vector<8x8xf32> to vector<1x8x8xf32>
    tpu.vector_store %arg4[%c60, %c0_364, %c0_365], %304 {strides = array<i32>} : memref<128x8x8xf32, #tpu.memory_space<vmem>>, vector<1x8x8xf32>,
    %c0_366 = arith.constant 0 : index
    %c0_367 = arith.constant 0 : index
    %c6_368 = arith.constant 6 : index
    %c7_369 = arith.constant 7 : index
    %305 = vector.load %arg1[%c0_366, %c0_367, %c6_368, %c7_369] : memref<1x1x16x16xf32, #tpu.memory_space<vmem>>, vector<1x1x8x8xf32>
    %306 = vector.shape_cast %305 : vector<1x1x8x8xf32> to vector<8x8xf32>
    %c61 = arith.constant 61 : index
    %c0_370 = arith.constant 0 : index
    %c0_371 = arith.constant 0 : index
    %307 = vector.load %arg4[%c61, %c0_370, %c0_371] : memref<128x8x8xf32, #tpu.memory_space<vmem>>, vector<1x8x8xf32>
    %308 = vector.shape_cast %307 : vector<1x8x8xf32> to vector<8x8xf32>
    %309 = vector.shape_cast %306 : vector<8x8xf32> to vector<1x8x8xf32>
    tpu.vector_store %arg4[%c61, %c0_370, %c0_371], %309 {strides = array<i32>} : memref<128x8x8xf32, #tpu.memory_space<vmem>>, vector<1x8x8xf32>,
    %c0_372 = arith.constant 0 : index
    %c0_373 = arith.constant 0 : index
    %c6_374 = arith.constant 6 : index
    %c8_375 = arith.constant 8 : index
    %310 = vector.load %arg1[%c0_372, %c0_373, %c6_374, %c8_375] : memref<1x1x16x16xf32, #tpu.memory_space<vmem>>, vector<1x1x8x8xf32>
    %311 = vector.shape_cast %310 : vector<1x1x8x8xf32> to vector<8x8xf32>
    %c62 = arith.constant 62 : index
    %c0_376 = arith.constant 0 : index
    %c0_377 = arith.constant 0 : index
    %312 = vector.load %arg4[%c62, %c0_376, %c0_377] : memref<128x8x8xf32, #tpu.memory_space<vmem>>, vector<1x8x8xf32>
    %313 = vector.shape_cast %312 : vector<1x8x8xf32> to vector<8x8xf32>
    %314 = vector.shape_cast %311 : vector<8x8xf32> to vector<1x8x8xf32>
    tpu.vector_store %arg4[%c62, %c0_376, %c0_377], %314 {strides = array<i32>} : memref<128x8x8xf32, #tpu.memory_space<vmem>>, vector<1x8x8xf32>,
    %c0_378 = arith.constant 0 : index
    %c0_379 = arith.constant 0 : index
    %c7_380 = arith.constant 7 : index
    %c0_381 = arith.constant 0 : index
    %315 = vector.load %arg1[%c0_378, %c0_379, %c7_380, %c0_381] : memref<1x1x16x16xf32, #tpu.memory_space<vmem>>, vector<1x1x8x8xf32>
    %316 = vector.shape_cast %315 : vector<1x1x8x8xf32> to vector<8x8xf32>
    %c63 = arith.constant 63 : index
    %c0_382 = arith.constant 0 : index
    %c0_383 = arith.constant 0 : index
    %317 = vector.load %arg4[%c63, %c0_382, %c0_383] : memref<128x8x8xf32, #tpu.memory_space<vmem>>, vector<1x8x8xf32>
    %318 = vector.shape_cast %317 : vector<1x8x8xf32> to vector<8x8xf32>
    %319 = vector.shape_cast %316 : vector<8x8xf32> to vector<1x8x8xf32>
    tpu.vector_store %arg4[%c63, %c0_382, %c0_383], %319 {strides = array<i32>} : memref<128x8x8xf32, #tpu.memory_space<vmem>>, vector<1x8x8xf32>,
    %c0_384 = arith.constant 0 : index
    %c0_385 = arith.constant 0 : index
    %c7_386 = arith.constant 7 : index
    %c1_387 = arith.constant 1 : index
    %320 = vector.load %arg1[%c0_384, %c0_385, %c7_386, %c1_387] : memref<1x1x16x16xf32, #tpu.memory_space<vmem>>, vector<1x1x8x8xf32>
    %321 = vector.shape_cast %320 : vector<1x1x8x8xf32> to vector<8x8xf32>
    %c64 = arith.constant 64 : index
    %c0_388 = arith.constant 0 : index
    %c0_389 = arith.constant 0 : index
    %322 = vector.load %arg4[%c64, %c0_388, %c0_389] : memref<128x8x8xf32, #tpu.memory_space<vmem>>, vector<1x8x8xf32>
    %323 = vector.shape_cast %322 : vector<1x8x8xf32> to vector<8x8xf32>
    %324 = vector.shape_cast %321 : vector<8x8xf32> to vector<1x8x8xf32>
    tpu.vector_store %arg4[%c64, %c0_388, %c0_389], %324 {strides = array<i32>} : memref<128x8x8xf32, #tpu.memory_space<vmem>>, vector<1x8x8xf32>,
    %c0_390 = arith.constant 0 : index
    %c0_391 = arith.constant 0 : index
    %c7_392 = arith.constant 7 : index
    %c2_393 = arith.constant 2 : index
    %325 = vector.load %arg1[%c0_390, %c0_391, %c7_392, %c2_393] : memref<1x1x16x16xf32, #tpu.memory_space<vmem>>, vector<1x1x8x8xf32>
    %326 = vector.shape_cast %325 : vector<1x1x8x8xf32> to vector<8x8xf32>
    %c65 = arith.constant 65 : index
    %c0_394 = arith.constant 0 : index
    %c0_395 = arith.constant 0 : index
    %327 = vector.load %arg4[%c65, %c0_394, %c0_395] : memref<128x8x8xf32, #tpu.memory_space<vmem>>, vector<1x8x8xf32>
    %328 = vector.shape_cast %327 : vector<1x8x8xf32> to vector<8x8xf32>
    %329 = vector.shape_cast %326 : vector<8x8xf32> to vector<1x8x8xf32>
    tpu.vector_store %arg4[%c65, %c0_394, %c0_395], %329 {strides = array<i32>} : memref<128x8x8xf32, #tpu.memory_space<vmem>>, vector<1x8x8xf32>,
    %c0_396 = arith.constant 0 : index
    %c0_397 = arith.constant 0 : index
    %c7_398 = arith.constant 7 : index
    %c3_399 = arith.constant 3 : index
    %330 = vector.load %arg1[%c0_396, %c0_397, %c7_398, %c3_399] : memref<1x1x16x16xf32, #tpu.memory_space<vmem>>, vector<1x1x8x8xf32>
    %331 = vector.shape_cast %330 : vector<1x1x8x8xf32> to vector<8x8xf32>
    %c66 = arith.constant 66 : index
    %c0_400 = arith.constant 0 : index
    %c0_401 = arith.constant 0 : index
    %332 = vector.load %arg4[%c66, %c0_400, %c0_401] : memref<128x8x8xf32, #tpu.memory_space<vmem>>, vector<1x8x8xf32>
    %333 = vector.shape_cast %332 : vector<1x8x8xf32> to vector<8x8xf32>
    %334 = vector.shape_cast %331 : vector<8x8xf32> to vector<1x8x8xf32>
    tpu.vector_store %arg4[%c66, %c0_400, %c0_401], %334 {strides = array<i32>} : memref<128x8x8xf32, #tpu.memory_space<vmem>>, vector<1x8x8xf32>,
    %c0_402 = arith.constant 0 : index
    %c0_403 = arith.constant 0 : index
    %c7_404 = arith.constant 7 : index
    %c4_405 = arith.constant 4 : index
    %335 = vector.load %arg1[%c0_402, %c0_403, %c7_404, %c4_405] : memref<1x1x16x16xf32, #tpu.memory_space<vmem>>, vector<1x1x8x8xf32>
    %336 = vector.shape_cast %335 : vector<1x1x8x8xf32> to vector<8x8xf32>
    %c67 = arith.constant 67 : index
    %c0_406 = arith.constant 0 : index
    %c0_407 = arith.constant 0 : index
    %337 = vector.load %arg4[%c67, %c0_406, %c0_407] : memref<128x8x8xf32, #tpu.memory_space<vmem>>, vector<1x8x8xf32>
    %338 = vector.shape_cast %337 : vector<1x8x8xf32> to vector<8x8xf32>
    %339 = vector.shape_cast %336 : vector<8x8xf32> to vector<1x8x8xf32>
    tpu.vector_store %arg4[%c67, %c0_406, %c0_407], %339 {strides = array<i32>} : memref<128x8x8xf32, #tpu.memory_space<vmem>>, vector<1x8x8xf32>,
    %c0_408 = arith.constant 0 : index
    %c0_409 = arith.constant 0 : index
    %c7_410 = arith.constant 7 : index
    %c5_411 = arith.constant 5 : index
    %340 = vector.load %arg1[%c0_408, %c0_409, %c7_410, %c5_411] : memref<1x1x16x16xf32, #tpu.memory_space<vmem>>, vector<1x1x8x8xf32>
    %341 = vector.shape_cast %340 : vector<1x1x8x8xf32> to vector<8x8xf32>
    %c68 = arith.constant 68 : index
    %c0_412 = arith.constant 0 : index
    %c0_413 = arith.constant 0 : index
    %342 = vector.load %arg4[%c68, %c0_412, %c0_413] : memref<128x8x8xf32, #tpu.memory_space<vmem>>, vector<1x8x8xf32>
    %343 = vector.shape_cast %342 : vector<1x8x8xf32> to vector<8x8xf32>
    %344 = vector.shape_cast %341 : vector<8x8xf32> to vector<1x8x8xf32>
    tpu.vector_store %arg4[%c68, %c0_412, %c0_413], %344 {strides = array<i32>} : memref<128x8x8xf32, #tpu.memory_space<vmem>>, vector<1x8x8xf32>,
    %c0_414 = arith.constant 0 : index
    %c0_415 = arith.constant 0 : index
    %c7_416 = arith.constant 7 : index
    %c6_417 = arith.constant 6 : index
    %345 = vector.load %arg1[%c0_414, %c0_415, %c7_416, %c6_417] : memref<1x1x16x16xf32, #tpu.memory_space<vmem>>, vector<1x1x8x8xf32>
    %346 = vector.shape_cast %345 : vector<1x1x8x8xf32> to vector<8x8xf32>
    %c69 = arith.constant 69 : index
    %c0_418 = arith.constant 0 : index
    %c0_419 = arith.constant 0 : index
    %347 = vector.load %arg4[%c69, %c0_418, %c0_419] : memref<128x8x8xf32, #tpu.memory_space<vmem>>, vector<1x8x8xf32>
    %348 = vector.shape_cast %347 : vector<1x8x8xf32> to vector<8x8xf32>
    %349 = vector.shape_cast %346 : vector<8x8xf32> to vector<1x8x8xf32>
    tpu.vector_store %arg4[%c69, %c0_418, %c0_419], %349 {strides = array<i32>} : memref<128x8x8xf32, #tpu.memory_space<vmem>>, vector<1x8x8xf32>,
    %c0_420 = arith.constant 0 : index
    %c0_421 = arith.constant 0 : index
    %c7_422 = arith.constant 7 : index
    %c7_423 = arith.constant 7 : index
    %350 = vector.load %arg1[%c0_420, %c0_421, %c7_422, %c7_423] : memref<1x1x16x16xf32, #tpu.memory_space<vmem>>, vector<1x1x8x8xf32>
    %351 = vector.shape_cast %350 : vector<1x1x8x8xf32> to vector<8x8xf32>
    %c70 = arith.constant 70 : index
    %c0_424 = arith.constant 0 : index
    %c0_425 = arith.constant 0 : index
    %352 = vector.load %arg4[%c70, %c0_424, %c0_425] : memref<128x8x8xf32, #tpu.memory_space<vmem>>, vector<1x8x8xf32>
    %353 = vector.shape_cast %352 : vector<1x8x8xf32> to vector<8x8xf32>
    %354 = vector.shape_cast %351 : vector<8x8xf32> to vector<1x8x8xf32>
    tpu.vector_store %arg4[%c70, %c0_424, %c0_425], %354 {strides = array<i32>} : memref<128x8x8xf32, #tpu.memory_space<vmem>>, vector<1x8x8xf32>,
    %c0_426 = arith.constant 0 : index
    %c0_427 = arith.constant 0 : index
    %c7_428 = arith.constant 7 : index
    %c8_429 = arith.constant 8 : index
    %355 = vector.load %arg1[%c0_426, %c0_427, %c7_428, %c8_429] : memref<1x1x16x16xf32, #tpu.memory_space<vmem>>, vector<1x1x8x8xf32>
    %356 = vector.shape_cast %355 : vector<1x1x8x8xf32> to vector<8x8xf32>
    %c71 = arith.constant 71 : index
    %c0_430 = arith.constant 0 : index
    %c0_431 = arith.constant 0 : index
    %357 = vector.load %arg4[%c71, %c0_430, %c0_431] : memref<128x8x8xf32, #tpu.memory_space<vmem>>, vector<1x8x8xf32>
    %358 = vector.shape_cast %357 : vector<1x8x8xf32> to vector<8x8xf32>
    %359 = vector.shape_cast %356 : vector<8x8xf32> to vector<1x8x8xf32>
    tpu.vector_store %arg4[%c71, %c0_430, %c0_431], %359 {strides = array<i32>} : memref<128x8x8xf32, #tpu.memory_space<vmem>>, vector<1x8x8xf32>,
    %c0_432 = arith.constant 0 : index
    %c0_433 = arith.constant 0 : index
    %c8_434 = arith.constant 8 : index
    %c0_435 = arith.constant 0 : index
    %360 = vector.load %arg1[%c0_432, %c0_433, %c8_434, %c0_435] : memref<1x1x16x16xf32, #tpu.memory_space<vmem>>, vector<1x1x8x8xf32>
    %361 = vector.shape_cast %360 : vector<1x1x8x8xf32> to vector<8x8xf32>
    %c72 = arith.constant 72 : index
    %c0_436 = arith.constant 0 : index
    %c0_437 = arith.constant 0 : index
    %362 = vector.load %arg4[%c72, %c0_436, %c0_437] : memref<128x8x8xf32, #tpu.memory_space<vmem>>, vector<1x8x8xf32>
    %363 = vector.shape_cast %362 : vector<1x8x8xf32> to vector<8x8xf32>
    %364 = vector.shape_cast %361 : vector<8x8xf32> to vector<1x8x8xf32>
    tpu.vector_store %arg4[%c72, %c0_436, %c0_437], %364 {strides = array<i32>} : memref<128x8x8xf32, #tpu.memory_space<vmem>>, vector<1x8x8xf32>,
    %c0_438 = arith.constant 0 : index
    %c0_439 = arith.constant 0 : index
    %c8_440 = arith.constant 8 : index
    %c1_441 = arith.constant 1 : index
    %365 = vector.load %arg1[%c0_438, %c0_439, %c8_440, %c1_441] : memref<1x1x16x16xf32, #tpu.memory_space<vmem>>, vector<1x1x8x8xf32>
    %366 = vector.shape_cast %365 : vector<1x1x8x8xf32> to vector<8x8xf32>
    %c73 = arith.constant 73 : index
    %c0_442 = arith.constant 0 : index
    %c0_443 = arith.constant 0 : index
    %367 = vector.load %arg4[%c73, %c0_442, %c0_443] : memref<128x8x8xf32, #tpu.memory_space<vmem>>, vector<1x8x8xf32>
    %368 = vector.shape_cast %367 : vector<1x8x8xf32> to vector<8x8xf32>
    %369 = vector.shape_cast %366 : vector<8x8xf32> to vector<1x8x8xf32>
    tpu.vector_store %arg4[%c73, %c0_442, %c0_443], %369 {strides = array<i32>} : memref<128x8x8xf32, #tpu.memory_space<vmem>>, vector<1x8x8xf32>,
    %c0_444 = arith.constant 0 : index
    %c0_445 = arith.constant 0 : index
    %c8_446 = arith.constant 8 : index
    %c2_447 = arith.constant 2 : index
    %370 = vector.load %arg1[%c0_444, %c0_445, %c8_446, %c2_447] : memref<1x1x16x16xf32, #tpu.memory_space<vmem>>, vector<1x1x8x8xf32>
    %371 = vector.shape_cast %370 : vector<1x1x8x8xf32> to vector<8x8xf32>
    %c74 = arith.constant 74 : index
    %c0_448 = arith.constant 0 : index
    %c0_449 = arith.constant 0 : index
    %372 = vector.load %arg4[%c74, %c0_448, %c0_449] : memref<128x8x8xf32, #tpu.memory_space<vmem>>, vector<1x8x8xf32>
    %373 = vector.shape_cast %372 : vector<1x8x8xf32> to vector<8x8xf32>
    %374 = vector.shape_cast %371 : vector<8x8xf32> to vector<1x8x8xf32>
    tpu.vector_store %arg4[%c74, %c0_448, %c0_449], %374 {strides = array<i32>} : memref<128x8x8xf32, #tpu.memory_space<vmem>>, vector<1x8x8xf32>,
    %c0_450 = arith.constant 0 : index
    %c0_451 = arith.constant 0 : index
    %c8_452 = arith.constant 8 : index
    %c3_453 = arith.constant 3 : index
    %375 = vector.load %arg1[%c0_450, %c0_451, %c8_452, %c3_453] : memref<1x1x16x16xf32, #tpu.memory_space<vmem>>, vector<1x1x8x8xf32>
    %376 = vector.shape_cast %375 : vector<1x1x8x8xf32> to vector<8x8xf32>
    %c75 = arith.constant 75 : index
    %c0_454 = arith.constant 0 : index
    %c0_455 = arith.constant 0 : index
    %377 = vector.load %arg4[%c75, %c0_454, %c0_455] : memref<128x8x8xf32, #tpu.memory_space<vmem>>, vector<1x8x8xf32>
    %378 = vector.shape_cast %377 : vector<1x8x8xf32> to vector<8x8xf32>
    %379 = vector.shape_cast %376 : vector<8x8xf32> to vector<1x8x8xf32>
    tpu.vector_store %arg4[%c75, %c0_454, %c0_455], %379 {strides = array<i32>} : memref<128x8x8xf32, #tpu.memory_space<vmem>>, vector<1x8x8xf32>,
    %c0_456 = arith.constant 0 : index
    %c0_457 = arith.constant 0 : index
    %c8_458 = arith.constant 8 : index
    %c4_459 = arith.constant 4 : index
    %380 = vector.load %arg1[%c0_456, %c0_457, %c8_458, %c4_459] : memref<1x1x16x16xf32, #tpu.memory_space<vmem>>, vector<1x1x8x8xf32>
    %381 = vector.shape_cast %380 : vector<1x1x8x8xf32> to vector<8x8xf32>
    %c76 = arith.constant 76 : index
    %c0_460 = arith.constant 0 : index
    %c0_461 = arith.constant 0 : index
    %382 = vector.load %arg4[%c76, %c0_460, %c0_461] : memref<128x8x8xf32, #tpu.memory_space<vmem>>, vector<1x8x8xf32>
    %383 = vector.shape_cast %382 : vector<1x8x8xf32> to vector<8x8xf32>
    %384 = vector.shape_cast %381 : vector<8x8xf32> to vector<1x8x8xf32>
    tpu.vector_store %arg4[%c76, %c0_460, %c0_461], %384 {strides = array<i32>} : memref<128x8x8xf32, #tpu.memory_space<vmem>>, vector<1x8x8xf32>,
    %c0_462 = arith.constant 0 : index
    %c0_463 = arith.constant 0 : index
    %c8_464 = arith.constant 8 : index
    %c5_465 = arith.constant 5 : index
    %385 = vector.load %arg1[%c0_462, %c0_463, %c8_464, %c5_465] : memref<1x1x16x16xf32, #tpu.memory_space<vmem>>, vector<1x1x8x8xf32>
    %386 = vector.shape_cast %385 : vector<1x1x8x8xf32> to vector<8x8xf32>
    %c77 = arith.constant 77 : index
    %c0_466 = arith.constant 0 : index
    %c0_467 = arith.constant 0 : index
    %387 = vector.load %arg4[%c77, %c0_466, %c0_467] : memref<128x8x8xf32, #tpu.memory_space<vmem>>, vector<1x8x8xf32>
    %388 = vector.shape_cast %387 : vector<1x8x8xf32> to vector<8x8xf32>
    %389 = vector.shape_cast %386 : vector<8x8xf32> to vector<1x8x8xf32>
    tpu.vector_store %arg4[%c77, %c0_466, %c0_467], %389 {strides = array<i32>} : memref<128x8x8xf32, #tpu.memory_space<vmem>>, vector<1x8x8xf32>,
    %c0_468 = arith.constant 0 : index
    %c0_469 = arith.constant 0 : index
    %c8_470 = arith.constant 8 : index
    %c6_471 = arith.constant 6 : index
    %390 = vector.load %arg1[%c0_468, %c0_469, %c8_470, %c6_471] : memref<1x1x16x16xf32, #tpu.memory_space<vmem>>, vector<1x1x8x8xf32>
    %391 = vector.shape_cast %390 : vector<1x1x8x8xf32> to vector<8x8xf32>
    %c78 = arith.constant 78 : index
    %c0_472 = arith.constant 0 : index
    %c0_473 = arith.constant 0 : index
    %392 = vector.load %arg4[%c78, %c0_472, %c0_473] : memref<128x8x8xf32, #tpu.memory_space<vmem>>, vector<1x8x8xf32>
    %393 = vector.shape_cast %392 : vector<1x8x8xf32> to vector<8x8xf32>
    %394 = vector.shape_cast %391 : vector<8x8xf32> to vector<1x8x8xf32>
    tpu.vector_store %arg4[%c78, %c0_472, %c0_473], %394 {strides = array<i32>} : memref<128x8x8xf32, #tpu.memory_space<vmem>>, vector<1x8x8xf32>,
    %c0_474 = arith.constant 0 : index
    %c0_475 = arith.constant 0 : index
    %c8_476 = arith.constant 8 : index
    %c7_477 = arith.constant 7 : index
    %395 = vector.load %arg1[%c0_474, %c0_475, %c8_476, %c7_477] : memref<1x1x16x16xf32, #tpu.memory_space<vmem>>, vector<1x1x8x8xf32>
    %396 = vector.shape_cast %395 : vector<1x1x8x8xf32> to vector<8x8xf32>
    %c79 = arith.constant 79 : index
    %c0_478 = arith.constant 0 : index
    %c0_479 = arith.constant 0 : index
    %397 = vector.load %arg4[%c79, %c0_478, %c0_479] : memref<128x8x8xf32, #tpu.memory_space<vmem>>, vector<1x8x8xf32>
    %398 = vector.shape_cast %397 : vector<1x8x8xf32> to vector<8x8xf32>
    %399 = vector.shape_cast %396 : vector<8x8xf32> to vector<1x8x8xf32>
    tpu.vector_store %arg4[%c79, %c0_478, %c0_479], %399 {strides = array<i32>} : memref<128x8x8xf32, #tpu.memory_space<vmem>>, vector<1x8x8xf32>,
    %c0_480 = arith.constant 0 : index
    %c0_481 = arith.constant 0 : index
    %c8_482 = arith.constant 8 : index
    %c8_483 = arith.constant 8 : index
    %400 = vector.load %arg1[%c0_480, %c0_481, %c8_482, %c8_483] : memref<1x1x16x16xf32, #tpu.memory_space<vmem>>, vector<1x1x8x8xf32>
    %401 = vector.shape_cast %400 : vector<1x1x8x8xf32> to vector<8x8xf32>
    %c80 = arith.constant 80 : index
    %c0_484 = arith.constant 0 : index
    %c0_485 = arith.constant 0 : index
    %402 = vector.load %arg4[%c80, %c0_484, %c0_485] : memref<128x8x8xf32, #tpu.memory_space<vmem>>, vector<1x8x8xf32>
    %403 = vector.shape_cast %402 : vector<1x8x8xf32> to vector<8x8xf32>
    %404 = vector.shape_cast %401 : vector<8x8xf32> to vector<1x8x8xf32>
    tpu.vector_store %arg4[%c80, %c0_484, %c0_485], %404 {strides = array<i32>} : memref<128x8x8xf32, #tpu.memory_space<vmem>>, vector<1x8x8xf32>,
    %c0_486 = arith.constant 0 : index
    %c0_487 = arith.constant 0 : index
    %c0_488 = arith.constant 0 : index
    %405 = vector.load %arg4[%c0_486, %c0_487, %c0_488] : memref<128x8x8xf32, #tpu.memory_space<vmem>>, vector<128x1x8xf32>
    %406 = vector.shape_cast %405 : vector<128x1x8xf32> to vector<128x8xf32>
    %c0_489 = arith.constant 0 : index
    %c0_490 = arith.constant 0 : index
    %407 = vector.load %arg5[%c0_489, %c0_490] : memref<128x64xf32, #tpu.memory_space<vmem>>, vector<128x8xf32>
    tpu.vector_store %arg5[%c0_489, %c0_490], %406 {strides = array<i32>} : memref<128x64xf32, #tpu.memory_space<vmem>>, vector<128x8xf32>,
    %c0_491 = arith.constant 0 : index
    %c1_492 = arith.constant 1 : index
    %c0_493 = arith.constant 0 : index
    %408 = vector.load %arg4[%c0_491, %c1_492, %c0_493] : memref<128x8x8xf32, #tpu.memory_space<vmem>>, vector<128x1x8xf32>
    %409 = vector.shape_cast %408 : vector<128x1x8xf32> to vector<128x8xf32>
    %c0_494 = arith.constant 0 : index
    %c8_495 = arith.constant 8 : index
    %410 = vector.load %arg5[%c0_494, %c8_495] : memref<128x64xf32, #tpu.memory_space<vmem>>, vector<128x8xf32>
    tpu.vector_store %arg5[%c0_494, %c8_495], %409 {strides = array<i32>} : memref<128x64xf32, #tpu.memory_space<vmem>>, vector<128x8xf32>,
    %c0_496 = arith.constant 0 : index
    %c2_497 = arith.constant 2 : index
    %c0_498 = arith.constant 0 : index
    %411 = vector.load %arg4[%c0_496, %c2_497, %c0_498] : memref<128x8x8xf32, #tpu.memory_space<vmem>>, vector<128x1x8xf32>
    %412 = vector.shape_cast %411 : vector<128x1x8xf32> to vector<128x8xf32>
    %c0_499 = arith.constant 0 : index
    %c16_500 = arith.constant 16 : index
    %413 = vector.load %arg5[%c0_499, %c16_500] : memref<128x64xf32, #tpu.memory_space<vmem>>, vector<128x8xf32>
    tpu.vector_store %arg5[%c0_499, %c16_500], %412 {strides = array<i32>} : memref<128x64xf32, #tpu.memory_space<vmem>>, vector<128x8xf32>,
    %c0_501 = arith.constant 0 : index
    %c3_502 = arith.constant 3 : index
    %c0_503 = arith.constant 0 : index
    %414 = vector.load %arg4[%c0_501, %c3_502, %c0_503] : memref<128x8x8xf32, #tpu.memory_space<vmem>>, vector<128x1x8xf32>
    %415 = vector.shape_cast %414 : vector<128x1x8xf32> to vector<128x8xf32>
    %c0_504 = arith.constant 0 : index
    %c24_505 = arith.constant 24 : index
    %416 = vector.load %arg5[%c0_504, %c24_505] : memref<128x64xf32, #tpu.memory_space<vmem>>, vector<128x8xf32>
    tpu.vector_store %arg5[%c0_504, %c24_505], %415 {strides = array<i32>} : memref<128x64xf32, #tpu.memory_space<vmem>>, vector<128x8xf32>,
    %c0_506 = arith.constant 0 : index
    %c4_507 = arith.constant 4 : index
    %c0_508 = arith.constant 0 : index
    %417 = vector.load %arg4[%c0_506, %c4_507, %c0_508] : memref<128x8x8xf32, #tpu.memory_space<vmem>>, vector<128x1x8xf32>
    %418 = vector.shape_cast %417 : vector<128x1x8xf32> to vector<128x8xf32>
    %c0_509 = arith.constant 0 : index
    %c32_510 = arith.constant 32 : index
    %419 = vector.load %arg5[%c0_509, %c32_510] : memref<128x64xf32, #tpu.memory_space<vmem>>, vector<128x8xf32>
    tpu.vector_store %arg5[%c0_509, %c32_510], %418 {strides = array<i32>} : memref<128x64xf32, #tpu.memory_space<vmem>>, vector<128x8xf32>,
    %c0_511 = arith.constant 0 : index
    %c5_512 = arith.constant 5 : index
    %c0_513 = arith.constant 0 : index
    %420 = vector.load %arg4[%c0_511, %c5_512, %c0_513] : memref<128x8x8xf32, #tpu.memory_space<vmem>>, vector<128x1x8xf32>
    %421 = vector.shape_cast %420 : vector<128x1x8xf32> to vector<128x8xf32>
    %c0_514 = arith.constant 0 : index
    %c40_515 = arith.constant 40 : index
    %422 = vector.load %arg5[%c0_514, %c40_515] : memref<128x64xf32, #tpu.memory_space<vmem>>, vector<128x8xf32>
    tpu.vector_store %arg5[%c0_514, %c40_515], %421 {strides = array<i32>} : memref<128x64xf32, #tpu.memory_space<vmem>>, vector<128x8xf32>,
    %c0_516 = arith.constant 0 : index
    %c6_517 = arith.constant 6 : index
    %c0_518 = arith.constant 0 : index
    %423 = vector.load %arg4[%c0_516, %c6_517, %c0_518] : memref<128x8x8xf32, #tpu.memory_space<vmem>>, vector<128x1x8xf32>
    %424 = vector.shape_cast %423 : vector<128x1x8xf32> to vector<128x8xf32>
    %c0_519 = arith.constant 0 : index
    %c48_520 = arith.constant 48 : index
    %425 = vector.load %arg5[%c0_519, %c48_520] : memref<128x64xf32, #tpu.memory_space<vmem>>, vector<128x8xf32>
    tpu.vector_store %arg5[%c0_519, %c48_520], %424 {strides = array<i32>} : memref<128x64xf32, #tpu.memory_space<vmem>>, vector<128x8xf32>,
    %c0_521 = arith.constant 0 : index
    %c7_522 = arith.constant 7 : index
    %c0_523 = arith.constant 0 : index
    %426 = vector.load %arg4[%c0_521, %c7_522, %c0_523] : memref<128x8x8xf32, #tpu.memory_space<vmem>>, vector<128x1x8xf32>
    %427 = vector.shape_cast %426 : vector<128x1x8xf32> to vector<128x8xf32>
    %c0_524 = arith.constant 0 : index
    %c56_525 = arith.constant 56 : index
    %428 = vector.load %arg5[%c0_524, %c56_525] : memref<128x64xf32, #tpu.memory_space<vmem>>, vector<128x8xf32>
    tpu.vector_store %arg5[%c0_524, %c56_525], %427 {strides = array<i32>} : memref<128x64xf32, #tpu.memory_space<vmem>>, vector<128x8xf32>,
    %cst = arith.constant 0.000000e+00 : f32
    %429 = vector.broadcast %cst : f32 to vector<46x64xf32>
    %c82 = arith.constant 82 : index
    %c0_526 = arith.constant 0 : index
    %430 = vector.load %arg5[%c82, %c0_526] : memref<128x64xf32, #tpu.memory_space<vmem>>, vector<46x64xf32>
    tpu.vector_store %arg5[%c82, %c0_526], %429 {strides = array<i32>} : memref<128x64xf32, #tpu.memory_space<vmem>>, vector<46x64xf32>,
    %cst_527 = arith.constant 1.000000e+00 : f32
    %431 = vector.broadcast %cst_527 : f32 to vector<1x64xf32>
    %c81 = arith.constant 81 : index
    %c0_528 = arith.constant 0 : index
    %432 = vector.load %arg5[%c81, %c0_528] : memref<128x64xf32, #tpu.memory_space<vmem>>, vector<1x64xf32>
    tpu.vector_store %arg5[%c81, %c0_528], %431 {strides = array<i32>} : memref<128x64xf32, #tpu.memory_space<vmem>>, vector<1x64xf32>,
    %c0_529 = arith.constant 0 : index
    %c0_530 = arith.constant 0 : index
    %433 = vector.load %arg5[%c0_529, %c0_530] : memref<128x64xf32, #tpu.memory_space<vmem>>, vector<128x64xf32>
    %434 = tpu.transpose %433, [1, 0] : vector<128x64xf32> -> vector<64x128xf32>
    %435 = arith.truncf %434 : vector<64x128xf32> to vector<64x128xbf16>
    %c0_531 = arith.constant 0 : index
    %c0_532 = arith.constant 0 : index
    %436 = vector.load %arg2[%c0_531, %c0_532] : memref<128x256xbf16, #tpu.memory_space<vmem>>, vector<128x256xbf16>
    %cst_533 = arith.constant dense<0.000000e+00> : vector<64x256xf32>
    %437 = tpu.matmul %435, %436, %cst_533 {dimension_numbers = #tpu.dot_dimension_numbers<[1], [0], [0], [1], [0, 0, 1, 1], [], []>} : vector<64x128xbf16>, vector<128x256xbf16>, vector<64x256xf32> -> vector<64x256xf32>
    %cst_534 = arith.constant 0.000000e+00 : f32
    %438 = vector.broadcast %cst_534 : f32 to vector<64x256xf32>
    %439 = arith.maximumf %437, %438 : vector<64x256xf32>
    %c0_535 = arith.constant 0 : index
    %c0_536 = arith.constant 0 : index
    %c0_537 = arith.constant 0 : index
    %440 = vector.load %arg3[%c0_535, %c0_536, %c0_537] : memref<1x64x256xf32, #tpu.memory_space<vmem>>, vector<1x64x256xf32>
    %441 = vector.shape_cast %440 : vector<1x64x256xf32> to vector<64x256xf32>
    %442 = vector.shape_cast %439 : vector<64x256xf32> to vector<1x64x256xf32>
    tpu.vector_store %arg3[%c0_535, %c0_536, %c0_537], %442 {strides = array<i32>} : memref<1x64x256xf32, #tpu.memory_space<vmem>>, vector<1x64x256xf32>,
    return
  }
  func.func @transform_0(%arg0: i32) -> (i32, i32, i32, i32) {
    %c0_i32 = arith.constant 0 : i32
    %c0_i32_0 = arith.constant 0 : i32
    %c0_i32_1 = arith.constant 0 : i32
    %c0_i32_2 = arith.constant 0 : i32
    return %arg0, %c0_i32, %c0_i32_0, %c0_i32_1 : i32, i32, i32, i32
  }
  func.func @transform_1(%arg0: i32) -> (i32, i32) {
    %c0_i32 = arith.constant 0 : i32
    %c0_i32_0 = arith.constant 0 : i32
    %c0_i32_1 = arith.constant 0 : i32
    return %c0_i32, %c0_i32_0 : i32, i32
  }
  func.func @transform_2(%arg0: i32) -> (i32, i32, i32) {
    %c0_i32 = arith.constant 0 : i32
    %c0_i32_0 = arith.constant 0 : i32
    %c0_i32_1 = arith.constant 0 : i32
    return %arg0, %c0_i32, %c0_i32_0 : i32, i32, i32
  }
}

</mosaic_0001>

<llo_original>
// kernel: conv_layer_forward.1
$region0: #{conv_layer_forward.1}
  #allocation0 [shape = 'u32[]', space=smem, size = 0x4, offset = 0x4, fixed_abs, tag = 'smem constant byte address 0x4 - core index']
  #allocation1 [shape = 'u32[72,128]{1,0:T(1,128)}', space=vmem, size = 0x9000, scoped, tag = 'internal scratch']
  #allocation2 [shape = 'f32[128,8,8]{2,1,0:T(8,128)}', space=vmem, size = 0x80000, scoped, tag = 'scratch operand']
  #allocation3 [shape = 'f32[128,64]{1,0:T(8,128)}', space=vmem, size = 0x10000, scoped, tag = 'scratch operand']
  %s0 = inlined_call_operand.vmem [shape: f32[2,1,16,16], index: 0, kind: input, shape index: {}]
  %s1 = inlined_call_operand.vmem [shape: bf16[128,256], index: 1, kind: input, shape index: {}]
  %s2 = inlined_call_operand.hbm [shape: f32[2,64,256], index: 2, kind: output, shape index: {}]
  %s3 = sld [smem:[#allocation0]]
  $region41: #{conv_layer_forward.1} parent=0
    _
  %s5 = ssub.s32 1, %s3
  %s6 = scalar_select 0, %s5, %s3
  $region1: #{conv_layer_forward.1} parent=0
    #allocation4 [shape = 'u8[131072]{0}', space=vmem, size = 0x20000, scoped, tag = 'output window, operand 0']
    #allocation5 [shape = 's32[2]{0}', space=sflag, size = 0x8, scoped, tag = 'scoped memory for conv_layer_forward.1']
    %7 = vsyncpa [#allocation5], 0
    %s8 = scalar_lea.sflag [#allocation5], 1
    %9 = vsyncpa %s8, 0
    loop: start=0, step=1, limit=4
    $region2: #{conv_layer_forward.1} parent=1 // loop_pre_header
      _
    $region3: #{conv_layer_forward.1} parent=1 // loop_header
      %s11 = sphi 0, %s15
      %p12 = scmp.ge.s32.totalorder %s11, 4
      %s21 = sphi 0, %s23
      %s24 = sphi 0, %s21
      %s25 = sphi 0, %s24
      %s41 = sphi 0, %s25
      %s45 = sphi 0, %s45
      %s47 = sphi 0, %s45
      %s48 = sphi 0, %s47
      %s62 = sphi 0, %s48
      %s68 = sphi 0, %s70
      %s71 = sphi 0, %s68
      %s72 = sphi 0, %s71
      %s88 = sphi 0, %s72
    $region4: #{conv_layer_forward.1} parent=1 // loop_header_branch
      %14 = sbr.rel (%p12) target = $region8
    $region5: #{conv_layer_forward.1} parent=1 // loop_body
      %s16 = ssub.s32 %s11, 1
      %s17 = ssub.s32 %s11, 2
      %s18 = sadd.s32 %s11, 1
      %s19 = ssub.s32 %s11, %s18
      %p20 = scmp.eq.s32.totalorder %s19, 0
      %s22 = sadd.s32 %s21, 1
      %s23 = scalar_select %p20, %s21, %s22
      %p26 = pneg %p20
      %p27 = scmp.eq.s32.totalorder %s11, 1
      %p28 = por %p26, %p27
      %p29 = scmp.ne.s32.totalorder %s21, %s24
      %p30 = scmp.eq.s32.totalorder %s11, 0
      %p31 = por %p29, %p30
      %p32 = scmp.ne.s32.totalorder %s21, %s24
      %p33 = scmp.eq.s32.totalorder %s16, 1
      %p34 = por %p32, %p33
      %p35 = scmp.ne.s32.totalorder %s24, %s25
      %p36 = scmp.eq.s32.totalorder %s16, 0
      %p37 = por %p35, %p36
      %p38 = scmp.ne.s32.totalorder %s24, %s25
      %p39 = scmp.eq.s32.totalorder %s17, 1
      %p40 = por %p38, %p39
      %p42 = scmp.ne.s32.totalorder %s25, %s41
      %p43 = scmp.eq.s32.totalorder %s17, 0
      %p44 = por %p42, %p43
      %s46 = sadd.s32 %s45, 1
      %p49 = scmp.eq.s32.totalorder %s11, 1
      %p50 = scmp.ne.s32.totalorder %s45, %s47
      %p51 = scmp.eq.s32.totalorder %s11, 0
      %p52 = por %p50, %p51
      %p53 = scmp.ne.s32.totalorder %s45, %s47
      %p54 = scmp.eq.s32.totalorder %s16, 1
      %p55 = por %p53, %p54
      %p56 = scmp.ne.s32.totalorder %s47, %s48
      %p57 = scmp.eq.s32.totalorder %s16, 0
      %p58 = por %p56, %p57
      %p59 = scmp.ne.s32.totalorder %s47, %s48
      %p60 = scmp.eq.s32.totalorder %s17, 1
      %p61 = por %p59, %p60
      %p63 = scmp.ne.s32.totalorder %s48, %s62
      %p64 = scmp.eq.s32.totalorder %s17, 0
      %p65 = por %p63, %p64
      %s66 = ssub.s32 %s11, %s18
      %p67 = scmp.eq.s32.totalorder %s66, 0
      %s69 = sadd.s32 %s68, 1
      %s70 = scalar_select %p67, %s68, %s69
      %p73 = pneg %p67
      %p74 = scmp.eq.s32.totalorder %s11, 1
      %p75 = por %p73, %p74
      %p76 = scmp.ne.s32.totalorder %s68, %s71
      %p77 = scmp.eq.s32.totalorder %s11, 0
      %p78 = por %p76, %p77
      %p79 = scmp.ne.s32.totalorder %s68, %s71
      %p80 = scmp.eq.s32.totalorder %s16, 1
      %p81 = por %p79, %p80
      %p82 = scmp.ne.s32.totalorder %s71, %s72
      %p83 = scmp.eq.s32.totalorder %s16, 0
      %p84 = por %p82, %p83
      %p85 = scmp.ne.s32.totalorder %s71, %s72
      %p86 = scmp.eq.s32.totalorder %s17, 1
      %p87 = por %p85, %p86
      %p89 = scmp.ne.s32.totalorder %s72, %s88
      %p90 = scmp.eq.s32.totalorder %s17, 0
      %p91 = por %p89, %p90
      %p92 = scmp.le.s32.totalorder 1, %s11
      %p93 = scmp.lt.s32.totalorder %s11, 3
      %p94 = pnand %p92, %p93
      %p95 = pneg %p94
      // Predicated region
      $region9: #{conv_layer_forward.1} parent=5 // pred_check
        _
      $region10: #{conv_layer_forward.1} parent=5 // pred_check_branch
        %97 = sbr.rel (%p94) target = $region12
      $region11: #{conv_layer_forward.1} parent=5 // pred_region
        %s98 = ssub.s32 %s11, 1
        // Predicated region
        $region13: #{conv_layer_forward.1} parent=11 // pred_check
          %p99 = pneg %p58
        $region14: #{conv_layer_forward.1} parent=11 // pred_check_branch
          %101 = sbr.rel (%p99) target = $region16
        $region15: #{conv_layer_forward.1} parent=11 // pred_region
          _
        $region16: #{conv_layer_forward.1} parent=11 // pred_fallthru
          _
      $region12: #{conv_layer_forward.1} parent=5 // pred_fallthru
        _
      %p102 = scmp.lt.s32.totalorder %s11, 2
      // Predicated region
      $region17: #{conv_layer_forward.1} parent=5 // pred_check
        %p103 = pneg %p102
      $region18: #{conv_layer_forward.1} parent=5 // pred_check_branch
        %105 = sbr.rel (%p103) target = $region20
      $region19: #{conv_layer_forward.1} parent=5 // pred_region
        // Predicated region
        $region21: #{conv_layer_forward.1} parent=19 // pred_check
          %p106 = pneg %p31
        $region22: #{conv_layer_forward.1} parent=19 // pred_check_branch
          %108 = sbr.rel (%p106) target = $region24
        $region23: #{conv_layer_forward.1} parent=19 // pred_region
          %p109 = scmp.lt.s32.totalorder %s11, 1
          %s110 = scalar_select %p109, %s11, 1
          %s111 = smul.addr %s110, 2
          %s112 = smul.addr %s111, 8
          %s113 = scalar_lea.vmem %s0, %s112
        $region24: #{conv_layer_forward.1} parent=19 // pred_fallthru
          _
      $region20: #{conv_layer_forward.1} parent=5 // pred_fallthru
        _
      %p114 = scmp.le.s32.totalorder 1, %s11
      %p115 = scmp.lt.s32.totalorder %s11, 3
      %p116 = pnand %p114, %p115
      %p117 = pneg %p116
      // Predicated region
      $region25: #{conv_layer_forward.1} parent=5 // pred_check
        _
      $region26: #{conv_layer_forward.1} parent=5 // pred_check_branch
        %119 = sbr.rel (%p116) target = $region28
      $region27: #{conv_layer_forward.1} parent=5 // pred_region
        %s120 = ssub.s32 %s11, 1
        %p121 = scmp.lt.s32.totalorder %s16, 1
        %s122 = scalar_select %p121, %s16, 1
        %s123 = smul.addr %s122, 2
        %s124 = smul.addr %s123, 8
        %s125 = scalar_lea.vmem %s0, %s124
        %p126 = pneg %p37
        %p127 = pneg %p34
        %p128 = pneg %p58
        %p129 = pneg %p55
        %p130 = pneg %p84
        %p131 = pneg %p81
        %s132 = sand.u32 %s71, 1
        %s133 = scalar_lea.sflag [#allocation5], %s132
        %s134 = sand.u32 %s71, 1
        %s135 = smul.addr %s134, 128
        %s136 = scalar_lea.vmem [#allocation4], %s135
        %p137 = scmp.lt.s32.totalorder %s16, 1
        %s138 = scalar_select %p137, %s16, 1
        %s139 = smul.addr %s138, 2
        %s140 = smul.addr %s139, 8
        %s141 = scalar_lea.vmem %s0, %s140
        %v142 = vld [vmem:[%s141] sm:$0xff]
        %vm143 = vcmask 64512
        %144 = vst.msk [vmem:[#allocation2] sm:$0xff] %vm143, %v142
        %v145 = vld [vmem:[%s141] sm:$0xff]
        %147 = vrot.lane.b32.xlu0 %v145, 127
        %v148 = vpop.permute.xlu0 %147
        %s150 = scalar_lea.vmem [#allocation2], 8
        %151 = vst.msk [vmem:[%s150] sm:$0xff] %vm143, %v148
        %v152 = vld [vmem:[%s141] sm:$0xff]
        %154 = vrot.lane.b32.xlu0 %v152, 126
        %v155 = vpop.permute.xlu0 %154
        %s157 = scalar_lea.vmem [#allocation2], 16
        %158 = vst.msk [vmem:[%s157] sm:$0xff] %vm143, %v155
        %v159 = vld [vmem:[%s141] sm:$0xff]
        %161 = vrot.lane.b32.xlu0 %v159, 125
        %v162 = vpop.permute.xlu0 %161
        %s164 = scalar_lea.vmem [#allocation2], 24
        %165 = vst.msk [vmem:[%s164] sm:$0xff] %vm143, %v162
        %v166 = vld [vmem:[%s141] sm:$0xff]
        %168 = vrot.lane.b32.xlu0 %v166, 124
        %v169 = vpop.permute.xlu0 %168
        %s171 = scalar_lea.vmem [#allocation2], 32
        %172 = vst.msk [vmem:[%s171] sm:$0xff] %vm143, %v169
        %v173 = vld [vmem:[%s141] sm:$0xff]
        %175 = vrot.lane.b32.xlu0 %v173, 123
        %v176 = vpop.permute.xlu0 %175
        %s178 = scalar_lea.vmem [#allocation2], 40
        %179 = vst.msk [vmem:[%s178] sm:$0xff] %vm143, %v176
        %v180 = vld [vmem:[%s141] sm:$0xff]
        %182 = vrot.lane.b32.xlu0 %v180, 122
        %v183 = vpop.permute.xlu0 %182
        %s185 = scalar_lea.vmem [#allocation2], 48
        %186 = vst.msk [vmem:[%s185] sm:$0xff] %vm143, %v183
        %v187 = vld [vmem:[%s141] sm:$0xff]
        %189 = vrot.lane.b32.xlu0 %v187, 121
        %v190 = vpop.permute.xlu0 %189
        %s192 = scalar_lea.vmem [#allocation2], 56
        %193 = vst.msk [vmem:[%s192] sm:$0xff] %vm143, %v190
        %v194 = vld [vmem:[%s141] sm:$0xff]
        %196 = vrot.lane.b32.xlu0 %v194, 120
        %v197 = vpop.permute.xlu0 %196
        %s199 = scalar_lea.vmem [#allocation2], 64
        %200 = vst.msk [vmem:[%s199] sm:$0xff] %vm143, %v197
        %v201 = vld [vmem:[%s141 + $0x1] sm:$0xff]
        %s202 = scalar_lea.vmem [#allocation2], 72
        %203 = vst.msk [vmem:[%s202] sm:$0xff] %vm143, %v201
        %v204 = vld [vmem:[%s141 + $0x1] sm:$0xff]
        %206 = vrot.lane.b32.xlu0 %v204, 127
        %v207 = vpop.permute.xlu0 %206
        %s209 = scalar_lea.vmem [#allocation2], 80
        %210 = vst.msk [vmem:[%s209] sm:$0xff] %vm143, %v207
        %v211 = vld [vmem:[%s141 + $0x1] sm:$0xff]
        %213 = vrot.lane.b32.xlu0 %v211, 126
        %v214 = vpop.permute.xlu0 %213
        %s216 = scalar_lea.vmem [#allocation2], 88
        %217 = vst.msk [vmem:[%s216] sm:$0xff] %vm143, %v214
        %v218 = vld [vmem:[%s141 + $0x1] sm:$0xff]
        %220 = vrot.lane.b32.xlu0 %v218, 125
        %v221 = vpop.permute.xlu0 %220
        %s223 = scalar_lea.vmem [#allocation2], 96
        %224 = vst.msk [vmem:[%s223] sm:$0xff] %vm143, %v221
        %v225 = vld [vmem:[%s141 + $0x1] sm:$0xff]
        %227 = vrot.lane.b32.xlu0 %v225, 124
        %v228 = vpop.permute.xlu0 %227
        %s230 = scalar_lea.vmem [#allocation2], 104
        %231 = vst.msk [vmem:[%s230] sm:$0xff] %vm143, %v228
        %v232 = vld [vmem:[%s141 + $0x1] sm:$0xff]
        %234 = vrot.lane.b32.xlu0 %v232, 123
        %v235 = vpop.permute.xlu0 %234
        %s237 = scalar_lea.vmem [#allocation2], 112
        %238 = vst.msk [vmem:[%s237] sm:$0xff] %vm143, %v235
        %v239 = vld [vmem:[%s141 + $0x1] sm:$0xff]
        %241 = vrot.lane.b32.xlu0 %v239, 122
        %v242 = vpop.permute.xlu0 %241
        %s244 = scalar_lea.vmem [#allocation2], 120
        %245 = vst.msk [vmem:[%s244] sm:$0xff] %vm143, %v242
        %v246 = vld [vmem:[%s141 + $0x1] sm:$0xff]
        %248 = vrot.lane.b32.xlu0 %v246, 121
        %v249 = vpop.permute.xlu0 %248
        %s251 = scalar_lea.vmem [#allocation2], 128
        %252 = vst.msk [vmem:[%s251] sm:$0xff] %vm143, %v249
        %v253 = vld [vmem:[%s141 + $0x1] sm:$0xff]
        %255 = vrot.lane.b32.xlu0 %v253, 120
        %v256 = vpop.permute.xlu0 %255
        %s258 = scalar_lea.vmem [#allocation2], 136
        %259 = vst.msk [vmem:[%s258] sm:$0xff] %vm143, %v256
        %v260 = vld [vmem:[%s141 + $0x2] sm:$0xff]
        %s261 = scalar_lea.vmem [#allocation2], 144
        %262 = vst.msk [vmem:[%s261] sm:$0xff] %vm143, %v260
        %v263 = vld [vmem:[%s141 + $0x2] sm:$0xff]
        %265 = vrot.lane.b32.xlu0 %v263, 127
        %v266 = vpop.permute.xlu0 %265
        %s268 = scalar_lea.vmem [#allocation2], 152
        %269 = vst.msk [vmem:[%s268] sm:$0xff] %vm143, %v266
        %v270 = vld [vmem:[%s141 + $0x2] sm:$0xff]
        %272 = vrot.lane.b32.xlu0 %v270, 126
        %v273 = vpop.permute.xlu0 %272
        %s275 = scalar_lea.vmem [#allocation2], 160
        %276 = vst.msk [vmem:[%s275] sm:$0xff] %vm143, %v273
        %v277 = vld [vmem:[%s141 + $0x2] sm:$0xff]
        %279 = vrot.lane.b32.xlu0 %v277, 125
        %v280 = vpop.permute.xlu0 %279
        %s282 = scalar_lea.vmem [#allocation2], 168
        %283 = vst.msk [vmem:[%s282] sm:$0xff] %vm143, %v280
        %v284 = vld [vmem:[%s141 + $0x2] sm:$0xff]
        %286 = vrot.lane.b32.xlu0 %v284, 124
        %v287 = vpop.permute.xlu0 %286
        %s289 = scalar_lea.vmem [#allocation2], 176
        %290 = vst.msk [vmem:[%s289] sm:$0xff] %vm143, %v287
        %v291 = vld [vmem:[%s141 + $0x2] sm:$0xff]
        %293 = vrot.lane.b32.xlu0 %v291, 123
        %v294 = vpop.permute.xlu0 %293
        %s296 = scalar_lea.vmem [#allocation2], 184
        %297 = vst.msk [vmem:[%s296] sm:$0xff] %vm143, %v294
        %v298 = vld [vmem:[%s141 + $0x2] sm:$0xff]
        %300 = vrot.lane.b32.xlu0 %v298, 122
        %v301 = vpop.permute.xlu0 %300
        %s303 = scalar_lea.vmem [#allocation2], 192
        %304 = vst.msk [vmem:[%s303] sm:$0xff] %vm143, %v301
        %v305 = vld [vmem:[%s141 + $0x2] sm:$0xff]
        %307 = vrot.lane.b32.xlu0 %v305, 121
        %v308 = vpop.permute.xlu0 %307
        %s310 = scalar_lea.vmem [#allocation2], 200
        %311 = vst.msk [vmem:[%s310] sm:$0xff] %vm143, %v308
        %v312 = vld [vmem:[%s141 + $0x2] sm:$0xff]
        %314 = vrot.lane.b32.xlu0 %v312, 120
        %v315 = vpop.permute.xlu0 %314
        %s317 = scalar_lea.vmem [#allocation2], 208
        %318 = vst.msk [vmem:[%s317] sm:$0xff] %vm143, %v315
        %v319 = vld [vmem:[%s141 + $0x3] sm:$0xff]
        %s320 = scalar_lea.vmem [#allocation2], 216
        %321 = vst.msk [vmem:[%s320] sm:$0xff] %vm143, %v319
        %v322 = vld [vmem:[%s141 + $0x3] sm:$0xff]
        %324 = vrot.lane.b32.xlu0 %v322, 127
        %v325 = vpop.permute.xlu0 %324
        %s327 = scalar_lea.vmem [#allocation2], 224
        %328 = vst.msk [vmem:[%s327] sm:$0xff] %vm143, %v325
        %v329 = vld [vmem:[%s141 + $0x3] sm:$0xff]
        %331 = vrot.lane.b32.xlu0 %v329, 126
        %v332 = vpop.permute.xlu0 %331
        %s334 = scalar_lea.vmem [#allocation2], 232
        %335 = vst.msk [vmem:[%s334] sm:$0xff] %vm143, %v332
        %v336 = vld [vmem:[%s141 + $0x3] sm:$0xff]
        %338 = vrot.lane.b32.xlu0 %v336, 125
        %v339 = vpop.permute.xlu0 %338
        %s341 = scalar_lea.vmem [#allocation2], 240
        %342 = vst.msk [vmem:[%s341] sm:$0xff] %vm143, %v339
        %v343 = vld [vmem:[%s141 + $0x3] sm:$0xff]
        %345 = vrot.lane.b32.xlu0 %v343, 124
        %v346 = vpop.permute.xlu0 %345
        %s348 = scalar_lea.vmem [#allocation2], 248
        %349 = vst.msk [vmem:[%s348] sm:$0xff] %vm143, %v346
        %v350 = vld [vmem:[%s141 + $0x3] sm:$0xff]
        %352 = vrot.lane.b32.xlu0 %v350, 123
        %v353 = vpop.permute.xlu0 %352
        %s355 = scalar_lea.vmem [#allocation2], 256
        %356 = vst.msk [vmem:[%s355] sm:$0xff] %vm143, %v353
        %v357 = vld [vmem:[%s141 + $0x3] sm:$0xff]
        %359 = vrot.lane.b32.xlu0 %v357, 122
        %v360 = vpop.permute.xlu0 %359
        %s362 = scalar_lea.vmem [#allocation2], 264
        %363 = vst.msk [vmem:[%s362] sm:$0xff] %vm143, %v360
        %v364 = vld [vmem:[%s141 + $0x3] sm:$0xff]
        %366 = vrot.lane.b32.xlu0 %v364, 121
        %v367 = vpop.permute.xlu0 %366
        %s369 = scalar_lea.vmem [#allocation2], 272
        %370 = vst.msk [vmem:[%s369] sm:$0xff] %vm143, %v367
        %v371 = vld [vmem:[%s141 + $0x3] sm:$0xff]
        %373 = vrot.lane.b32.xlu0 %v371, 120
        %v374 = vpop.permute.xlu0 %373
        %s376 = scalar_lea.vmem [#allocation2], 280
        %377 = vst.msk [vmem:[%s376] sm:$0xff] %vm143, %v374
        %v378 = vld [vmem:[%s141 + $0x4] sm:$0xff]
        %s379 = scalar_lea.vmem [#allocation2], 288
        %380 = vst.msk [vmem:[%s379] sm:$0xff] %vm143, %v378
        %v381 = vld [vmem:[%s141 + $0x4] sm:$0xff]
        %383 = vrot.lane.b32.xlu0 %v381, 127
        %v384 = vpop.permute.xlu0 %383
        %s386 = scalar_lea.vmem [#allocation2], 296
        %387 = vst.msk [vmem:[%s386] sm:$0xff] %vm143, %v384
        %v388 = vld [vmem:[%s141 + $0x4] sm:$0xff]
        %390 = vrot.lane.b32.xlu0 %v388, 126
        %v391 = vpop.permute.xlu0 %390
        %s393 = scalar_lea.vmem [#allocation2], 304
        %394 = vst.msk [vmem:[%s393] sm:$0xff] %vm143, %v391
        %v395 = vld [vmem:[%s141 + $0x4] sm:$0xff]
        %397 = vrot.lane.b32.xlu0 %v395, 125
        %v398 = vpop.permute.xlu0 %397
        %s400 = scalar_lea.vmem [#allocation2], 312
        %401 = vst.msk [vmem:[%s400] sm:$0xff] %vm143, %v398
        %v402 = vld [vmem:[%s141 + $0x4] sm:$0xff]
        %404 = vrot.lane.b32.xlu0 %v402, 124
        %v405 = vpop.permute.xlu0 %404
        %s407 = scalar_lea.vmem [#allocation2], 320
        %408 = vst.msk [vmem:[%s407] sm:$0xff] %vm143, %v405
        %v409 = vld [vmem:[%s141 + $0x4] sm:$0xff]
        %411 = vrot.lane.b32.xlu0 %v409, 123
        %v412 = vpop.permute.xlu0 %411
        %s414 = scalar_lea.vmem [#allocation2], 328
        %415 = vst.msk [vmem:[%s414] sm:$0xff] %vm143, %v412
        %v416 = vld [vmem:[%s141 + $0x4] sm:$0xff]
        %418 = vrot.lane.b32.xlu0 %v416, 122
        %v419 = vpop.permute.xlu0 %418
        %s421 = scalar_lea.vmem [#allocation2], 336
        %422 = vst.msk [vmem:[%s421] sm:$0xff] %vm143, %v419
        %v423 = vld [vmem:[%s141 + $0x4] sm:$0xff]
        %425 = vrot.lane.b32.xlu0 %v423, 121
        %v426 = vpop.permute.xlu0 %425
        %s428 = scalar_lea.vmem [#allocation2], 344
        %429 = vst.msk [vmem:[%s428] sm:$0xff] %vm143, %v426
        %v430 = vld [vmem:[%s141 + $0x4] sm:$0xff]
        %432 = vrot.lane.b32.xlu0 %v430, 120
        %v433 = vpop.permute.xlu0 %432
        %s435 = scalar_lea.vmem [#allocation2], 352
        %436 = vst.msk [vmem:[%s435] sm:$0xff] %vm143, %v433
        %v437 = vld [vmem:[%s141 + $0x5] sm:$0xff]
        %s438 = scalar_lea.vmem [#allocation2], 360
        %439 = vst.msk [vmem:[%s438] sm:$0xff] %vm143, %v437
        %v440 = vld [vmem:[%s141 + $0x5] sm:$0xff]
        %442 = vrot.lane.b32.xlu0 %v440, 127
        %v443 = vpop.permute.xlu0 %442
        %s445 = scalar_lea.vmem [#allocation2], 368
        %446 = vst.msk [vmem:[%s445] sm:$0xff] %vm143, %v443
        %v447 = vld [vmem:[%s141 + $0x5] sm:$0xff]
        %449 = vrot.lane.b32.xlu0 %v447, 126
        %v450 = vpop.permute.xlu0 %449
        %s452 = scalar_lea.vmem [#allocation2], 376
        %453 = vst.msk [vmem:[%s452] sm:$0xff] %vm143, %v450
        %v454 = vld [vmem:[%s141 + $0x5] sm:$0xff]
        %456 = vrot.lane.b32.xlu0 %v454, 125
        %v457 = vpop.permute.xlu0 %456
        %s459 = scalar_lea.vmem [#allocation2], 384
        %460 = vst.msk [vmem:[%s459] sm:$0xff] %vm143, %v457
        %v461 = vld [vmem:[%s141 + $0x5] sm:$0xff]
        %463 = vrot.lane.b32.xlu0 %v461, 124
        %v464 = vpop.permute.xlu0 %463
        %s466 = scalar_lea.vmem [#allocation2], 392
        %467 = vst.msk [vmem:[%s466] sm:$0xff] %vm143, %v464
        %v468 = vld [vmem:[%s141 + $0x5] sm:$0xff]
        %470 = vrot.lane.b32.xlu0 %v468, 123
        %v471 = vpop.permute.xlu0 %470
        %s473 = scalar_lea.vmem [#allocation2], 400
        %474 = vst.msk [vmem:[%s473] sm:$0xff] %vm143, %v471
        %v475 = vld [vmem:[%s141 + $0x5] sm:$0xff]
        %477 = vrot.lane.b32.xlu0 %v475, 122
        %v478 = vpop.permute.xlu0 %477
        %s480 = scalar_lea.vmem [#allocation2], 408
        %481 = vst.msk [vmem:[%s480] sm:$0xff] %vm143, %v478
        %v482 = vld [vmem:[%s141 + $0x5] sm:$0xff]
        %484 = vrot.lane.b32.xlu0 %v482, 121
        %v485 = vpop.permute.xlu0 %484
        %s487 = scalar_lea.vmem [#allocation2], 416
        %488 = vst.msk [vmem:[%s487] sm:$0xff] %vm143, %v485
        %v489 = vld [vmem:[%s141 + $0x5] sm:$0xff]
        %491 = vrot.lane.b32.xlu0 %v489, 120
        %v492 = vpop.permute.xlu0 %491
        %s494 = scalar_lea.vmem [#allocation2], 424
        %495 = vst.msk [vmem:[%s494] sm:$0xff] %vm143, %v492
        %v496 = vld [vmem:[%s141 + $0x6] sm:$0xff]
        %s497 = scalar_lea.vmem [#allocation2], 432
        %498 = vst.msk [vmem:[%s497] sm:$0xff] %vm143, %v496
        %v499 = vld [vmem:[%s141 + $0x6] sm:$0xff]
        %501 = vrot.lane.b32.xlu0 %v499, 127
        %v502 = vpop.permute.xlu0 %501
        %s504 = scalar_lea.vmem [#allocation2], 440
        %505 = vst.msk [vmem:[%s504] sm:$0xff] %vm143, %v502
        %v506 = vld [vmem:[%s141 + $0x6] sm:$0xff]
        %508 = vrot.lane.b32.xlu0 %v506, 126
        %v509 = vpop.permute.xlu0 %508
        %s511 = scalar_lea.vmem [#allocation2], 448
        %512 = vst.msk [vmem:[%s511] sm:$0xff] %vm143, %v509
        %v513 = vld [vmem:[%s141 + $0x6] sm:$0xff]
        %515 = vrot.lane.b32.xlu0 %v513, 125
        %v516 = vpop.permute.xlu0 %515
        %s518 = scalar_lea.vmem [#allocation2], 456
        %519 = vst.msk [vmem:[%s518] sm:$0xff] %vm143, %v516
        %v520 = vld [vmem:[%s141 + $0x6] sm:$0xff]
        %522 = vrot.lane.b32.xlu0 %v520, 124
        %v523 = vpop.permute.xlu0 %522
        %s525 = scalar_lea.vmem [#allocation2], 464
        %526 = vst.msk [vmem:[%s525] sm:$0xff] %vm143, %v523
        %v527 = vld [vmem:[%s141 + $0x6] sm:$0xff]
        %529 = vrot.lane.b32.xlu0 %v527, 123
        %v530 = vpop.permute.xlu0 %529
        %s532 = scalar_lea.vmem [#allocation2], 472
        %533 = vst.msk [vmem:[%s532] sm:$0xff] %vm143, %v530
        %v534 = vld [vmem:[%s141 + $0x6] sm:$0xff]
        %536 = vrot.lane.b32.xlu0 %v534, 122
        %v537 = vpop.permute.xlu0 %536
        %s539 = scalar_lea.vmem [#allocation2], 480
        %540 = vst.msk [vmem:[%s539] sm:$0xff] %vm143, %v537
        %v541 = vld [vmem:[%s141 + $0x6] sm:$0xff]
        %543 = vrot.lane.b32.xlu0 %v541, 121
        %v544 = vpop.permute.xlu0 %543
        %s546 = scalar_lea.vmem [#allocation2], 488
        %547 = vst.msk [vmem:[%s546] sm:$0xff] %vm143, %v544
        %v548 = vld [vmem:[%s141 + $0x6] sm:$0xff]
        %550 = vrot.lane.b32.xlu0 %v548, 120
        %v551 = vpop.permute.xlu0 %550
        %s553 = scalar_lea.vmem [#allocation2], 496
        %554 = vst.msk [vmem:[%s553] sm:$0xff] %vm143, %v551
        %v555 = vld [vmem:[%s141 + $0x7] sm:$0xff]
        %s556 = scalar_lea.vmem [#allocation2], 504
        %557 = vst.msk [vmem:[%s556] sm:$0xff] %vm143, %v555
        %v558 = vld [vmem:[%s141 + $0x7] sm:$0xff]
        %560 = vrot.lane.b32.xlu0 %v558, 127
        %v561 = vpop.permute.xlu0 %560
        %s563 = scalar_lea.vmem [#allocation2], 512
        %564 = vst.msk [vmem:[%s563] sm:$0xff] %vm143, %v561
        %v565 = vld [vmem:[%s141 + $0x7] sm:$0xff]
        %567 = vrot.lane.b32.xlu0 %v565, 126
        %v568 = vpop.permute.xlu0 %567
        %s570 = scalar_lea.vmem [#allocation2], 520
        %571 = vst.msk [vmem:[%s570] sm:$0xff] %vm143, %v568
        %v572 = vld [vmem:[%s141 + $0x7] sm:$0xff]
        %574 = vrot.lane.b32.xlu0 %v572, 125
        %v575 = vpop.permute.xlu0 %574
        %s577 = scalar_lea.vmem [#allocation2], 528
        %578 = vst.msk [vmem:[%s577] sm:$0xff] %vm143, %v575
        %v579 = vld [vmem:[%s141 + $0x7] sm:$0xff]
        %581 = vrot.lane.b32.xlu0 %v579, 124
        %v582 = vpop.permute.xlu0 %581
        %s584 = scalar_lea.vmem [#allocation2], 536
        %585 = vst.msk [vmem:[%s584] sm:$0xff] %vm143, %v582
        %v586 = vld [vmem:[%s141 + $0x7] sm:$0xff]
        %588 = vrot.lane.b32.xlu0 %v586, 123
        %v589 = vpop.permute.xlu0 %588
        %s591 = scalar_lea.vmem [#allocation2], 544
        %592 = vst.msk [vmem:[%s591] sm:$0xff] %vm143, %v589
        %v593 = vld [vmem:[%s141 + $0x7] sm:$0xff]
        %595 = vrot.lane.b32.xlu0 %v593, 122
        %v596 = vpop.permute.xlu0 %595
        %s598 = scalar_lea.vmem [#allocation2], 552
        %599 = vst.msk [vmem:[%s598] sm:$0xff] %vm143, %v596
        %v600 = vld [vmem:[%s141 + $0x7] sm:$0xff]
        %602 = vrot.lane.b32.xlu0 %v600, 121
        %v603 = vpop.permute.xlu0 %602
        %s605 = scalar_lea.vmem [#allocation2], 560
        %606 = vst.msk [vmem:[%s605] sm:$0xff] %vm143, %v603
        %v607 = vld [vmem:[%s141 + $0x7] sm:$0xff]
        %609 = vrot.lane.b32.xlu0 %v607, 120
        %v610 = vpop.permute.xlu0 %609
        %s612 = scalar_lea.vmem [#allocation2], 568
        %613 = vst.msk [vmem:[%s612] sm:$0xff] %vm143, %v610
        %v614 = vld [vmem:[%s141 + $0x8] sm:$0xff]
        %s615 = scalar_lea.vmem [#allocation2], 576
        %616 = vst.msk [vmem:[%s615] sm:$0xff] %vm143, %v614
        %v617 = vld [vmem:[%s141 + $0x8] sm:$0xff]
        %619 = vrot.lane.b32.xlu0 %v617, 127
        %v620 = vpop.permute.xlu0 %619
        %s622 = scalar_lea.vmem [#allocation2], 584
        %623 = vst.msk [vmem:[%s622] sm:$0xff] %vm143, %v620
        %v624 = vld [vmem:[%s141 + $0x8] sm:$0xff]
        %626 = vrot.lane.b32.xlu0 %v624, 126
        %v627 = vpop.permute.xlu0 %626
        %s629 = scalar_lea.vmem [#allocation2], 592
        %630 = vst.msk [vmem:[%s629] sm:$0xff] %vm143, %v627
        %v631 = vld [vmem:[%s141 + $0x8] sm:$0xff]
        %633 = vrot.lane.b32.xlu0 %v631, 125
        %v634 = vpop.permute.xlu0 %633
        %s636 = scalar_lea.vmem [#allocation2], 600
        %637 = vst.msk [vmem:[%s636] sm:$0xff] %vm143, %v634
        %v638 = vld [vmem:[%s141 + $0x8] sm:$0xff]
        %640 = vrot.lane.b32.xlu0 %v638, 124
        %v641 = vpop.permute.xlu0 %640
        %s643 = scalar_lea.vmem [#allocation2], 608
        %644 = vst.msk [vmem:[%s643] sm:$0xff] %vm143, %v641
        %v645 = vld [vmem:[%s141 + $0x8] sm:$0xff]
        %647 = vrot.lane.b32.xlu0 %v645, 123
        %v648 = vpop.permute.xlu0 %647
        %s650 = scalar_lea.vmem [#allocation2], 616
        %651 = vst.msk [vmem:[%s650] sm:$0xff] %vm143, %v648
        %v652 = vld [vmem:[%s141 + $0x8] sm:$0xff]
        %654 = vrot.lane.b32.xlu0 %v652, 122
        %v655 = vpop.permute.xlu0 %654
        %s657 = scalar_lea.vmem [#allocation2], 624
        %658 = vst.msk [vmem:[%s657] sm:$0xff] %vm143, %v655
        %v659 = vld [vmem:[%s141 + $0x8] sm:$0xff]
        %661 = vrot.lane.b32.xlu0 %v659, 121
        %v662 = vpop.permute.xlu0 %661
        %s664 = scalar_lea.vmem [#allocation2], 632
        %665 = vst.msk [vmem:[%s664] sm:$0xff] %vm143, %v662
        %v666 = vld [vmem:[%s141 + $0x8] sm:$0xff]
        %668 = vrot.lane.b32.xlu0 %v666, 120
        %v669 = vpop.permute.xlu0 %668
        %s671 = scalar_lea.vmem [#allocation2], 640
        %672 = vst.msk [vmem:[%s671] sm:$0xff] %vm143, %v669
        %v673 = vld [vmem:[#allocation2] sm:$0x1]
        %v674 = vld [vmem:[#allocation2 + $0x8] sm:$0x1]
        %v675 = vld [vmem:[#allocation2 + $0x10] sm:$0x1]
        %v676 = vld [vmem:[#allocation2 + $0x18] sm:$0x1]
        %v677 = vld [vmem:[#allocation2 + $0x20] sm:$0x1]
        %v678 = vld [vmem:[#allocation2 + $0x28] sm:$0x1]
        %v679 = vld [vmem:[#allocation2 + $0x30] sm:$0x1]
        %v680 = vld [vmem:[#allocation2 + $0x38] sm:$0x1]
        %v681 = vld [vmem:[#allocation2 + $0x40] sm:$0x1]
        %v682 = vld [vmem:[#allocation2 + $0x48] sm:$0x1]
        %v683 = vld [vmem:[#allocation2 + $0x50] sm:$0x1]
        %v684 = vld [vmem:[#allocation2 + $0x58] sm:$0x1]
        %v685 = vld [vmem:[#allocation2 + $0x60] sm:$0x1]
        %v686 = vld [vmem:[#allocation2 + $0x68] sm:$0x1]
        %v687 = vld [vmem:[#allocation2 + $0x70] sm:$0x1]
        %v688 = vld [vmem:[#allocation2 + $0x78] sm:$0x1]
        %v689 = vld [vmem:[#allocation2 + $0x80] sm:$0x1]
        %v690 = vld [vmem:[#allocation2 + $0x88] sm:$0x1]
        %v691 = vld [vmem:[#allocation2 + $0x90] sm:$0x1]
        %v692 = vld [vmem:[#allocation2 + $0x98] sm:$0x1]
        %v693 = vld [vmem:[#allocation2 + $0xa0] sm:$0x1]
        %v694 = vld [vmem:[#allocation2 + $0xa8] sm:$0x1]
        %v695 = vld [vmem:[#allocation2 + $0xb0] sm:$0x1]
        %v696 = vld [vmem:[#allocation2 + $0xb8] sm:$0x1]
        %v697 = vld [vmem:[#allocation2 + $0xc0] sm:$0x1]
        %v698 = vld [vmem:[#allocation2 + $0xc8] sm:$0x1]
        %v699 = vld [vmem:[#allocation2 + $0xd0] sm:$0x1]
        %v700 = vld [vmem:[#allocation2 + $0xd8] sm:$0x1]
        %v701 = vld [vmem:[#allocation2 + $0xe0] sm:$0x1]
        %v702 = vld [vmem:[#allocation2 + $0xe8] sm:$0x1]
        %v703 = vld [vmem:[#allocation2 + $0xf0] sm:$0x1]
        %v704 = vld [vmem:[#allocation2 + $0xf8] sm:$0x1]
        %v705 = vld [vmem:[#allocation2 + $0x100] sm:$0x1]
        %v706 = vld [vmem:[#allocation2 + $0x108] sm:$0x1]
        %v707 = vld [vmem:[#allocation2 + $0x110] sm:$0x1]
        %v708 = vld [vmem:[#allocation2 + $0x118] sm:$0x1]
        %v709 = vld [vmem:[#allocation2 + $0x120] sm:$0x1]
        %v710 = vld [vmem:[#allocation2 + $0x128] sm:$0x1]
        %v711 = vld [vmem:[#allocation2 + $0x130] sm:$0x1]
        %v712 = vld [vmem:[#allocation2 + $0x138] sm:$0x1]
        %v713 = vld [vmem:[#allocation2 + $0x140] sm:$0x1]
        %v714 = vld [vmem:[#allocation2 + $0x148] sm:$0x1]
        %v715 = vld [vmem:[#allocation2 + $0x150] sm:$0x1]
        %v716 = vld [vmem:[#allocation2 + $0x158] sm:$0x1]
        %v717 = vld [vmem:[#allocation2 + $0x160] sm:$0x1]
        %v718 = vld [vmem:[#allocation2 + $0x168] sm:$0x1]
        %v719 = vld [vmem:[#allocation2 + $0x170] sm:$0x1]
        %v720 = vld [vmem:[#allocation2 + $0x178] sm:$0x1]
        %v721 = vld [vmem:[#allocation2 + $0x180] sm:$0x1]
        %v722 = vld [vmem:[#allocation2 + $0x188] sm:$0x1]
        %v723 = vld [vmem:[#allocation2 + $0x190] sm:$0x1]
        %v724 = vld [vmem:[#allocation2 + $0x198] sm:$0x1]
        %v725 = vld [vmem:[#allocation2 + $0x1a0] sm:$0x1]
        %v726 = vld [vmem:[#allocation2 + $0x1a8] sm:$0x1]
        %v727 = vld [vmem:[#allocation2 + $0x1b0] sm:$0x1]
        %v728 = vld [vmem:[#allocation2 + $0x1b8] sm:$0x1]
        %v729 = vld [vmem:[#allocation2 + $0x1c0] sm:$0x1]
        %v730 = vld [vmem:[#allocation2 + $0x1c8] sm:$0x1]
        %v731 = vld [vmem:[#allocation2 + $0x1d0] sm:$0x1]
        %v732 = vld [vmem:[#allocation2 + $0x1d8] sm:$0x1]
        %v733 = vld [vmem:[#allocation2 + $0x1e0] sm:$0x1]
        %v734 = vld [vmem:[#allocation2 + $0x1e8] sm:$0x1]
        %v735 = vld [vmem:[#allocation2 + $0x1f0] sm:$0x1]
        %v736 = vld [vmem:[#allocation2 + $0x1f8] sm:$0x1]
        %v737 = vld [vmem:[#allocation2 + $0x200] sm:$0x1]
        %v738 = vld [vmem:[#allocation2 + $0x208] sm:$0x1]
        %v739 = vld [vmem:[#allocation2 + $0x210] sm:$0x1]
        %v740 = vld [vmem:[#allocation2 + $0x218] sm:$0x1]
        %v741 = vld [vmem:[#allocation2 + $0x220] sm:$0x1]
        %v742 = vld [vmem:[#allocation2 + $0x228] sm:$0x1]
        %v743 = vld [vmem:[#allocation2 + $0x230] sm:$0x1]
        %v744 = vld [vmem:[#allocation2 + $0x238] sm:$0x1]
        %v745 = vld [vmem:[#allocation2 + $0x240] sm:$0x1]
        %v746 = vld [vmem:[#allocation2 + $0x248] sm:$0x1]
        %v747 = vld [vmem:[#allocation2 + $0x250] sm:$0x1]
        %v748 = vld [vmem:[#allocation2 + $0x258] sm:$0x1]
        %v749 = vld [vmem:[#allocation2 + $0x260] sm:$0x1]
        %v750 = vld [vmem:[#allocation2 + $0x268] sm:$0x1]
        %v751 = vld [vmem:[#allocation2 + $0x270] sm:$0x1]
        %v752 = vld [vmem:[#allocation2 + $0x278] sm:$0x1]
        %v753 = vld [vmem:[#allocation2 + $0x280] sm:$0x1]
        %v754 = vld [vmem:[#allocation2 + $0x288] sm:$0x1]
        %v755 = vld [vmem:[#allocation2 + $0x290] sm:$0x1]
        %v756 = vld [vmem:[#allocation2 + $0x298] sm:$0x1]
        %v757 = vld [vmem:[#allocation2 + $0x2a0] sm:$0x1]
        %v758 = vld [vmem:[#allocation2 + $0x2a8] sm:$0x1]
        %v759 = vld [vmem:[#allocation2 + $0x2b0] sm:$0x1]
        %v760 = vld [vmem:[#allocation2 + $0x2b8] sm:$0x1]
        %v761 = vld [vmem:[#allocation2 + $0x2c0] sm:$0x1]
        %v762 = vld [vmem:[#allocation2 + $0x2c8] sm:$0x1]
        %v763 = vld [vmem:[#allocation2 + $0x2d0] sm:$0x1]
        %v764 = vld [vmem:[#allocation2 + $0x2d8] sm:$0x1]
        %v765 = vld [vmem:[#allocation2 + $0x2e0] sm:$0x1]
        %v766 = vld [vmem:[#allocation2 + $0x2e8] sm:$0x1]
        %v767 = vld [vmem:[#allocation2 + $0x2f0] sm:$0x1]
        %v768 = vld [vmem:[#allocation2 + $0x2f8] sm:$0x1]
        %v769 = vld [vmem:[#allocation2 + $0x300] sm:$0x1]
        %v770 = vld [vmem:[#allocation2 + $0x308] sm:$0x1]
        %v771 = vld [vmem:[#allocation2 + $0x310] sm:$0x1]
        %v772 = vld [vmem:[#allocation2 + $0x318] sm:$0x1]
        %v773 = vld [vmem:[#allocation2 + $0x320] sm:$0x1]
        %v774 = vld [vmem:[#allocation2 + $0x328] sm:$0x1]
        %v775 = vld [vmem:[#allocation2 + $0x330] sm:$0x1]
        %v776 = vld [vmem:[#allocation2 + $0x338] sm:$0x1]
        %v777 = vld [vmem:[#allocation2 + $0x340] sm:$0x1]
        %v778 = vld [vmem:[#allocation2 + $0x348] sm:$0x1]
        %v779 = vld [vmem:[#allocation2 + $0x350] sm:$0x1]
        %v780 = vld [vmem:[#allocation2 + $0x358] sm:$0x1]
        %v781 = vld [vmem:[#allocation2 + $0x360] sm:$0x1]
        %v782 = vld [vmem:[#allocation2 + $0x368] sm:$0x1]
        %v783 = vld [vmem:[#allocation2 + $0x370] sm:$0x1]
        %v784 = vld [vmem:[#allocation2 + $0x378] sm:$0x1]
        %v785 = vld [vmem:[#allocation2 + $0x380] sm:$0x1]
        %v786 = vld [vmem:[#allocation2 + $0x388] sm:$0x1]
        %v787 = vld [vmem:[#allocation2 + $0x390] sm:$0x1]
        %v788 = vld [vmem:[#allocation2 + $0x398] sm:$0x1]
        %v789 = vld [vmem:[#allocation2 + $0x3a0] sm:$0x1]
        %v790 = vld [vmem:[#allocation2 + $0x3a8] sm:$0x1]
        %v791 = vld [vmem:[#allocation2 + $0x3b0] sm:$0x1]
        %v792 = vld [vmem:[#allocation2 + $0x3b8] sm:$0x1]
        %v793 = vld [vmem:[#allocation2 + $0x3c0] sm:$0x1]
        %v794 = vld [vmem:[#allocation2 + $0x3c8] sm:$0x1]
        %v795 = vld [vmem:[#allocation2 + $0x3d0] sm:$0x1]
        %v796 = vld [vmem:[#allocation2 + $0x3d8] sm:$0x1]
        %v797 = vld [vmem:[#allocation2 + $0x3e0] sm:$0x1]
        %v798 = vld [vmem:[#allocation2 + $0x3e8] sm:$0x1]
        %v799 = vld [vmem:[#allocation2 + $0x3f0] sm:$0x1]
        %v800 = vld [vmem:[#allocation2 + $0x3f8] sm:$0x1]
        %v929 = vrot.slane %v674, 7
        %vm930 = vcmask 1041409
        %v931 = vsel %vm930, %v929, %v673
        %v932 = vrot.slane %v675, 6
        %vm933 = vcmask 1042434
        %v934 = vsel %vm933, %v932, %v931
        %v935 = vrot.slane %v676, 5
        %vm936 = vcmask 1043459
        %v937 = vsel %vm936, %v935, %v934
        %v938 = vrot.slane %v677, 4
        %vm939 = vcmask 1044484
        %v940 = vsel %vm939, %v938, %v937
        %v941 = vrot.slane %v678, 3
        %vm942 = vcmask 1045509
        %v943 = vsel %vm942, %v941, %v940
        %v944 = vrot.slane %v679, 2
        %vm945 = vcmask 1046534
        %v946 = vsel %vm945, %v944, %v943
        %v947 = vrot.slane %v680, 1
        %vm948 = vcmask 1047559
        %v949 = vsel %vm948, %v947, %v946
        %v950 = vrot.slane %v682, 7
        %v951 = vsel %vm930, %v950, %v681
        %v952 = vrot.slane %v683, 6
        %v953 = vsel %vm933, %v952, %v951
        %v954 = vrot.slane %v684, 5
        %v955 = vsel %vm936, %v954, %v953
        %v956 = vrot.slane %v685, 4
        %v957 = vsel %vm939, %v956, %v955
        %v958 = vrot.slane %v686, 3
        %v959 = vsel %vm942, %v958, %v957
        %v960 = vrot.slane %v687, 2
        %v961 = vsel %vm945, %v960, %v959
        %v962 = vrot.slane %v688, 1
        %v963 = vsel %vm948, %v962, %v961
        %v964 = vrot.slane %v690, 7
        %v965 = vsel %vm930, %v964, %v689
        %v966 = vrot.slane %v691, 6
        %v967 = vsel %vm933, %v966, %v965
        %v968 = vrot.slane %v692, 5
        %v969 = vsel %vm936, %v968, %v967
        %v970 = vrot.slane %v693, 4
        %v971 = vsel %vm939, %v970, %v969
        %v972 = vrot.slane %v694, 3
        %v973 = vsel %vm942, %v972, %v971
        %v974 = vrot.slane %v695, 2
        %v975 = vsel %vm945, %v974, %v973
        %v976 = vrot.slane %v696, 1
        %v977 = vsel %vm948, %v976, %v975
        %v978 = vrot.slane %v698, 7
        %v979 = vsel %vm930, %v978, %v697
        %v980 = vrot.slane %v699, 6
        %v981 = vsel %vm933, %v980, %v979
        %v982 = vrot.slane %v700, 5
        %v983 = vsel %vm936, %v982, %v981
        %v984 = vrot.slane %v701, 4
        %v985 = vsel %vm939, %v984, %v983
        %v986 = vrot.slane %v702, 3
        %v987 = vsel %vm942, %v986, %v985
        %v988 = vrot.slane %v703, 2
        %v989 = vsel %vm945, %v988, %v987
        %v990 = vrot.slane %v704, 1
        %v991 = vsel %vm948, %v990, %v989
        %v992 = vrot.slane %v706, 7
        %v993 = vsel %vm930, %v992, %v705
        %v994 = vrot.slane %v707, 6
        %v995 = vsel %vm933, %v994, %v993
        %v996 = vrot.slane %v708, 5
        %v997 = vsel %vm936, %v996, %v995
        %v998 = vrot.slane %v709, 4
        %v999 = vsel %vm939, %v998, %v997
        %v1000 = vrot.slane %v710, 3
        %v1001 = vsel %vm942, %v1000, %v999
        %v1002 = vrot.slane %v711, 2
        %v1003 = vsel %vm945, %v1002, %v1001
        %v1004 = vrot.slane %v712, 1
        %v1005 = vsel %vm948, %v1004, %v1003
        %v1006 = vrot.slane %v714, 7
        %v1007 = vsel %vm930, %v1006, %v713
        %v1008 = vrot.slane %v715, 6
        %v1009 = vsel %vm933, %v1008, %v1007
        %v1010 = vrot.slane %v716, 5
        %v1011 = vsel %vm936, %v1010, %v1009
        %v1012 = vrot.slane %v717, 4
        %v1013 = vsel %vm939, %v1012, %v1011
        %v1014 = vrot.slane %v718, 3
        %v1015 = vsel %vm942, %v1014, %v1013
        %v1016 = vrot.slane %v719, 2
        %v1017 = vsel %vm945, %v1016, %v1015
        %v1018 = vrot.slane %v720, 1
        %v1019 = vsel %vm948, %v1018, %v1017
        %v1020 = vrot.slane %v722, 7
        %v1021 = vsel %vm930, %v1020, %v721
        %v1022 = vrot.slane %v723, 6
        %v1023 = vsel %vm933, %v1022, %v1021
        %v1024 = vrot.slane %v724, 5
        %v1025 = vsel %vm936, %v1024, %v1023
        %v1026 = vrot.slane %v725, 4
        %v1027 = vsel %vm939, %v1026, %v1025
        %v1028 = vrot.slane %v726, 3
        %v1029 = vsel %vm942, %v1028, %v1027
        %v1030 = vrot.slane %v727, 2
        %v1031 = vsel %vm945, %v1030, %v1029
        %v1032 = vrot.slane %v728, 1
        %v1033 = vsel %vm948, %v1032, %v1031
        %v1034 = vrot.slane %v730, 7
        %v1035 = vsel %vm930, %v1034, %v729
        %v1036 = vrot.slane %v731, 6
        %v1037 = vsel %vm933, %v1036, %v1035
        %v1038 = vrot.slane %v732, 5
        %v1039 = vsel %vm936, %v1038, %v1037
        %v1040 = vrot.slane %v733, 4
        %v1041 = vsel %vm939, %v1040, %v1039
        %v1042 = vrot.slane %v734, 3
        %v1043 = vsel %vm942, %v1042, %v1041
        %v1044 = vrot.slane %v735, 2
        %v1045 = vsel %vm945, %v1044, %v1043
        %v1046 = vrot.slane %v736, 1
        %v1047 = vsel %vm948, %v1046, %v1045
        %v1048 = vrot.slane %v738, 7
        %v1049 = vsel %vm930, %v1048, %v737
        %v1050 = vrot.slane %v739, 6
        %v1051 = vsel %vm933, %v1050, %v1049
        %v1052 = vrot.slane %v740, 5
        %v1053 = vsel %vm936, %v1052, %v1051
        %v1054 = vrot.slane %v741, 4
        %v1055 = vsel %vm939, %v1054, %v1053
        %v1056 = vrot.slane %v742, 3
        %v1057 = vsel %vm942, %v1056, %v1055
        %v1058 = vrot.slane %v743, 2
        %v1059 = vsel %vm945, %v1058, %v1057
        %v1060 = vrot.slane %v744, 1
        %v1061 = vsel %vm948, %v1060, %v1059
        %v1062 = vrot.slane %v746, 7
        %v1063 = vsel %vm930, %v1062, %v745
        %v1064 = vrot.slane %v747, 6
        %v1065 = vsel %vm933, %v1064, %v1063
        %v1066 = vrot.slane %v748, 5
        %v1067 = vsel %vm936, %v1066, %v1065
        %v1068 = vrot.slane %v749, 4
        %v1069 = vsel %vm939, %v1068, %v1067
        %v1070 = vrot.slane %v750, 3
        %v1071 = vsel %vm942, %v1070, %v1069
        %v1072 = vrot.slane %v751, 2
        %v1073 = vsel %vm945, %v1072, %v1071
        %v1074 = vrot.slane %v752, 1
        %v1075 = vsel %vm948, %v1074, %v1073
        %v1076 = vrot.slane %v754, 7
        %v1077 = vsel %vm930, %v1076, %v753
        %v1078 = vrot.slane %v755, 6
        %v1079 = vsel %vm933, %v1078, %v1077
        %v1080 = vrot.slane %v756, 5
        %v1081 = vsel %vm936, %v1080, %v1079
        %v1082 = vrot.slane %v757, 4
        %v1083 = vsel %vm939, %v1082, %v1081
        %v1084 = vrot.slane %v758, 3
        %v1085 = vsel %vm942, %v1084, %v1083
        %v1086 = vrot.slane %v759, 2
        %v1087 = vsel %vm945, %v1086, %v1085
        %v1088 = vrot.slane %v760, 1
        %v1089 = vsel %vm948, %v1088, %v1087
        %v1090 = vrot.slane %v762, 7
        %v1091 = vsel %vm930, %v1090, %v761
        %v1092 = vrot.slane %v763, 6
        %v1093 = vsel %vm933, %v1092, %v1091
        %v1094 = vrot.slane %v764, 5
        %v1095 = vsel %vm936, %v1094, %v1093
        %v1096 = vrot.slane %v765, 4
        %v1097 = vsel %vm939, %v1096, %v1095
        %v1098 = vrot.slane %v766, 3
        %v1099 = vsel %vm942, %v1098, %v1097
        %v1100 = vrot.slane %v767, 2
        %v1101 = vsel %vm945, %v1100, %v1099
        %v1102 = vrot.slane %v768, 1
        %v1103 = vsel %vm948, %v1102, %v1101
        %v1104 = vrot.slane %v770, 7
        %v1105 = vsel %vm930, %v1104, %v769
        %v1106 = vrot.slane %v771, 6
        %v1107 = vsel %vm933, %v1106, %v1105
        %v1108 = vrot.slane %v772, 5
        %v1109 = vsel %vm936, %v1108, %v1107
        %v1110 = vrot.slane %v773, 4
        %v1111 = vsel %vm939, %v1110, %v1109
        %v1112 = vrot.slane %v774, 3
        %v1113 = vsel %vm942, %v1112, %v1111
        %v1114 = vrot.slane %v775, 2
        %v1115 = vsel %vm945, %v1114, %v1113
        %v1116 = vrot.slane %v776, 1
        %v1117 = vsel %vm948, %v1116, %v1115
        %v1118 = vrot.slane %v778, 7
        %v1119 = vsel %vm930, %v1118, %v777
        %v1120 = vrot.slane %v779, 6
        %v1121 = vsel %vm933, %v1120, %v1119
        %v1122 = vrot.slane %v780, 5
        %v1123 = vsel %vm936, %v1122, %v1121
        %v1124 = vrot.slane %v781, 4
        %v1125 = vsel %vm939, %v1124, %v1123
        %v1126 = vrot.slane %v782, 3
        %v1127 = vsel %vm942, %v1126, %v1125
        %v1128 = vrot.slane %v783, 2
        %v1129 = vsel %vm945, %v1128, %v1127
        %v1130 = vrot.slane %v784, 1
        %v1131 = vsel %vm948, %v1130, %v1129
        %v1132 = vrot.slane %v786, 7
        %v1133 = vsel %vm930, %v1132, %v785
        %v1134 = vrot.slane %v787, 6
        %v1135 = vsel %vm933, %v1134, %v1133
        %v1136 = vrot.slane %v788, 5
        %v1137 = vsel %vm936, %v1136, %v1135
        %v1138 = vrot.slane %v789, 4
        %v1139 = vsel %vm939, %v1138, %v1137
        %v1140 = vrot.slane %v790, 3
        %v1141 = vsel %vm942, %v1140, %v1139
        %v1142 = vrot.slane %v791, 2
        %v1143 = vsel %vm945, %v1142, %v1141
        %v1144 = vrot.slane %v792, 1
        %v1145 = vsel %vm948, %v1144, %v1143
        %v1146 = vrot.slane %v794, 7
        %v1147 = vsel %vm930, %v1146, %v793
        %v1148 = vrot.slane %v795, 6
        %v1149 = vsel %vm933, %v1148, %v1147
        %v1150 = vrot.slane %v796, 5
        %v1151 = vsel %vm936, %v1150, %v1149
        %v1152 = vrot.slane %v797, 4
        %v1153 = vsel %vm939, %v1152, %v1151
        %v1154 = vrot.slane %v798, 3
        %v1155 = vsel %vm942, %v1154, %v1153
        %v1156 = vrot.slane %v799, 2
        %v1157 = vsel %vm945, %v1156, %v1155
        %v1158 = vrot.slane %v800, 1
        %v1159 = vsel %vm948, %v1158, %v1157
        %1176 = vst.msk [vmem:[#allocation3] sm:$0xff] %vm143, %v949
        %1177 = vst.msk [vmem:[#allocation3 + $0x8] sm:$0xff] %vm143, %v963
        %1178 = vst.msk [vmem:[#allocation3 + $0x10] sm:$0xff] %vm143, %v977
        %1179 = vst.msk [vmem:[#allocation3 + $0x18] sm:$0xff] %vm143, %v991
        %1180 = vst.msk [vmem:[#allocation3 + $0x20] sm:$0xff] %vm143, %v1005
        %1181 = vst.msk [vmem:[#allocation3 + $0x28] sm:$0xff] %vm143, %v1019
        %1182 = vst.msk [vmem:[#allocation3 + $0x30] sm:$0xff] %vm143, %v1033
        %1183 = vst.msk [vmem:[#allocation3 + $0x38] sm:$0xff] %vm143, %v1047
        %1184 = vst.msk [vmem:[#allocation3 + $0x40] sm:$0xff] %vm143, %v1061
        %1185 = vst.msk [vmem:[#allocation3 + $0x48] sm:$0xff] %vm143, %v1075
        %1186 = vst.msk [vmem:[#allocation3 + $0x50] sm:$0xff] %vm143, %v1089
        %1187 = vst.msk [vmem:[#allocation3 + $0x58] sm:$0xff] %vm143, %v1103
        %1188 = vst.msk [vmem:[#allocation3 + $0x60] sm:$0xff] %vm143, %v1117
        %1189 = vst.msk [vmem:[#allocation3 + $0x68] sm:$0xff] %vm143, %v1131
        %1190 = vst.msk [vmem:[#allocation3 + $0x70] sm:$0xff] %vm143, %v1145
        %1191 = vst.msk [vmem:[#allocation3 + $0x78] sm:$0xff] %vm143, %v1159
        %v1192 = vld [vmem:[#allocation2 + $0x1] sm:$0x1]
        %v1193 = vld [vmem:[#allocation2 + $0x9] sm:$0x1]
        %v1194 = vld [vmem:[#allocation2 + $0x11] sm:$0x1]
        %v1195 = vld [vmem:[#allocation2 + $0x19] sm:$0x1]
        %v1196 = vld [vmem:[#allocation2 + $0x21] sm:$0x1]
        %v1197 = vld [vmem:[#allocation2 + $0x29] sm:$0x1]
        %v1198 = vld [vmem:[#allocation2 + $0x31] sm:$0x1]
        %v1199 = vld [vmem:[#allocation2 + $0x39] sm:$0x1]
        %v1200 = vld [vmem:[#allocation2 + $0x41] sm:$0x1]
        %v1201 = vld [vmem:[#allocation2 + $0x49] sm:$0x1]
        %v1202 = vld [vmem:[#allocation2 + $0x51] sm:$0x1]
        %v1203 = vld [vmem:[#allocation2 + $0x59] sm:$0x1]
        %v1204 = vld [vmem:[#allocation2 + $0x61] sm:$0x1]
        %v1205 = vld [vmem:[#allocation2 + $0x69] sm:$0x1]
        %v1206 = vld [vmem:[#allocation2 + $0x71] sm:$0x1]
        %v1207 = vld [vmem:[#allocation2 + $0x79] sm:$0x1]
        %v1208 = vld [vmem:[#allocation2 + $0x81] sm:$0x1]
        %v1209 = vld [vmem:[#allocation2 + $0x89] sm:$0x1]
        %v1210 = vld [vmem:[#allocation2 + $0x91] sm:$0x1]
        %v1211 = vld [vmem:[#allocation2 + $0x99] sm:$0x1]
        %v1212 = vld [vmem:[#allocation2 + $0xa1] sm:$0x1]
        %v1213 = vld [vmem:[#allocation2 + $0xa9] sm:$0x1]
        %v1214 = vld [vmem:[#allocation2 + $0xb1] sm:$0x1]
        %v1215 = vld [vmem:[#allocation2 + $0xb9] sm:$0x1]
        %v1216 = vld [vmem:[#allocation2 + $0xc1] sm:$0x1]
        %v1217 = vld [vmem:[#allocation2 + $0xc9] sm:$0x1]
        %v1218 = vld [vmem:[#allocation2 + $0xd1] sm:$0x1]
        %v1219 = vld [vmem:[#allocation2 + $0xd9] sm:$0x1]
        %v1220 = vld [vmem:[#allocation2 + $0xe1] sm:$0x1]
        %v1221 = vld [vmem:[#allocation2 + $0xe9] sm:$0x1]
        %v1222 = vld [vmem:[#allocation2 + $0xf1] sm:$0x1]
        %v1223 = vld [vmem:[#allocation2 + $0xf9] sm:$0x1]
        %v1224 = vld [vmem:[#allocation2 + $0x101] sm:$0x1]
        %v1225 = vld [vmem:[#allocation2 + $0x109] sm:$0x1]
        %v1226 = vld [vmem:[#allocation2 + $0x111] sm:$0x1]
        %v1227 = vld [vmem:[#allocation2 + $0x119] sm:$0x1]
        %v1228 = vld [vmem:[#allocation2 + $0x121] sm:$0x1]
        %v1229 = vld [vmem:[#allocation2 + $0x129] sm:$0x1]
        %v1230 = vld [vmem:[#allocation2 + $0x131] sm:$0x1]
        %v1231 = vld [vmem:[#allocation2 + $0x139] sm:$0x1]
        %v1232 = vld [vmem:[#allocation2 + $0x141] sm:$0x1]
        %v1233 = vld [vmem:[#allocation2 + $0x149] sm:$0x1]
        %v1234 = vld [vmem:[#allocation2 + $0x151] sm:$0x1]
        %v1235 = vld [vmem:[#allocation2 + $0x159] sm:$0x1]
        %v1236 = vld [vmem:[#allocation2 + $0x161] sm:$0x1]
        %v1237 = vld [vmem:[#allocation2 + $0x169] sm:$0x1]
        %v1238 = vld [vmem:[#allocation2 + $0x171] sm:$0x1]
        %v1239 = vld [vmem:[#allocation2 + $0x179] sm:$0x1]
        %v1240 = vld [vmem:[#allocation2 + $0x181] sm:$0x1]
        %v1241 = vld [vmem:[#allocation2 + $0x189] sm:$0x1]
        %v1242 = vld [vmem:[#allocation2 + $0x191] sm:$0x1]
        %v1243 = vld [vmem:[#allocation2 + $0x199] sm:$0x1]
        %v1244 = vld [vmem:[#allocation2 + $0x1a1] sm:$0x1]
        %v1245 = vld [vmem:[#allocation2 + $0x1a9] sm:$0x1]
        %v1246 = vld [vmem:[#allocation2 + $0x1b1] sm:$0x1]
        %v1247 = vld [vmem:[#allocation2 + $0x1b9] sm:$0x1]
        %v1248 = vld [vmem:[#allocation2 + $0x1c1] sm:$0x1]
        %v1249 = vld [vmem:[#allocation2 + $0x1c9] sm:$0x1]
        %v1250 = vld [vmem:[#allocation2 + $0x1d1] sm:$0x1]
        %v1251 = vld [vmem:[#allocation2 + $0x1d9] sm:$0x1]
        %v1252 = vld [vmem:[#allocation2 + $0x1e1] sm:$0x1]
        %v1253 = vld [vmem:[#allocation2 + $0x1e9] sm:$0x1]
        %v1254 = vld [vmem:[#allocation2 + $0x1f1] sm:$0x1]
        %v1255 = vld [vmem:[#allocation2 + $0x1f9] sm:$0x1]
        %v1256 = vld [vmem:[#allocation2 + $0x201] sm:$0x1]
        %v1257 = vld [vmem:[#allocation2 + $0x209] sm:$0x1]
        %v1258 = vld [vmem:[#allocation2 + $0x211] sm:$0x1]
        %v1259 = vld [vmem:[#allocation2 + $0x219] sm:$0x1]
        %v1260 = vld [vmem:[#allocation2 + $0x221] sm:$0x1]
        %v1261 = vld [vmem:[#allocation2 + $0x229] sm:$0x1]
        %v1262 = vld [vmem:[#allocation2 + $0x231] sm:$0x1]
        %v1263 = vld [vmem:[#allocation2 + $0x239] sm:$0x1]
        %v1264 = vld [vmem:[#allocation2 + $0x241] sm:$0x1]
        %v1265 = vld [vmem:[#allocation2 + $0x249] sm:$0x1]
        %v1266 = vld [vmem:[#allocation2 + $0x251] sm:$0x1]
        %v1267 = vld [vmem:[#allocation2 + $0x259] sm:$0x1]
        %v1268 = vld [vmem:[#allocation2 + $0x261] sm:$0x1]
        %v1269 = vld [vmem:[#allocation2 + $0x269] sm:$0x1]
        %v1270 = vld [vmem:[#allocation2 + $0x271] sm:$0x1]
        %v1271 = vld [vmem:[#allocation2 + $0x279] sm:$0x1]
        %v1272 = vld [vmem:[#allocation2 + $0x281] sm:$0x1]
        %v1273 = vld [vmem:[#allocation2 + $0x289] sm:$0x1]
        %v1274 = vld [vmem:[#allocation2 + $0x291] sm:$0x1]
        %v1275 = vld [vmem:[#allocation2 + $0x299] sm:$0x1]
        %v1276 = vld [vmem:[#allocation2 + $0x2a1] sm:$0x1]
        %v1277 = vld [vmem:[#allocation2 + $0x2a9] sm:$0x1]
        %v1278 = vld [vmem:[#allocation2 + $0x2b1] sm:$0x1]
        %v1279 = vld [vmem:[#allocation2 + $0x2b9] sm:$0x1]
        %v1280 = vld [vmem:[#allocation2 + $0x2c1] sm:$0x1]
        %v1281 = vld [vmem:[#allocation2 + $0x2c9] sm:$0x1]
        %v1282 = vld [vmem:[#allocation2 + $0x2d1] sm:$0x1]
        %v1283 = vld [vmem:[#allocation2 + $0x2d9] sm:$0x1]
        %v1284 = vld [vmem:[#allocation2 + $0x2e1] sm:$0x1]
        %v1285 = vld [vmem:[#allocation2 + $0x2e9] sm:$0x1]
        %v1286 = vld [vmem:[#allocation2 + $0x2f1] sm:$0x1]
        %v1287 = vld [vmem:[#allocation2 + $0x2f9] sm:$0x1]
        %v1288 = vld [vmem:[#allocation2 + $0x301] sm:$0x1]
        %v1289 = vld [vmem:[#allocation2 + $0x309] sm:$0x1]
        %v1290 = vld [vmem:[#allocation2 + $0x311] sm:$0x1]
        %v1291 = vld [vmem:[#allocation2 + $0x319] sm:$0x1]
        %v1292 = vld [vmem:[#allocation2 + $0x321] sm:$0x1]
        %v1293 = vld [vmem:[#allocation2 + $0x329] sm:$0x1]
        %v1294 = vld [vmem:[#allocation2 + $0x331] sm:$0x1]
        %v1295 = vld [vmem:[#allocation2 + $0x339] sm:$0x1]
        %v1296 = vld [vmem:[#allocation2 + $0x341] sm:$0x1]
        %v1297 = vld [vmem:[#allocation2 + $0x349] sm:$0x1]
        %v1298 = vld [vmem:[#allocation2 + $0x351] sm:$0x1]
        %v1299 = vld [vmem:[#allocation2 + $0x359] sm:$0x1]
        %v1300 = vld [vmem:[#allocation2 + $0x361] sm:$0x1]
        %v1301 = vld [vmem:[#allocation2 + $0x369] sm:$0x1]
        %v1302 = vld [vmem:[#allocation2 + $0x371] sm:$0x1]
        %v1303 = vld [vmem:[#allocation2 + $0x379] sm:$0x1]
        %v1304 = vld [vmem:[#allocation2 + $0x381] sm:$0x1]
        %v1305 = vld [vmem:[#allocation2 + $0x389] sm:$0x1]
        %v1306 = vld [vmem:[#allocation2 + $0x391] sm:$0x1]
        %v1307 = vld [vmem:[#allocation2 + $0x399] sm:$0x1]
        %v1308 = vld [vmem:[#allocation2 + $0x3a1] sm:$0x1]
        %v1309 = vld [vmem:[#allocation2 + $0x3a9] sm:$0x1]
        %v1310 = vld [vmem:[#allocation2 + $0x3b1] sm:$0x1]
        %v1311 = vld [vmem:[#allocation2 + $0x3b9] sm:$0x1]
        %v1312 = vld [vmem:[#allocation2 + $0x3c1] sm:$0x1]
        %v1313 = vld [vmem:[#allocation2 + $0x3c9] sm:$0x1]
        %v1314 = vld [vmem:[#allocation2 + $0x3d1] sm:$0x1]
        %v1315 = vld [vmem:[#allocation2 + $0x3d9] sm:$0x1]
        %v1316 = vld [vmem:[#allocation2 + $0x3e1] sm:$0x1]
        %v1317 = vld [vmem:[#allocation2 + $0x3e9] sm:$0x1]
        %v1318 = vld [vmem:[#allocation2 + $0x3f1] sm:$0x1]
        %v1319 = vld [vmem:[#allocation2 + $0x3f9] sm:$0x1]
        %v1448 = vrot.slane %v1193, 7
        %v1449 = vsel %vm930, %v1448, %v1192
        %v1450 = vrot.slane %v1194, 6
        %v1451 = vsel %vm933, %v1450, %v1449
        %v1452 = vrot.slane %v1195, 5
        %v1453 = vsel %vm936, %v1452, %v1451
        %v1454 = vrot.slane %v1196, 4
        %v1455 = vsel %vm939, %v1454, %v1453
        %v1456 = vrot.slane %v1197, 3
        %v1457 = vsel %vm942, %v1456, %v1455
        %v1458 = vrot.slane %v1198, 2
        %v1459 = vsel %vm945, %v1458, %v1457
        %v1460 = vrot.slane %v1199, 1
        %v1461 = vsel %vm948, %v1460, %v1459
        %v1462 = vrot.slane %v1201, 7
        %v1463 = vsel %vm930, %v1462, %v1200
        %v1464 = vrot.slane %v1202, 6
        %v1465 = vsel %vm933, %v1464, %v1463
        %v1466 = vrot.slane %v1203, 5
        %v1467 = vsel %vm936, %v1466, %v1465
        %v1468 = vrot.slane %v1204, 4
        %v1469 = vsel %vm939, %v1468, %v1467
        %v1470 = vrot.slane %v1205, 3
        %v1471 = vsel %vm942, %v1470, %v1469
        %v1472 = vrot.slane %v1206, 2
        %v1473 = vsel %vm945, %v1472, %v1471
        %v1474 = vrot.slane %v1207, 1
        %v1475 = vsel %vm948, %v1474, %v1473
        %v1476 = vrot.slane %v1209, 7
        %v1477 = vsel %vm930, %v1476, %v1208
        %v1478 = vrot.slane %v1210, 6
        %v1479 = vsel %vm933, %v1478, %v1477
        %v1480 = vrot.slane %v1211, 5
        %v1481 = vsel %vm936, %v1480, %v1479
        %v1482 = vrot.slane %v1212, 4
        %v1483 = vsel %vm939, %v1482, %v1481
        %v1484 = vrot.slane %v1213, 3
        %v1485 = vsel %vm942, %v1484, %v1483
        %v1486 = vrot.slane %v1214, 2
        %v1487 = vsel %vm945, %v1486, %v1485
        %v1488 = vrot.slane %v1215, 1
        %v1489 = vsel %vm948, %v1488, %v1487
        %v1490 = vrot.slane %v1217, 7
        %v1491 = vsel %vm930, %v1490, %v1216
        %v1492 = vrot.slane %v1218, 6
        %v1493 = vsel %vm933, %v1492, %v1491
        %v1494 = vrot.slane %v1219, 5
        %v1495 = vsel %vm936, %v1494, %v1493
        %v1496 = vrot.slane %v1220, 4
        %v1497 = vsel %vm939, %v1496, %v1495
        %v1498 = vrot.slane %v1221, 3
        %v1499 = vsel %vm942, %v1498, %v1497
        %v1500 = vrot.slane %v1222, 2
        %v1501 = vsel %vm945, %v1500, %v1499
        %v1502 = vrot.slane %v1223, 1
        %v1503 = vsel %vm948, %v1502, %v1501
        %v1504 = vrot.slane %v1225, 7
        %v1505 = vsel %vm930, %v1504, %v1224
        %v1506 = vrot.slane %v1226, 6
        %v1507 = vsel %vm933, %v1506, %v1505
        %v1508 = vrot.slane %v1227, 5
        %v1509 = vsel %vm936, %v1508, %v1507
        %v1510 = vrot.slane %v1228, 4
        %v1511 = vsel %vm939, %v1510, %v1509
        %v1512 = vrot.slane %v1229, 3
        %v1513 = vsel %vm942, %v1512, %v1511
        %v1514 = vrot.slane %v1230, 2
        %v1515 = vsel %vm945, %v1514, %v1513
        %v1516 = vrot.slane %v1231, 1
        %v1517 = vsel %vm948, %v1516, %v1515
        %v1518 = vrot.slane %v1233, 7
        %v1519 = vsel %vm930, %v1518, %v1232
        %v1520 = vrot.slane %v1234, 6
        %v1521 = vsel %vm933, %v1520, %v1519
        %v1522 = vrot.slane %v1235, 5
        %v1523 = vsel %vm936, %v1522, %v1521
        %v1524 = vrot.slane %v1236, 4
        %v1525 = vsel %vm939, %v1524, %v1523
        %v1526 = vrot.slane %v1237, 3
        %v1527 = vsel %vm942, %v1526, %v1525
        %v1528 = vrot.slane %v1238, 2
        %v1529 = vsel %vm945, %v1528, %v1527
        %v1530 = vrot.slane %v1239, 1
        %v1531 = vsel %vm948, %v1530, %v1529
        %v1532 = vrot.slane %v1241, 7
        %v1533 = vsel %vm930, %v1532, %v1240
        %v1534 = vrot.slane %v1242, 6
        %v1535 = vsel %vm933, %v1534, %v1533
        %v1536 = vrot.slane %v1243, 5
        %v1537 = vsel %vm936, %v1536, %v1535
        %v1538 = vrot.slane %v1244, 4
        %v1539 = vsel %vm939, %v1538, %v1537
        %v1540 = vrot.slane %v1245, 3
        %v1541 = vsel %vm942, %v1540, %v1539
        %v1542 = vrot.slane %v1246, 2
        %v1543 = vsel %vm945, %v1542, %v1541
        %v1544 = vrot.slane %v1247, 1
        %v1545 = vsel %vm948, %v1544, %v1543
        %v1546 = vrot.slane %v1249, 7
        %v1547 = vsel %vm930, %v1546, %v1248
        %v1548 = vrot.slane %v1250, 6
        %v1549 = vsel %vm933, %v1548, %v1547
        %v1550 = vrot.slane %v1251, 5
        %v1551 = vsel %vm936, %v1550, %v1549
        %v1552 = vrot.slane %v1252, 4
        %v1553 = vsel %vm939, %v1552, %v1551
        %v1554 = vrot.slane %v1253, 3
        %v1555 = vsel %vm942, %v1554, %v1553
        %v1556 = vrot.slane %v1254, 2
        %v1557 = vsel %vm945, %v1556, %v1555
        %v1558 = vrot.slane %v1255, 1
        %v1559 = vsel %vm948, %v1558, %v1557
        %v1560 = vrot.slane %v1257, 7
        %v1561 = vsel %vm930, %v1560, %v1256
        %v1562 = vrot.slane %v1258, 6
        %v1563 = vsel %vm933, %v1562, %v1561
        %v1564 = vrot.slane %v1259, 5
        %v1565 = vsel %vm936, %v1564, %v1563
        %v1566 = vrot.slane %v1260, 4
        %v1567 = vsel %vm939, %v1566, %v1565
        %v1568 = vrot.slane %v1261, 3
        %v1569 = vsel %vm942, %v1568, %v1567
        %v1570 = vrot.slane %v1262, 2
        %v1571 = vsel %vm945, %v1570, %v1569
        %v1572 = vrot.slane %v1263, 1
        %v1573 = vsel %vm948, %v1572, %v1571
        %v1574 = vrot.slane %v1265, 7
        %v1575 = vsel %vm930, %v1574, %v1264
        %v1576 = vrot.slane %v1266, 6
        %v1577 = vsel %vm933, %v1576, %v1575
        %v1578 = vrot.slane %v1267, 5
        %v1579 = vsel %vm936, %v1578, %v1577
        %v1580 = vrot.slane %v1268, 4
        %v1581 = vsel %vm939, %v1580, %v1579
        %v1582 = vrot.slane %v1269, 3
        %v1583 = vsel %vm942, %v1582, %v1581
        %v1584 = vrot.slane %v1270, 2
        %v1585 = vsel %vm945, %v1584, %v1583
        %v1586 = vrot.slane %v1271, 1
        %v1587 = vsel %vm948, %v1586, %v1585
        %v1588 = vrot.slane %v1273, 7
        %v1589 = vsel %vm930, %v1588, %v1272
        %v1590 = vrot.slane %v1274, 6
        %v1591 = vsel %vm933, %v1590, %v1589
        %v1592 = vrot.slane %v1275, 5
        %v1593 = vsel %vm936, %v1592, %v1591
        %v1594 = vrot.slane %v1276, 4
        %v1595 = vsel %vm939, %v1594, %v1593
        %v1596 = vrot.slane %v1277, 3
        %v1597 = vsel %vm942, %v1596, %v1595
        %v1598 = vrot.slane %v1278, 2
        %v1599 = vsel %vm945, %v1598, %v1597
        %v1600 = vrot.slane %v1279, 1
        %v1601 = vsel %vm948, %v1600, %v1599
        %v1602 = vrot.slane %v1281, 7
        %v1603 = vsel %vm930, %v1602, %v1280
        %v1604 = vrot.slane %v1282, 6
        %v1605 = vsel %vm933, %v1604, %v1603
        %v1606 = vrot.slane %v1283, 5
        %v1607 = vsel %vm936, %v1606, %v1605
        %v1608 = vrot.slane %v1284, 4
        %v1609 = vsel %vm939, %v1608, %v1607
        %v1610 = vrot.slane %v1285, 3
        %v1611 = vsel %vm942, %v1610, %v1609
        %v1612 = vrot.slane %v1286, 2
        %v1613 = vsel %vm945, %v1612, %v1611
        %v1614 = vrot.slane %v1287, 1
        %v1615 = vsel %vm948, %v1614, %v1613
        %v1616 = vrot.slane %v1289, 7
        %v1617 = vsel %vm930, %v1616, %v1288
        %v1618 = vrot.slane %v1290, 6
        %v1619 = vsel %vm933, %v1618, %v1617
        %v1620 = vrot.slane %v1291, 5
        %v1621 = vsel %vm936, %v1620, %v1619
        %v1622 = vrot.slane %v1292, 4
        %v1623 = vsel %vm939, %v1622, %v1621
        %v1624 = vrot.slane %v1293, 3
        %v1625 = vsel %vm942, %v1624, %v1623
        %v1626 = vrot.slane %v1294, 2
        %v1627 = vsel %vm945, %v1626, %v1625
        %v1628 = vrot.slane %v1295, 1
        %v1629 = vsel %vm948, %v1628, %v1627
        %v1630 = vrot.slane %v1297, 7
        %v1631 = vsel %vm930, %v1630, %v1296
        %v1632 = vrot.slane %v1298, 6
        %v1633 = vsel %vm933, %v1632, %v1631
        %v1634 = vrot.slane %v1299, 5
        %v1635 = vsel %vm936, %v1634, %v1633
        %v1636 = vrot.slane %v1300, 4
        %v1637 = vsel %vm939, %v1636, %v1635
        %v1638 = vrot.slane %v1301, 3
        %v1639 = vsel %vm942, %v1638, %v1637
        %v1640 = vrot.slane %v1302, 2
        %v1641 = vsel %vm945, %v1640, %v1639
        %v1642 = vrot.slane %v1303, 1
        %v1643 = vsel %vm948, %v1642, %v1641
        %v1644 = vrot.slane %v1305, 7
        %v1645 = vsel %vm930, %v1644, %v1304
        %v1646 = vrot.slane %v1306, 6
        %v1647 = vsel %vm933, %v1646, %v1645
        %v1648 = vrot.slane %v1307, 5
        %v1649 = vsel %vm936, %v1648, %v1647
        %v1650 = vrot.slane %v1308, 4
        %v1651 = vsel %vm939, %v1650, %v1649
        %v1652 = vrot.slane %v1309, 3
        %v1653 = vsel %vm942, %v1652, %v1651
        %v1654 = vrot.slane %v1310, 2
        %v1655 = vsel %vm945, %v1654, %v1653
        %v1656 = vrot.slane %v1311, 1
        %v1657 = vsel %vm948, %v1656, %v1655
        %v1658 = vrot.slane %v1313, 7
        %v1659 = vsel %vm930, %v1658, %v1312
        %v1660 = vrot.slane %v1314, 6
        %v1661 = vsel %vm933, %v1660, %v1659
        %v1662 = vrot.slane %v1315, 5
        %v1663 = vsel %vm936, %v1662, %v1661
        %v1664 = vrot.slane %v1316, 4
        %v1665 = vsel %vm939, %v1664, %v1663
        %v1666 = vrot.slane %v1317, 3
        %v1667 = vsel %vm942, %v1666, %v1665
        %v1668 = vrot.slane %v1318, 2
        %v1669 = vsel %vm945, %v1668, %v1667
        %v1670 = vrot.slane %v1319, 1
        %v1671 = vsel %vm948, %v1670, %v1669
        %1672 = vrot.lane.b32.xlu0 %v1461, 8
        %v1673 = vpop.permute.xlu0 %1672
        %1674 = vrot.lane.b32.xlu0 %v1475, 8
        %v1675 = vpop.permute.xlu0 %1674
        %1676 = vrot.lane.b32.xlu0 %v1489, 8
        %v1677 = vpop.permute.xlu0 %1676
        %1678 = vrot.lane.b32.xlu0 %v1503, 8
        %v1679 = vpop.permute.xlu0 %1678
        %1680 = vrot.lane.b32.xlu0 %v1517, 8
        %v1681 = vpop.permute.xlu0 %1680
        %1682 = vrot.lane.b32.xlu0 %v1531, 8
        %v1683 = vpop.permute.xlu0 %1682
        %1684 = vrot.lane.b32.xlu0 %v1545, 8
        %v1685 = vpop.permute.xlu0 %1684
        %1686 = vrot.lane.b32.xlu0 %v1559, 8
        %v1687 = vpop.permute.xlu0 %1686
        %1688 = vrot.lane.b32.xlu0 %v1573, 8
        %v1689 = vpop.permute.xlu0 %1688
        %1690 = vrot.lane.b32.xlu0 %v1587, 8
        %v1691 = vpop.permute.xlu0 %1690
        %1692 = vrot.lane.b32.xlu0 %v1601, 8
        %v1693 = vpop.permute.xlu0 %1692
        %1694 = vrot.lane.b32.xlu0 %v1615, 8
        %v1695 = vpop.permute.xlu0 %1694
        %1696 = vrot.lane.b32.xlu0 %v1629, 8
        %v1697 = vpop.permute.xlu0 %1696
        %1698 = vrot.lane.b32.xlu0 %v1643, 8
        %v1699 = vpop.permute.xlu0 %1698
        %1700 = vrot.lane.b32.xlu0 %v1657, 8
        %v1701 = vpop.permute.xlu0 %1700
        %1702 = vrot.lane.b32.xlu0 %v1671, 8
        %v1703 = vpop.permute.xlu0 %1702
        %vm1720 = vcmask 130112
        %1721 = vst.msk [vmem:[#allocation3] sm:$0xff] %vm1720, %v1673
        %1722 = vst.msk [vmem:[#allocation3 + $0x8] sm:$0xff] %vm1720, %v1675
        %1723 = vst.msk [vmem:[#allocation3 + $0x10] sm:$0xff] %vm1720, %v1677
        %1724 = vst.msk [vmem:[#allocation3 + $0x18] sm:$0xff] %vm1720, %v1679
        %1725 = vst.msk [vmem:[#allocation3 + $0x20] sm:$0xff] %vm1720, %v1681
        %1726 = vst.msk [vmem:[#allocation3 + $0x28] sm:$0xff] %vm1720, %v1683
        %1727 = vst.msk [vmem:[#allocation3 + $0x30] sm:$0xff] %vm1720, %v1685
        %1728 = vst.msk [vmem:[#allocation3 + $0x38] sm:$0xff] %vm1720, %v1687
        %1729 = vst.msk [vmem:[#allocation3 + $0x40] sm:$0xff] %vm1720, %v1689
        %1730 = vst.msk [vmem:[#allocation3 + $0x48] sm:$0xff] %vm1720, %v1691
        %1731 = vst.msk [vmem:[#allocation3 + $0x50] sm:$0xff] %vm1720, %v1693
        %1732 = vst.msk [vmem:[#allocation3 + $0x58] sm:$0xff] %vm1720, %v1695
        %1733 = vst.msk [vmem:[#allocation3 + $0x60] sm:$0xff] %vm1720, %v1697
        %1734 = vst.msk [vmem:[#allocation3 + $0x68] sm:$0xff] %vm1720, %v1699
        %1735 = vst.msk [vmem:[#allocation3 + $0x70] sm:$0xff] %vm1720, %v1701
        %1736 = vst.msk [vmem:[#allocation3 + $0x78] sm:$0xff] %vm1720, %v1703
        %v1737 = vld [vmem:[#allocation2 + $0x2] sm:$0x1]
        %v1738 = vld [vmem:[#allocation2 + $0xa] sm:$0x1]
        %v1739 = vld [vmem:[#allocation2 + $0x12] sm:$0x1]
        %v1740 = vld [vmem:[#allocation2 + $0x1a] sm:$0x1]
        %v1741 = vld [vmem:[#allocation2 + $0x22] sm:$0x1]
        %v1742 = vld [vmem:[#allocation2 + $0x2a] sm:$0x1]
        %v1743 = vld [vmem:[#allocation2 + $0x32] sm:$0x1]
        %v1744 = vld [vmem:[#allocation2 + $0x3a] sm:$0x1]
        %v1745 = vld [vmem:[#allocation2 + $0x42] sm:$0x1]
        %v1746 = vld [vmem:[#allocation2 + $0x4a] sm:$0x1]
        %v1747 = vld [vmem:[#allocation2 + $0x52] sm:$0x1]
        %v1748 = vld [vmem:[#allocation2 + $0x5a] sm:$0x1]
        %v1749 = vld [vmem:[#allocation2 + $0x62] sm:$0x1]
        %v1750 = vld [vmem:[#allocation2 + $0x6a] sm:$0x1]
        %v1751 = vld [vmem:[#allocation2 + $0x72] sm:$0x1]
        %v1752 = vld [vmem:[#allocation2 + $0x7a] sm:$0x1]
        %v1753 = vld [vmem:[#allocation2 + $0x82] sm:$0x1]
        %v1754 = vld [vmem:[#allocation2 + $0x8a] sm:$0x1]
        %v1755 = vld [vmem:[#allocation2 + $0x92] sm:$0x1]
        %v1756 = vld [vmem:[#allocation2 + $0x9a] sm:$0x1]
        %v1757 = vld [vmem:[#allocation2 + $0xa2] sm:$0x1]
        %v1758 = vld [vmem:[#allocation2 + $0xaa] sm:$0x1]
        %v1759 = vld [vmem:[#allocation2 + $0xb2] sm:$0x1]
        %v1760 = vld [vmem:[#allocation2 + $0xba] sm:$0x1]
        %v1761 = vld [vmem:[#allocation2 + $0xc2] sm:$0x1]
        %v1762 = vld [vmem:[#allocation2 + $0xca] sm:$0x1]
        %v1763 = vld [vmem:[#allocation2 + $0xd2] sm:$0x1]
        %v1764 = vld [vmem:[#allocation2 + $0xda] sm:$0x1]
        %v1765 = vld [vmem:[#allocation2 + $0xe2] sm:$0x1]
        %v1766 = vld [vmem:[#allocation2 + $0xea] sm:$0x1]
        %v1767 = vld [vmem:[#allocation2 + $0xf2] sm:$0x1]
        %v1768 = vld [vmem:[#allocation2 + $0xfa] sm:$0x1]
        %v1769 = vld [vmem:[#allocation2 + $0x102] sm:$0x1]
        %v1770 = vld [vmem:[#allocation2 + $0x10a] sm:$0x1]
        %v1771 = vld [vmem:[#allocation2 + $0x112] sm:$0x1]
        %v1772 = vld [vmem:[#allocation2 + $0x11a] sm:$0x1]
        %v1773 = vld [vmem:[#allocation2 + $0x122] sm:$0x1]
        %v1774 = vld [vmem:[#allocation2 + $0x12a] sm:$0x1]
        %v1775 = vld [vmem:[#allocation2 + $0x132] sm:$0x1]
        %v1776 = vld [vmem:[#allocation2 + $0x13a] sm:$0x1]
        %v1777 = vld [vmem:[#allocation2 + $0x142] sm:$0x1]
        %v1778 = vld [vmem:[#allocation2 + $0x14a] sm:$0x1]
        %v1779 = vld [vmem:[#allocation2 + $0x152] sm:$0x1]
        %v1780 = vld [vmem:[#allocation2 + $0x15a] sm:$0x1]
        %v1781 = vld [vmem:[#allocation2 + $0x162] sm:$0x1]
        %v1782 = vld [vmem:[#allocation2 + $0x16a] sm:$0x1]
        %v1783 = vld [vmem:[#allocation2 + $0x172] sm:$0x1]
        %v1784 = vld [vmem:[#allocation2 + $0x17a] sm:$0x1]
        %v1785 = vld [vmem:[#allocation2 + $0x182] sm:$0x1]
        %v1786 = vld [vmem:[#allocation2 + $0x18a] sm:$0x1]
        %v1787 = vld [vmem:[#allocation2 + $0x192] sm:$0x1]
        %v1788 = vld [vmem:[#allocation2 + $0x19a] sm:$0x1]
        %v1789 = vld [vmem:[#allocation2 + $0x1a2] sm:$0x1]
        %v1790 = vld [vmem:[#allocation2 + $0x1aa] sm:$0x1]
        %v1791 = vld [vmem:[#allocation2 + $0x1b2] sm:$0x1]
        %v1792 = vld [vmem:[#allocation2 + $0x1ba] sm:$0x1]
        %v1793 = vld [vmem:[#allocation2 + $0x1c2] sm:$0x1]
        %v1794 = vld [vmem:[#allocation2 + $0x1ca] sm:$0x1]
        %v1795 = vld [vmem:[#allocation2 + $0x1d2] sm:$0x1]
        %v1796 = vld [vmem:[#allocation2 + $0x1da] sm:$0x1]
        %v1797 = vld [vmem:[#allocation2 + $0x1e2] sm:$0x1]
        %v1798 = vld [vmem:[#allocation2 + $0x1ea] sm:$0x1]
        %v1799 = vld [vmem:[#allocation2 + $0x1f2] sm:$0x1]
        %v1800 = vld [vmem:[#allocation2 + $0x1fa] sm:$0x1]
        %v1801 = vld [vmem:[#allocation2 + $0x202] sm:$0x1]
        %v1802 = vld [vmem:[#allocation2 + $0x20a] sm:$0x1]
        %v1803 = vld [vmem:[#allocation2 + $0x212] sm:$0x1]
        %v1804 = vld [vmem:[#allocation2 + $0x21a] sm:$0x1]
        %v1805 = vld [vmem:[#allocation2 + $0x222] sm:$0x1]
        %v1806 = vld [vmem:[#allocation2 + $0x22a] sm:$0x1]
        %v1807 = vld [vmem:[#allocation2 + $0x232] sm:$0x1]
        %v1808 = vld [vmem:[#allocation2 + $0x23a] sm:$0x1]
        %v1809 = vld [vmem:[#allocation2 + $0x242] sm:$0x1]
        %v1810 = vld [vmem:[#allocation2 + $0x24a] sm:$0x1]
        %v1811 = vld [vmem:[#allocation2 + $0x252] sm:$0x1]
        %v1812 = vld [vmem:[#allocation2 + $0x25a] sm:$0x1]
        %v1813 = vld [vmem:[#allocation2 + $0x262] sm:$0x1]
        %v1814 = vld [vmem:[#allocation2 + $0x26a] sm:$0x1]
        %v1815 = vld [vmem:[#allocation2 + $0x272] sm:$0x1]
        %v1816 = vld [vmem:[#allocation2 + $0x27a] sm:$0x1]
        %v1817 = vld [vmem:[#allocation2 + $0x282] sm:$0x1]
        %v1818 = vld [vmem:[#allocation2 + $0x28a] sm:$0x1]
        %v1819 = vld [vmem:[#allocation2 + $0x292] sm:$0x1]
        %v1820 = vld [vmem:[#allocation2 + $0x29a] sm:$0x1]
        %v1821 = vld [vmem:[#allocation2 + $0x2a2] sm:$0x1]
        %v1822 = vld [vmem:[#allocation2 + $0x2aa] sm:$0x1]
        %v1823 = vld [vmem:[#allocation2 + $0x2b2] sm:$0x1]
        %v1824 = vld [vmem:[#allocation2 + $0x2ba] sm:$0x1]
        %v1825 = vld [vmem:[#allocation2 + $0x2c2] sm:$0x1]
        %v1826 = vld [vmem:[#allocation2 + $0x2ca] sm:$0x1]
        %v1827 = vld [vmem:[#allocation2 + $0x2d2] sm:$0x1]
        %v1828 = vld [vmem:[#allocation2 + $0x2da] sm:$0x1]
        %v1829 = vld [vmem:[#allocation2 + $0x2e2] sm:$0x1]
        %v1830 = vld [vmem:[#allocation2 + $0x2ea] sm:$0x1]
        %v1831 = vld [vmem:[#allocation2 + $0x2f2] sm:$0x1]
        %v1832 = vld [vmem:[#allocation2 + $0x2fa] sm:$0x1]
        %v1833 = vld [vmem:[#allocation2 + $0x302] sm:$0x1]
        %v1834 = vld [vmem:[#allocation2 + $0x30a] sm:$0x1]
        %v1835 = vld [vmem:[#allocation2 + $0x312] sm:$0x1]
        %v1836 = vld [vmem:[#allocation2 + $0x31a] sm:$0x1]
        %v1837 = vld [vmem:[#allocation2 + $0x322] sm:$0x1]
        %v1838 = vld [vmem:[#allocation2 + $0x32a] sm:$0x1]
        %v1839 = vld [vmem:[#allocation2 + $0x332] sm:$0x1]
        %v1840 = vld [vmem:[#allocation2 + $0x33a] sm:$0x1]
        %v1841 = vld [vmem:[#allocation2 + $0x342] sm:$0x1]
        %v1842 = vld [vmem:[#allocation2 + $0x34a] sm:$0x1]
        %v1843 = vld [vmem:[#allocation2 + $0x352] sm:$0x1]
        %v1844 = vld [vmem:[#allocation2 + $0x35a] sm:$0x1]
        %v1845 = vld [vmem:[#allocation2 + $0x362] sm:$0x1]
        %v1846 = vld [vmem:[#allocation2 + $0x36a] sm:$0x1]
        %v1847 = vld [vmem:[#allocation2 + $0x372] sm:$0x1]
        %v1848 = vld [vmem:[#allocation2 + $0x37a] sm:$0x1]
        %v1849 = vld [vmem:[#allocation2 + $0x382] sm:$0x1]
        %v1850 = vld [vmem:[#allocation2 + $0x38a] sm:$0x1]
        %v1851 = vld [vmem:[#allocation2 + $0x392] sm:$0x1]
        %v1852 = vld [vmem:[#allocation2 + $0x39a] sm:$0x1]
        %v1853 = vld [vmem:[#allocation2 + $0x3a2] sm:$0x1]
        %v1854 = vld [vmem:[#allocation2 + $0x3aa] sm:$0x1]
        %v1855 = vld [vmem:[#allocation2 + $0x3b2] sm:$0x1]
        %v1856 = vld [vmem:[#allocation2 + $0x3ba] sm:$0x1]
        %v1857 = vld [vmem:[#allocation2 + $0x3c2] sm:$0x1]
        %v1858 = vld [vmem:[#allocation2 + $0x3ca] sm:$0x1]
        %v1859 = vld [vmem:[#allocation2 + $0x3d2] sm:$0x1]
        %v1860 = vld [vmem:[#allocation2 + $0x3da] sm:$0x1]
        %v1861 = vld [vmem:[#allocation2 + $0x3e2] sm:$0x1]
        %v1862 = vld [vmem:[#allocation2 + $0x3ea] sm:$0x1]
        %v1863 = vld [vmem:[#allocation2 + $0x3f2] sm:$0x1]
        %v1864 = vld [vmem:[#allocation2 + $0x3fa] sm:$0x1]
        %v1993 = vrot.slane %v1738, 7
        %v1994 = vsel %vm930, %v1993, %v1737
        %v1995 = vrot.slane %v1739, 6
        %v1996 = vsel %vm933, %v1995, %v1994
        %v1997 = vrot.slane %v1740, 5
        %v1998 = vsel %vm936, %v1997, %v1996
        %v1999 = vrot.slane %v1741, 4
        %v2000 = vsel %vm939, %v1999, %v1998
        %v2001 = vrot.slane %v1742, 3
        %v2002 = vsel %vm942, %v2001, %v2000
        %v2003 = vrot.slane %v1743, 2
        %v2004 = vsel %vm945, %v2003, %v2002
        %v2005 = vrot.slane %v1744, 1
        %v2006 = vsel %vm948, %v2005, %v2004
        %v2007 = vrot.slane %v1746, 7
        %v2008 = vsel %vm930, %v2007, %v1745
        %v2009 = vrot.slane %v1747, 6
        %v2010 = vsel %vm933, %v2009, %v2008
        %v2011 = vrot.slane %v1748, 5
        %v2012 = vsel %vm936, %v2011, %v2010
        %v2013 = vrot.slane %v1749, 4
        %v2014 = vsel %vm939, %v2013, %v2012
        %v2015 = vrot.slane %v1750, 3
        %v2016 = vsel %vm942, %v2015, %v2014
        %v2017 = vrot.slane %v1751, 2
        %v2018 = vsel %vm945, %v2017, %v2016
        %v2019 = vrot.slane %v1752, 1
        %v2020 = vsel %vm948, %v2019, %v2018
        %v2021 = vrot.slane %v1754, 7
        %v2022 = vsel %vm930, %v2021, %v1753
        %v2023 = vrot.slane %v1755, 6
        %v2024 = vsel %vm933, %v2023, %v2022
        %v2025 = vrot.slane %v1756, 5
        %v2026 = vsel %vm936, %v2025, %v2024
        %v2027 = vrot.slane %v1757, 4
        %v2028 = vsel %vm939, %v2027, %v2026
        %v2029 = vrot.slane %v1758, 3
        %v2030 = vsel %vm942, %v2029, %v2028
        %v2031 = vrot.slane %v1759, 2
        %v2032 = vsel %vm945, %v2031, %v2030
        %v2033 = vrot.slane %v1760, 1
        %v2034 = vsel %vm948, %v2033, %v2032
        %v2035 = vrot.slane %v1762, 7
        %v2036 = vsel %vm930, %v2035, %v1761
        %v2037 = vrot.slane %v1763, 6
        %v2038 = vsel %vm933, %v2037, %v2036
        %v2039 = vrot.slane %v1764, 5
        %v2040 = vsel %vm936, %v2039, %v2038
        %v2041 = vrot.slane %v1765, 4
        %v2042 = vsel %vm939, %v2041, %v2040
        %v2043 = vrot.slane %v1766, 3
        %v2044 = vsel %vm942, %v2043, %v2042
        %v2045 = vrot.slane %v1767, 2
        %v2046 = vsel %vm945, %v2045, %v2044
        %v2047 = vrot.slane %v1768, 1
        %v2048 = vsel %vm948, %v2047, %v2046
        %v2049 = vrot.slane %v1770, 7
        %v2050 = vsel %vm930, %v2049, %v1769
        %v2051 = vrot.slane %v1771, 6
        %v2052 = vsel %vm933, %v2051, %v2050
        %v2053 = vrot.slane %v1772, 5
        %v2054 = vsel %vm936, %v2053, %v2052
        %v2055 = vrot.slane %v1773, 4
        %v2056 = vsel %vm939, %v2055, %v2054
        %v2057 = vrot.slane %v1774, 3
        %v2058 = vsel %vm942, %v2057, %v2056
        %v2059 = vrot.slane %v1775, 2
        %v2060 = vsel %vm945, %v2059, %v2058
        %v2061 = vrot.slane %v1776, 1
        %v2062 = vsel %vm948, %v2061, %v2060
        %v2063 = vrot.slane %v1778, 7
        %v2064 = vsel %vm930, %v2063, %v1777
        %v2065 = vrot.slane %v1779, 6
        %v2066 = vsel %vm933, %v2065, %v2064
        %v2067 = vrot.slane %v1780, 5
        %v2068 = vsel %vm936, %v2067, %v2066
        %v2069 = vrot.slane %v1781, 4
        %v2070 = vsel %vm939, %v2069, %v2068
        %v2071 = vrot.slane %v1782, 3
        %v2072 = vsel %vm942, %v2071, %v2070
        %v2073 = vrot.slane %v1783, 2
        %v2074 = vsel %vm945, %v2073, %v2072
        %v2075 = vrot.slane %v1784, 1
        %v2076 = vsel %vm948, %v2075, %v2074
        %v2077 = vrot.slane %v1786, 7
        %v2078 = vsel %vm930, %v2077, %v1785
        %v2079 = vrot.slane %v1787, 6
        %v2080 = vsel %vm933, %v2079, %v2078
        %v2081 = vrot.slane %v1788, 5
        %v2082 = vsel %vm936, %v2081, %v2080
        %v2083 = vrot.slane %v1789, 4
        %v2084 = vsel %vm939, %v2083, %v2082
        %v2085 = vrot.slane %v1790, 3
        %v2086 = vsel %vm942, %v2085, %v2084
        %v2087 = vrot.slane %v1791, 2
        %v2088 = vsel %vm945, %v2087, %v2086
        %v2089 = vrot.slane %v1792, 1
        %v2090 = vsel %vm948, %v2089, %v2088
        %v2091 = vrot.slane %v1794, 7
        %v2092 = vsel %vm930, %v2091, %v1793
        %v2093 = vrot.slane %v1795, 6
        %v2094 = vsel %vm933, %v2093, %v2092
        %v2095 = vrot.slane %v1796, 5
        %v2096 = vsel %vm936, %v2095, %v2094
        %v2097 = vrot.slane %v1797, 4
        %v2098 = vsel %vm939, %v2097, %v2096
        %v2099 = vrot.slane %v1798, 3
        %v2100 = vsel %vm942, %v2099, %v2098
        %v2101 = vrot.slane %v1799, 2
        %v2102 = vsel %vm945, %v2101, %v2100
        %v2103 = vrot.slane %v1800, 1
        %v2104 = vsel %vm948, %v2103, %v2102
        %v2105 = vrot.slane %v1802, 7
        %v2106 = vsel %vm930, %v2105, %v1801
        %v2107 = vrot.slane %v1803, 6
        %v2108 = vsel %vm933, %v2107, %v2106
        %v2109 = vrot.slane %v1804, 5
        %v2110 = vsel %vm936, %v2109, %v2108
        %v2111 = vrot.slane %v1805, 4
        %v2112 = vsel %vm939, %v2111, %v2110
        %v2113 = vrot.slane %v1806, 3
        %v2114 = vsel %vm942, %v2113, %v2112
        %v2115 = vrot.slane %v1807, 2
        %v2116 = vsel %vm945, %v2115, %v2114
        %v2117 = vrot.slane %v1808, 1
        %v2118 = vsel %vm948, %v2117, %v2116
        %v2119 = vrot.slane %v1810, 7
        %v2120 = vsel %vm930, %v2119, %v1809
        %v2121 = vrot.slane %v1811, 6
        %v2122 = vsel %vm933, %v2121, %v2120
        %v2123 = vrot.slane %v1812, 5
        %v2124 = vsel %vm936, %v2123, %v2122
        %v2125 = vrot.slane %v1813, 4
        %v2126 = vsel %vm939, %v2125, %v2124
        %v2127 = vrot.slane %v1814, 3
        %v2128 = vsel %vm942, %v2127, %v2126
        %v2129 = vrot.slane %v1815, 2
        %v2130 = vsel %vm945, %v2129, %v2128
        %v2131 = vrot.slane %v1816, 1
        %v2132 = vsel %vm948, %v2131, %v2130
        %v2133 = vrot.slane %v1818, 7
        %v2134 = vsel %vm930, %v2133, %v1817
        %v2135 = vrot.slane %v1819, 6
        %v2136 = vsel %vm933, %v2135, %v2134
        %v2137 = vrot.slane %v1820, 5
        %v2138 = vsel %vm936, %v2137, %v2136
        %v2139 = vrot.slane %v1821, 4
        %v2140 = vsel %vm939, %v2139, %v2138
        %v2141 = vrot.slane %v1822, 3
        %v2142 = vsel %vm942, %v2141, %v2140
        %v2143 = vrot.slane %v1823, 2
        %v2144 = vsel %vm945, %v2143, %v2142
        %v2145 = vrot.slane %v1824, 1
        %v2146 = vsel %vm948, %v2145, %v2144
        %v2147 = vrot.slane %v1826, 7
        %v2148 = vsel %vm930, %v2147, %v1825
        %v2149 = vrot.slane %v1827, 6
        %v2150 = vsel %vm933, %v2149, %v2148
        %v2151 = vrot.slane %v1828, 5
        %v2152 = vsel %vm936, %v2151, %v2150
        %v2153 = vrot.slane %v1829, 4
        %v2154 = vsel %vm939, %v2153, %v2152
        %v2155 = vrot.slane %v1830, 3
        %v2156 = vsel %vm942, %v2155, %v2154
        %v2157 = vrot.slane %v1831, 2
        %v2158 = vsel %vm945, %v2157, %v2156
        %v2159 = vrot.slane %v1832, 1
        %v2160 = vsel %vm948, %v2159, %v2158
        %v2161 = vrot.slane %v1834, 7
        %v2162 = vsel %vm930, %v2161, %v1833
        %v2163 = vrot.slane %v1835, 6
        %v2164 = vsel %vm933, %v2163, %v2162
        %v2165 = vrot.slane %v1836, 5
        %v2166 = vsel %vm936, %v2165, %v2164
        %v2167 = vrot.slane %v1837, 4
        %v2168 = vsel %vm939, %v2167, %v2166
        %v2169 = vrot.slane %v1838, 3
        %v2170 = vsel %vm942, %v2169, %v2168
        %v2171 = vrot.slane %v1839, 2
        %v2172 = vsel %vm945, %v2171, %v2170
        %v2173 = vrot.slane %v1840, 1
        %v2174 = vsel %vm948, %v2173, %v2172
        %v2175 = vrot.slane %v1842, 7
        %v2176 = vsel %vm930, %v2175, %v1841
        %v2177 = vrot.slane %v1843, 6
        %v2178 = vsel %vm933, %v2177, %v2176
        %v2179 = vrot.slane %v1844, 5
        %v2180 = vsel %vm936, %v2179, %v2178
        %v2181 = vrot.slane %v1845, 4
        %v2182 = vsel %vm939, %v2181, %v2180
        %v2183 = vrot.slane %v1846, 3
        %v2184 = vsel %vm942, %v2183, %v2182
        %v2185 = vrot.slane %v1847, 2
        %v2186 = vsel %vm945, %v2185, %v2184
        %v2187 = vrot.slane %v1848, 1
        %v2188 = vsel %vm948, %v2187, %v2186
        %v2189 = vrot.slane %v1850, 7
        %v2190 = vsel %vm930, %v2189, %v1849
        %v2191 = vrot.slane %v1851, 6
        %v2192 = vsel %vm933, %v2191, %v2190
        %v2193 = vrot.slane %v1852, 5
        %v2194 = vsel %vm936, %v2193, %v2192
        %v2195 = vrot.slane %v1853, 4
        %v2196 = vsel %vm939, %v2195, %v2194
        %v2197 = vrot.slane %v1854, 3
        %v2198 = vsel %vm942, %v2197, %v2196
        %v2199 = vrot.slane %v1855, 2
        %v2200 = vsel %vm945, %v2199, %v2198
        %v2201 = vrot.slane %v1856, 1
        %v2202 = vsel %vm948, %v2201, %v2200
        %v2203 = vrot.slane %v1858, 7
        %v2204 = vsel %vm930, %v2203, %v1857
        %v2205 = vrot.slane %v1859, 6
        %v2206 = vsel %vm933, %v2205, %v2204
        %v2207 = vrot.slane %v1860, 5
        %v2208 = vsel %vm936, %v2207, %v2206
        %v2209 = vrot.slane %v1861, 4
        %v2210 = vsel %vm939, %v2209, %v2208
        %v2211 = vrot.slane %v1862, 3
        %v2212 = vsel %vm942, %v2211, %v2210
        %v2213 = vrot.slane %v1863, 2
        %v2214 = vsel %vm945, %v2213, %v2212
        %v2215 = vrot.slane %v1864, 1
        %v2216 = vsel %vm948, %v2215, %v2214
        %2217 = vrot.lane.b32.xlu0 %v2006, 16
        %v2218 = vpop.permute.xlu0 %2217
        %2219 = vrot.lane.b32.xlu0 %v2020, 16
        %v2220 = vpop.permute.xlu0 %2219
        %2221 = vrot.lane.b32.xlu0 %v2034, 16
        %v2222 = vpop.permute.xlu0 %2221
        %2223 = vrot.lane.b32.xlu0 %v2048, 16
        %v2224 = vpop.permute.xlu0 %2223
        %2225 = vrot.lane.b32.xlu0 %v2062, 16
        %v2226 = vpop.permute.xlu0 %2225
        %2227 = vrot.lane.b32.xlu0 %v2076, 16
        %v2228 = vpop.permute.xlu0 %2227
        %2229 = vrot.lane.b32.xlu0 %v2090, 16
        %v2230 = vpop.permute.xlu0 %2229
        %2231 = vrot.lane.b32.xlu0 %v2104, 16
        %v2232 = vpop.permute.xlu0 %2231
        %2233 = vrot.lane.b32.xlu0 %v2118, 16
        %v2234 = vpop.permute.xlu0 %2233
        %2235 = vrot.lane.b32.xlu0 %v2132, 16
        %v2236 = vpop.permute.xlu0 %2235
        %2237 = vrot.lane.b32.xlu0 %v2146, 16
        %v2238 = vpop.permute.xlu0 %2237
        %2239 = vrot.lane.b32.xlu0 %v2160, 16
        %v2240 = vpop.permute.xlu0 %2239
        %2241 = vrot.lane.b32.xlu0 %v2174, 16
        %v2242 = vpop.permute.xlu0 %2241
        %2243 = vrot.lane.b32.xlu0 %v2188, 16
        %v2244 = vpop.permute.xlu0 %2243
        %2245 = vrot.lane.b32.xlu0 %v2202, 16
        %v2246 = vpop.permute.xlu0 %2245
        %2247 = vrot.lane.b32.xlu0 %v2216, 16
        %v2248 = vpop.permute.xlu0 %2247
        %vm2265 = vcmask 195712
        %2266 = vst.msk [vmem:[#allocation3] sm:$0xff] %vm2265, %v2218
        %2267 = vst.msk [vmem:[#allocation3 + $0x8] sm:$0xff] %vm2265, %v2220
        %2268 = vst.msk [vmem:[#allocation3 + $0x10] sm:$0xff] %vm2265, %v2222
        %2269 = vst.msk [vmem:[#allocation3 + $0x18] sm:$0xff] %vm2265, %v2224
        %2270 = vst.msk [vmem:[#allocation3 + $0x20] sm:$0xff] %vm2265, %v2226
        %2271 = vst.msk [vmem:[#allocation3 + $0x28] sm:$0xff] %vm2265, %v2228
        %2272 = vst.msk [vmem:[#allocation3 + $0x30] sm:$0xff] %vm2265, %v2230
        %2273 = vst.msk [vmem:[#allocation3 + $0x38] sm:$0xff] %vm2265, %v2232
        %2274 = vst.msk [vmem:[#allocation3 + $0x40] sm:$0xff] %vm2265, %v2234
        %2275 = vst.msk [vmem:[#allocation3 + $0x48] sm:$0xff] %vm2265, %v2236
        %2276 = vst.msk [vmem:[#allocation3 + $0x50] sm:$0xff] %vm2265, %v2238
        %2277 = vst.msk [vmem:[#allocation3 + $0x58] sm:$0xff] %vm2265, %v2240
        %2278 = vst.msk [vmem:[#allocation3 + $0x60] sm:$0xff] %vm2265, %v2242
        %2279 = vst.msk [vmem:[#allocation3 + $0x68] sm:$0xff] %vm2265, %v2244
        %2280 = vst.msk [vmem:[#allocation3 + $0x70] sm:$0xff] %vm2265, %v2246
        %2281 = vst.msk [vmem:[#allocation3 + $0x78] sm:$0xff] %vm2265, %v2248
        %v2282 = vld [vmem:[#allocation2 + $0x3] sm:$0x1]
        %v2283 = vld [vmem:[#allocation2 + $0xb] sm:$0x1]
        %v2284 = vld [vmem:[#allocation2 + $0x13] sm:$0x1]
        %v2285 = vld [vmem:[#allocation2 + $0x1b] sm:$0x1]
        %v2286 = vld [vmem:[#allocation2 + $0x23] sm:$0x1]
        %v2287 = vld [vmem:[#allocation2 + $0x2b] sm:$0x1]
        %v2288 = vld [vmem:[#allocation2 + $0x33] sm:$0x1]
        %v2289 = vld [vmem:[#allocation2 + $0x3b] sm:$0x1]
        %v2290 = vld [vmem:[#allocation2 + $0x43] sm:$0x1]
        %v2291 = vld [vmem:[#allocation2 + $0x4b] sm:$0x1]
        %v2292 = vld [vmem:[#allocation2 + $0x53] sm:$0x1]
        %v2293 = vld [vmem:[#allocation2 + $0x5b] sm:$0x1]
        %v2294 = vld [vmem:[#allocation2 + $0x63] sm:$0x1]
        %v2295 = vld [vmem:[#allocation2 + $0x6b] sm:$0x1]
        %v2296 = vld [vmem:[#allocation2 + $0x73] sm:$0x1]
        %v2297 = vld [vmem:[#allocation2 + $0x7b] sm:$0x1]
        %v2298 = vld [vmem:[#allocation2 + $0x83] sm:$0x1]
        %v2299 = vld [vmem:[#allocation2 + $0x8b] sm:$0x1]
        %v2300 = vld [vmem:[#allocation2 + $0x93] sm:$0x1]
        %v2301 = vld [vmem:[#allocation2 + $0x9b] sm:$0x1]
        %v2302 = vld [vmem:[#allocation2 + $0xa3] sm:$0x1]
        %v2303 = vld [vmem:[#allocation2 + $0xab] sm:$0x1]
        %v2304 = vld [vmem:[#allocation2 + $0xb3] sm:$0x1]
        %v2305 = vld [vmem:[#allocation2 + $0xbb] sm:$0x1]
        %v2306 = vld [vmem:[#allocation2 + $0xc3] sm:$0x1]
        %v2307 = vld [vmem:[#allocation2 + $0xcb] sm:$0x1]
        %v2308 = vld [vmem:[#allocation2 + $0xd3] sm:$0x1]
        %v2309 = vld [vmem:[#allocation2 + $0xdb] sm:$0x1]
        %v2310 = vld [vmem:[#allocation2 + $0xe3] sm:$0x1]
        %v2311 = vld [vmem:[#allocation2 + $0xeb] sm:$0x1]
        %v2312 = vld [vmem:[#allocation2 + $0xf3] sm:$0x1]
        %v2313 = vld [vmem:[#allocation2 + $0xfb] sm:$0x1]
        %v2314 = vld [vmem:[#allocation2 + $0x103] sm:$0x1]
        %v2315 = vld [vmem:[#allocation2 + $0x10b] sm:$0x1]
        %v2316 = vld [vmem:[#allocation2 + $0x113] sm:$0x1]
        %v2317 = vld [vmem:[#allocation2 + $0x11b] sm:$0x1]
        %v2318 = vld [vmem:[#allocation2 + $0x123] sm:$0x1]
        %v2319 = vld [vmem:[#allocation2 + $0x12b] sm:$0x1]
        %v2320 = vld [vmem:[#allocation2 + $0x133] sm:$0x1]
        %v2321 = vld [vmem:[#allocation2 + $0x13b] sm:$0x1]
        %v2322 = vld [vmem:[#allocation2 + $0x143] sm:$0x1]
        %v2323 = vld [vmem:[#allocation2 + $0x14b] sm:$0x1]
        %v2324 = vld [vmem:[#allocation2 + $0x153] sm:$0x1]
        %v2325 = vld [vmem:[#allocation2 + $0x15b] sm:$0x1]
        %v2326 = vld [vmem:[#allocation2 + $0x163] sm:$0x1]
        %v2327 = vld [vmem:[#allocation2 + $0x16b] sm:$0x1]
        %v2328 = vld [vmem:[#allocation2 + $0x173] sm:$0x1]
        %v2329 = vld [vmem:[#allocation2 + $0x17b] sm:$0x1]
        %v2330 = vld [vmem:[#allocation2 + $0x183] sm:$0x1]
        %v2331 = vld [vmem:[#allocation2 + $0x18b] sm:$0x1]
        %v2332 = vld [vmem:[#allocation2 + $0x193] sm:$0x1]
        %v2333 = vld [vmem:[#allocation2 + $0x19b] sm:$0x1]
        %v2334 = vld [vmem:[#allocation2 + $0x1a3] sm:$0x1]
        %v2335 = vld [vmem:[#allocation2 + $0x1ab] sm:$0x1]
        %v2336 = vld [vmem:[#allocation2 + $0x1b3] sm:$0x1]
        %v2337 = vld [vmem:[#allocation2 + $0x1bb] sm:$0x1]
        %v2338 = vld [vmem:[#allocation2 + $0x1c3] sm:$0x1]
        %v2339 = vld [vmem:[#allocation2 + $0x1cb] sm:$0x1]
        %v2340 = vld [vmem:[#allocation2 + $0x1d3] sm:$0x1]
        %v2341 = vld [vmem:[#allocation2 + $0x1db] sm:$0x1]
        %v2342 = vld [vmem:[#allocation2 + $0x1e3] sm:$0x1]
        %v2343 = vld [vmem:[#allocation2 + $0x1eb] sm:$0x1]
        %v2344 = vld [vmem:[#allocation2 + $0x1f3] sm:$0x1]
        %v2345 = vld [vmem:[#allocation2 + $0x1fb] sm:$0x1]
        %v2346 = vld [vmem:[#allocation2 + $0x203] sm:$0x1]
        %v2347 = vld [vmem:[#allocation2 + $0x20b] sm:$0x1]
        %v2348 = vld [vmem:[#allocation2 + $0x213] sm:$0x1]
        %v2349 = vld [vmem:[#allocation2 + $0x21b] sm:$0x1]
        %v2350 = vld [vmem:[#allocation2 + $0x223] sm:$0x1]
        %v2351 = vld [vmem:[#allocation2 + $0x22b] sm:$0x1]
        %v2352 = vld [vmem:[#allocation2 + $0x233] sm:$0x1]
        %v2353 = vld [vmem:[#allocation2 + $0x23b] sm:$0x1]
        %v2354 = vld [vmem:[#allocation2 + $0x243] sm:$0x1]
        %v2355 = vld [vmem:[#allocation2 + $0x24b] sm:$0x1]
        %v2356 = vld [vmem:[#allocation2 + $0x253] sm:$0x1]
        %v2357 = vld [vmem:[#allocation2 + $0x25b] sm:$0x1]
        %v2358 = vld [vmem:[#allocation2 + $0x263] sm:$0x1]
        %v2359 = vld [vmem:[#allocation2 + $0x26b] sm:$0x1]
        %v2360 = vld [vmem:[#allocation2 + $0x273] sm:$0x1]
        %v2361 = vld [vmem:[#allocation2 + $0x27b] sm:$0x1]
        %v2362 = vld [vmem:[#allocation2 + $0x283] sm:$0x1]
        %v2363 = vld [vmem:[#allocation2 + $0x28b] sm:$0x1]
        %v2364 = vld [vmem:[#allocation2 + $0x293] sm:$0x1]
        %v2365 = vld [vmem:[#allocation2 + $0x29b] sm:$0x1]
        %v2366 = vld [vmem:[#allocation2 + $0x2a3] sm:$0x1]
        %v2367 = vld [vmem:[#allocation2 + $0x2ab] sm:$0x1]
        %v2368 = vld [vmem:[#allocation2 + $0x2b3] sm:$0x1]
        %v2369 = vld [vmem:[#allocation2 + $0x2bb] sm:$0x1]
        %v2370 = vld [vmem:[#allocation2 + $0x2c3] sm:$0x1]
        %v2371 = vld [vmem:[#allocation2 + $0x2cb] sm:$0x1]
        %v2372 = vld [vmem:[#allocation2 + $0x2d3] sm:$0x1]
        %v2373 = vld [vmem:[#allocation2 + $0x2db] sm:$0x1]
        %v2374 = vld [vmem:[#allocation2 + $0x2e3] sm:$0x1]
        %v2375 = vld [vmem:[#allocation2 + $0x2eb] sm:$0x1]
        %v2376 = vld [vmem:[#allocation2 + $0x2f3] sm:$0x1]
        %v2377 = vld [vmem:[#allocation2 + $0x2fb] sm:$0x1]
        %v2378 = vld [vmem:[#allocation2 + $0x303] sm:$0x1]
        %v2379 = vld [vmem:[#allocation2 + $0x30b] sm:$0x1]
        %v2380 = vld [vmem:[#allocation2 + $0x313] sm:$0x1]
        %v2381 = vld [vmem:[#allocation2 + $0x31b] sm:$0x1]
        %v2382 = vld [vmem:[#allocation2 + $0x323] sm:$0x1]
        %v2383 = vld [vmem:[#allocation2 + $0x32b] sm:$0x1]
        %v2384 = vld [vmem:[#allocation2 + $0x333] sm:$0x1]
        %v2385 = vld [vmem:[#allocation2 + $0x33b] sm:$0x1]
        %v2386 = vld [vmem:[#allocation2 + $0x343] sm:$0x1]
        %v2387 = vld [vmem:[#allocation2 + $0x34b] sm:$0x1]
        %v2388 = vld [vmem:[#allocation2 + $0x353] sm:$0x1]
        %v2389 = vld [vmem:[#allocation2 + $0x35b] sm:$0x1]
        %v2390 = vld [vmem:[#allocation2 + $0x363] sm:$0x1]
        %v2391 = vld [vmem:[#allocation2 + $0x36b] sm:$0x1]
        %v2392 = vld [vmem:[#allocation2 + $0x373] sm:$0x1]
        %v2393 = vld [vmem:[#allocation2 + $0x37b] sm:$0x1]
        %v2394 = vld [vmem:[#allocation2 + $0x383] sm:$0x1]
        %v2395 = vld [vmem:[#allocation2 + $0x38b] sm:$0x1]
        %v2396 = vld [vmem:[#allocation2 + $0x393] sm:$0x1]
        %v2397 = vld [vmem:[#allocation2 + $0x39b] sm:$0x1]
        %v2398 = vld [vmem:[#allocation2 + $0x3a3] sm:$0x1]
        %v2399 = vld [vmem:[#allocation2 + $0x3ab] sm:$0x1]
        %v2400 = vld [vmem:[#allocation2 + $0x3b3] sm:$0x1]
        %v2401 = vld [vmem:[#allocation2 + $0x3bb] sm:$0x1]
        %v2402 = vld [vmem:[#allocation2 + $0x3c3] sm:$0x1]
        %v2403 = vld [vmem:[#allocation2 + $0x3cb] sm:$0x1]
        %v2404 = vld [vmem:[#allocation2 + $0x3d3] sm:$0x1]
        %v2405 = vld [vmem:[#allocation2 + $0x3db] sm:$0x1]
        %v2406 = vld [vmem:[#allocation2 + $0x3e3] sm:$0x1]
        %v2407 = vld [vmem:[#allocation2 + $0x3eb] sm:$0x1]
        %v2408 = vld [vmem:[#allocation2 + $0x3f3] sm:$0x1]
        %v2409 = vld [vmem:[#allocation2 + $0x3fb] sm:$0x1]
        %v2538 = vrot.slane %v2283, 7
        %v2539 = vsel %vm930, %v2538, %v2282
        %v2540 = vrot.slane %v2284, 6
        %v2541 = vsel %vm933, %v2540, %v2539
        %v2542 = vrot.slane %v2285, 5
        %v2543 = vsel %vm936, %v2542, %v2541
        %v2544 = vrot.slane %v2286, 4
        %v2545 = vsel %vm939, %v2544, %v2543
        %v2546 = vrot.slane %v2287, 3
        %v2547 = vsel %vm942, %v2546, %v2545
        %v2548 = vrot.slane %v2288, 2
        %v2549 = vsel %vm945, %v2548, %v2547
        %v2550 = vrot.slane %v2289, 1
        %v2551 = vsel %vm948, %v2550, %v2549
        %v2552 = vrot.slane %v2291, 7
        %v2553 = vsel %vm930, %v2552, %v2290
        %v2554 = vrot.slane %v2292, 6
        %v2555 = vsel %vm933, %v2554, %v2553
        %v2556 = vrot.slane %v2293, 5
        %v2557 = vsel %vm936, %v2556, %v2555
        %v2558 = vrot.slane %v2294, 4
        %v2559 = vsel %vm939, %v2558, %v2557
        %v2560 = vrot.slane %v2295, 3
        %v2561 = vsel %vm942, %v2560, %v2559
        %v2562 = vrot.slane %v2296, 2
        %v2563 = vsel %vm945, %v2562, %v2561
        %v2564 = vrot.slane %v2297, 1
        %v2565 = vsel %vm948, %v2564, %v2563
        %v2566 = vrot.slane %v2299, 7
        %v2567 = vsel %vm930, %v2566, %v2298
        %v2568 = vrot.slane %v2300, 6
        %v2569 = vsel %vm933, %v2568, %v2567
        %v2570 = vrot.slane %v2301, 5
        %v2571 = vsel %vm936, %v2570, %v2569
        %v2572 = vrot.slane %v2302, 4
        %v2573 = vsel %vm939, %v2572, %v2571
        %v2574 = vrot.slane %v2303, 3
        %v2575 = vsel %vm942, %v2574, %v2573
        %v2576 = vrot.slane %v2304, 2
        %v2577 = vsel %vm945, %v2576, %v2575
        %v2578 = vrot.slane %v2305, 1
        %v2579 = vsel %vm948, %v2578, %v2577
        %v2580 = vrot.slane %v2307, 7
        %v2581 = vsel %vm930, %v2580, %v2306
        %v2582 = vrot.slane %v2308, 6
        %v2583 = vsel %vm933, %v2582, %v2581
        %v2584 = vrot.slane %v2309, 5
        %v2585 = vsel %vm936, %v2584, %v2583
        %v2586 = vrot.slane %v2310, 4
        %v2587 = vsel %vm939, %v2586, %v2585
        %v2588 = vrot.slane %v2311, 3
        %v2589 = vsel %vm942, %v2588, %v2587
        %v2590 = vrot.slane %v2312, 2
        %v2591 = vsel %vm945, %v2590, %v2589
        %v2592 = vrot.slane %v2313, 1
        %v2593 = vsel %vm948, %v2592, %v2591
        %v2594 = vrot.slane %v2315, 7
        %v2595 = vsel %vm930, %v2594, %v2314
        %v2596 = vrot.slane %v2316, 6
        %v2597 = vsel %vm933, %v2596, %v2595
        %v2598 = vrot.slane %v2317, 5
        %v2599 = vsel %vm936, %v2598, %v2597
        %v2600 = vrot.slane %v2318, 4
        %v2601 = vsel %vm939, %v2600, %v2599
        %v2602 = vrot.slane %v2319, 3
        %v2603 = vsel %vm942, %v2602, %v2601
        %v2604 = vrot.slane %v2320, 2
        %v2605 = vsel %vm945, %v2604, %v2603
        %v2606 = vrot.slane %v2321, 1
        %v2607 = vsel %vm948, %v2606, %v2605
        %v2608 = vrot.slane %v2323, 7
        %v2609 = vsel %vm930, %v2608, %v2322
        %v2610 = vrot.slane %v2324, 6
        %v2611 = vsel %vm933, %v2610, %v2609
        %v2612 = vrot.slane %v2325, 5
        %v2613 = vsel %vm936, %v2612, %v2611
        %v2614 = vrot.slane %v2326, 4
        %v2615 = vsel %vm939, %v2614, %v2613
        %v2616 = vrot.slane %v2327, 3
        %v2617 = vsel %vm942, %v2616, %v2615
        %v2618 = vrot.slane %v2328, 2
        %v2619 = vsel %vm945, %v2618, %v2617
        %v2620 = vrot.slane %v2329, 1
        %v2621 = vsel %vm948, %v2620, %v2619
        %v2622 = vrot.slane %v2331, 7
        %v2623 = vsel %vm930, %v2622, %v2330
        %v2624 = vrot.slane %v2332, 6
        %v2625 = vsel %vm933, %v2624, %v2623
        %v2626 = vrot.slane %v2333, 5
        %v2627 = vsel %vm936, %v2626, %v2625
        %v2628 = vrot.slane %v2334, 4
        %v2629 = vsel %vm939, %v2628, %v2627
        %v2630 = vrot.slane %v2335, 3
        %v2631 = vsel %vm942, %v2630, %v2629
        %v2632 = vrot.slane %v2336, 2
        %v2633 = vsel %vm945, %v2632, %v2631
        %v2634 = vrot.slane %v2337, 1
        %v2635 = vsel %vm948, %v2634, %v2633
        %v2636 = vrot.slane %v2339, 7
        %v2637 = vsel %vm930, %v2636, %v2338
        %v2638 = vrot.slane %v2340, 6
        %v2639 = vsel %vm933, %v2638, %v2637
        %v2640 = vrot.slane %v2341, 5
        %v2641 = vsel %vm936, %v2640, %v2639
        %v2642 = vrot.slane %v2342, 4
        %v2643 = vsel %vm939, %v2642, %v2641
        %v2644 = vrot.slane %v2343, 3
        %v2645 = vsel %vm942, %v2644, %v2643
        %v2646 = vrot.slane %v2344, 2
        %v2647 = vsel %vm945, %v2646, %v2645
        %v2648 = vrot.slane %v2345, 1
        %v2649 = vsel %vm948, %v2648, %v2647
        %v2650 = vrot.slane %v2347, 7
        %v2651 = vsel %vm930, %v2650, %v2346
        %v2652 = vrot.slane %v2348, 6
        %v2653 = vsel %vm933, %v2652, %v2651
        %v2654 = vrot.slane %v2349, 5
        %v2655 = vsel %vm936, %v2654, %v2653
        %v2656 = vrot.slane %v2350, 4
        %v2657 = vsel %vm939, %v2656, %v2655
        %v2658 = vrot.slane %v2351, 3
        %v2659 = vsel %vm942, %v2658, %v2657
        %v2660 = vrot.slane %v2352, 2
        %v2661 = vsel %vm945, %v2660, %v2659
        %v2662 = vrot.slane %v2353, 1
        %v2663 = vsel %vm948, %v2662, %v2661
        %v2664 = vrot.slane %v2355, 7
        %v2665 = vsel %vm930, %v2664, %v2354
        %v2666 = vrot.slane %v2356, 6
        %v2667 = vsel %vm933, %v2666, %v2665
        %v2668 = vrot.slane %v2357, 5
        %v2669 = vsel %vm936, %v2668, %v2667
        %v2670 = vrot.slane %v2358, 4
        %v2671 = vsel %vm939, %v2670, %v2669
        %v2672 = vrot.slane %v2359, 3
        %v2673 = vsel %vm942, %v2672, %v2671
        %v2674 = vrot.slane %v2360, 2
        %v2675 = vsel %vm945, %v2674, %v2673
        %v2676 = vrot.slane %v2361, 1
        %v2677 = vsel %vm948, %v2676, %v2675
        %v2678 = vrot.slane %v2363, 7
        %v2679 = vsel %vm930, %v2678, %v2362
        %v2680 = vrot.slane %v2364, 6
        %v2681 = vsel %vm933, %v2680, %v2679
        %v2682 = vrot.slane %v2365, 5
        %v2683 = vsel %vm936, %v2682, %v2681
        %v2684 = vrot.slane %v2366, 4
        %v2685 = vsel %vm939, %v2684, %v2683
        %v2686 = vrot.slane %v2367, 3
        %v2687 = vsel %vm942, %v2686, %v2685
        %v2688 = vrot.slane %v2368, 2
        %v2689 = vsel %vm945, %v2688, %v2687
        %v2690 = vrot.slane %v2369, 1
        %v2691 = vsel %vm948, %v2690, %v2689
        %v2692 = vrot.slane %v2371, 7
        %v2693 = vsel %vm930, %v2692, %v2370
        %v2694 = vrot.slane %v2372, 6
        %v2695 = vsel %vm933, %v2694, %v2693
        %v2696 = vrot.slane %v2373, 5
        %v2697 = vsel %vm936, %v2696, %v2695
        %v2698 = vrot.slane %v2374, 4
        %v2699 = vsel %vm939, %v2698, %v2697
        %v2700 = vrot.slane %v2375, 3
        %v2701 = vsel %vm942, %v2700, %v2699
        %v2702 = vrot.slane %v2376, 2
        %v2703 = vsel %vm945, %v2702, %v2701
        %v2704 = vrot.slane %v2377, 1
        %v2705 = vsel %vm948, %v2704, %v2703
        %v2706 = vrot.slane %v2379, 7
        %v2707 = vsel %vm930, %v2706, %v2378
        %v2708 = vrot.slane %v2380, 6
        %v2709 = vsel %vm933, %v2708, %v2707
        %v2710 = vrot.slane %v2381, 5
        %v2711 = vsel %vm936, %v2710, %v2709
        %v2712 = vrot.slane %v2382, 4
        %v2713 = vsel %vm939, %v2712, %v2711
        %v2714 = vrot.slane %v2383, 3
        %v2715 = vsel %vm942, %v2714, %v2713
        %v2716 = vrot.slane %v2384, 2
        %v2717 = vsel %vm945, %v2716, %v2715
        %v2718 = vrot.slane %v2385, 1
        %v2719 = vsel %vm948, %v2718, %v2717
        %v2720 = vrot.slane %v2387, 7
        %v2721 = vsel %vm930, %v2720, %v2386
        %v2722 = vrot.slane %v2388, 6
        %v2723 = vsel %vm933, %v2722, %v2721
        %v2724 = vrot.slane %v2389, 5
        %v2725 = vsel %vm936, %v2724, %v2723
        %v2726 = vrot.slane %v2390, 4
        %v2727 = vsel %vm939, %v2726, %v2725
        %v2728 = vrot.slane %v2391, 3
        %v2729 = vsel %vm942, %v2728, %v2727
        %v2730 = vrot.slane %v2392, 2
        %v2731 = vsel %vm945, %v2730, %v2729
        %v2732 = vrot.slane %v2393, 1
        %v2733 = vsel %vm948, %v2732, %v2731
        %v2734 = vrot.slane %v2395, 7
        %v2735 = vsel %vm930, %v2734, %v2394
        %v2736 = vrot.slane %v2396, 6
        %v2737 = vsel %vm933, %v2736, %v2735
        %v2738 = vrot.slane %v2397, 5
        %v2739 = vsel %vm936, %v2738, %v2737
        %v2740 = vrot.slane %v2398, 4
        %v2741 = vsel %vm939, %v2740, %v2739
        %v2742 = vrot.slane %v2399, 3
        %v2743 = vsel %vm942, %v2742, %v2741
        %v2744 = vrot.slane %v2400, 2
        %v2745 = vsel %vm945, %v2744, %v2743
        %v2746 = vrot.slane %v2401, 1
        %v2747 = vsel %vm948, %v2746, %v2745
        %v2748 = vrot.slane %v2403, 7
        %v2749 = vsel %vm930, %v2748, %v2402
        %v2750 = vrot.slane %v2404, 6
        %v2751 = vsel %vm933, %v2750, %v2749
        %v2752 = vrot.slane %v2405, 5
        %v2753 = vsel %vm936, %v2752, %v2751
        %v2754 = vrot.slane %v2406, 4
        %v2755 = vsel %vm939, %v2754, %v2753
        %v2756 = vrot.slane %v2407, 3
        %v2757 = vsel %vm942, %v2756, %v2755
        %v2758 = vrot.slane %v2408, 2
        %v2759 = vsel %vm945, %v2758, %v2757
        %v2760 = vrot.slane %v2409, 1
        %v2761 = vsel %vm948, %v2760, %v2759
        %2762 = vrot.lane.b32.xlu0 %v2551, 24
        %v2763 = vpop.permute.xlu0 %2762
        %2764 = vrot.lane.b32.xlu0 %v2565, 24
        %v2765 = vpop.permute.xlu0 %2764
        %2766 = vrot.lane.b32.xlu0 %v2579, 24
        %v2767 = vpop.permute.xlu0 %2766
        %2768 = vrot.lane.b32.xlu0 %v2593, 24
        %v2769 = vpop.permute.xlu0 %2768
        %2770 = vrot.lane.b32.xlu0 %v2607, 24
        %v2771 = vpop.permute.xlu0 %2770
        %2772 = vrot.lane.b32.xlu0 %v2621, 24
        %v2773 = vpop.permute.xlu0 %2772
        %2774 = vrot.lane.b32.xlu0 %v2635, 24
        %v2775 = vpop.permute.xlu0 %2774
        %2776 = vrot.lane.b32.xlu0 %v2649, 24
        %v2777 = vpop.permute.xlu0 %2776
        %2778 = vrot.lane.b32.xlu0 %v2663, 24
        %v2779 = vpop.permute.xlu0 %2778
        %2780 = vrot.lane.b32.xlu0 %v2677, 24
        %v2781 = vpop.permute.xlu0 %2780
        %2782 = vrot.lane.b32.xlu0 %v2691, 24
        %v2783 = vpop.permute.xlu0 %2782
        %2784 = vrot.lane.b32.xlu0 %v2705, 24
        %v2785 = vpop.permute.xlu0 %2784
        %2786 = vrot.lane.b32.xlu0 %v2719, 24
        %v2787 = vpop.permute.xlu0 %2786
        %2788 = vrot.lane.b32.xlu0 %v2733, 24
        %v2789 = vpop.permute.xlu0 %2788
        %2790 = vrot.lane.b32.xlu0 %v2747, 24
        %v2791 = vpop.permute.xlu0 %2790
        %2792 = vrot.lane.b32.xlu0 %v2761, 24
        %v2793 = vpop.permute.xlu0 %2792
        %vm2810 = vcmask 261312
        %2811 = vst.msk [vmem:[#allocation3] sm:$0xff] %vm2810, %v2763
        %2812 = vst.msk [vmem:[#allocation3 + $0x8] sm:$0xff] %vm2810, %v2765
        %2813 = vst.msk [vmem:[#allocation3 + $0x10] sm:$0xff] %vm2810, %v2767
        %2814 = vst.msk [vmem:[#allocation3 + $0x18] sm:$0xff] %vm2810, %v2769
        %2815 = vst.msk [vmem:[#allocation3 + $0x20] sm:$0xff] %vm2810, %v2771
        %2816 = vst.msk [vmem:[#allocation3 + $0x28] sm:$0xff] %vm2810, %v2773
        %2817 = vst.msk [vmem:[#allocation3 + $0x30] sm:$0xff] %vm2810, %v2775
        %2818 = vst.msk [vmem:[#allocation3 + $0x38] sm:$0xff] %vm2810, %v2777
        %2819 = vst.msk [vmem:[#allocation3 + $0x40] sm:$0xff] %vm2810, %v2779
        %2820 = vst.msk [vmem:[#allocation3 + $0x48] sm:$0xff] %vm2810, %v2781
        %2821 = vst.msk [vmem:[#allocation3 + $0x50] sm:$0xff] %vm2810, %v2783
        %2822 = vst.msk [vmem:[#allocation3 + $0x58] sm:$0xff] %vm2810, %v2785
        %2823 = vst.msk [vmem:[#allocation3 + $0x60] sm:$0xff] %vm2810, %v2787
        %2824 = vst.msk [vmem:[#allocation3 + $0x68] sm:$0xff] %vm2810, %v2789
        %2825 = vst.msk [vmem:[#allocation3 + $0x70] sm:$0xff] %vm2810, %v2791
        %2826 = vst.msk [vmem:[#allocation3 + $0x78] sm:$0xff] %vm2810, %v2793
        %v2827 = vld [vmem:[#allocation2 + $0x4] sm:$0x1]
        %v2828 = vld [vmem:[#allocation2 + $0xc] sm:$0x1]
        %v2829 = vld [vmem:[#allocation2 + $0x14] sm:$0x1]
        %v2830 = vld [vmem:[#allocation2 + $0x1c] sm:$0x1]
        %v2831 = vld [vmem:[#allocation2 + $0x24] sm:$0x1]
        %v2832 = vld [vmem:[#allocation2 + $0x2c] sm:$0x1]
        %v2833 = vld [vmem:[#allocation2 + $0x34] sm:$0x1]
        %v2834 = vld [vmem:[#allocation2 + $0x3c] sm:$0x1]
        %v2835 = vld [vmem:[#allocation2 + $0x44] sm:$0x1]
        %v2836 = vld [vmem:[#allocation2 + $0x4c] sm:$0x1]
        %v2837 = vld [vmem:[#allocation2 + $0x54] sm:$0x1]
        %v2838 = vld [vmem:[#allocation2 + $0x5c] sm:$0x1]
        %v2839 = vld [vmem:[#allocation2 + $0x64] sm:$0x1]
        %v2840 = vld [vmem:[#allocation2 + $0x6c] sm:$0x1]
        %v2841 = vld [vmem:[#allocation2 + $0x74] sm:$0x1]
        %v2842 = vld [vmem:[#allocation2 + $0x7c] sm:$0x1]
        %v2843 = vld [vmem:[#allocation2 + $0x84] sm:$0x1]
        %v2844 = vld [vmem:[#allocation2 + $0x8c] sm:$0x1]
        %v2845 = vld [vmem:[#allocation2 + $0x94] sm:$0x1]
        %v2846 = vld [vmem:[#allocation2 + $0x9c] sm:$0x1]
        %v2847 = vld [vmem:[#allocation2 + $0xa4] sm:$0x1]
        %v2848 = vld [vmem:[#allocation2 + $0xac] sm:$0x1]
        %v2849 = vld [vmem:[#allocation2 + $0xb4] sm:$0x1]
        %v2850 = vld [vmem:[#allocation2 + $0xbc] sm:$0x1]
        %v2851 = vld [vmem:[#allocation2 + $0xc4] sm:$0x1]
        %v2852 = vld [vmem:[#allocation2 + $0xcc] sm:$0x1]
        %v2853 = vld [vmem:[#allocation2 + $0xd4] sm:$0x1]
        %v2854 = vld [vmem:[#allocation2 + $0xdc] sm:$0x1]
        %v2855 = vld [vmem:[#allocation2 + $0xe4] sm:$0x1]
        %v2856 = vld [vmem:[#allocation2 + $0xec] sm:$0x1]
        %v2857 = vld [vmem:[#allocation2 + $0xf4] sm:$0x1]
        %v2858 = vld [vmem:[#allocation2 + $0xfc] sm:$0x1]
        %v2859 = vld [vmem:[#allocation2 + $0x104] sm:$0x1]
        %v2860 = vld [vmem:[#allocation2 + $0x10c] sm:$0x1]
        %v2861 = vld [vmem:[#allocation2 + $0x114] sm:$0x1]
        %v2862 = vld [vmem:[#allocation2 + $0x11c] sm:$0x1]
        %v2863 = vld [vmem:[#allocation2 + $0x124] sm:$0x1]
        %v2864 = vld [vmem:[#allocation2 + $0x12c] sm:$0x1]
        %v2865 = vld [vmem:[#allocation2 + $0x134] sm:$0x1]
        %v2866 = vld [vmem:[#allocation2 + $0x13c] sm:$0x1]
        %v2867 = vld [vmem:[#allocation2 + $0x144] sm:$0x1]
        %v2868 = vld [vmem:[#allocation2 + $0x14c] sm:$0x1]
        %v2869 = vld [vmem:[#allocation2 + $0x154] sm:$0x1]
        %v2870 = vld [vmem:[#allocation2 + $0x15c] sm:$0x1]
        %v2871 = vld [vmem:[#allocation2 + $0x164] sm:$0x1]
        %v2872 = vld [vmem:[#allocation2 + $0x16c] sm:$0x1]
        %v2873 = vld [vmem:[#allocation2 + $0x174] sm:$0x1]
        %v2874 = vld [vmem:[#allocation2 + $0x17c] sm:$0x1]
        %v2875 = vld [vmem:[#allocation2 + $0x184] sm:$0x1]
        %v2876 = vld [vmem:[#allocation2 + $0x18c] sm:$0x1]
        %v2877 = vld [vmem:[#allocation2 + $0x194] sm:$0x1]
        %v2878 = vld [vmem:[#allocation2 + $0x19c] sm:$0x1]
        %v2879 = vld [vmem:[#allocation2 + $0x1a4] sm:$0x1]
        %v2880 = vld [vmem:[#allocation2 + $0x1ac] sm:$0x1]
        %v2881 = vld [vmem:[#allocation2 + $0x1b4] sm:$0x1]
        %v2882 = vld [vmem:[#allocation2 + $0x1bc] sm:$0x1]
        %v2883 = vld [vmem:[#allocation2 + $0x1c4] sm:$0x1]
        %v2884 = vld [vmem:[#allocation2 + $0x1cc] sm:$0x1]
        %v2885 = vld [vmem:[#allocation2 + $0x1d4] sm:$0x1]
        %v2886 = vld [vmem:[#allocation2 + $0x1dc] sm:$0x1]
        %v2887 = vld [vmem:[#allocation2 + $0x1e4] sm:$0x1]
        %v2888 = vld [vmem:[#allocation2 + $0x1ec] sm:$0x1]
        %v2889 = vld [vmem:[#allocation2 + $0x1f4] sm:$0x1]
        %v2890 = vld [vmem:[#allocation2 + $0x1fc] sm:$0x1]
        %v2891 = vld [vmem:[#allocation2 + $0x204] sm:$0x1]
        %v2892 = vld [vmem:[#allocation2 + $0x20c] sm:$0x1]
        %v2893 = vld [vmem:[#allocation2 + $0x214] sm:$0x1]
        %v2894 = vld [vmem:[#allocation2 + $0x21c] sm:$0x1]
        %v2895 = vld [vmem:[#allocation2 + $0x224] sm:$0x1]
        %v2896 = vld [vmem:[#allocation2 + $0x22c] sm:$0x1]
        %v2897 = vld [vmem:[#allocation2 + $0x234] sm:$0x1]
        %v2898 = vld [vmem:[#allocation2 + $0x23c] sm:$0x1]
        %v2899 = vld [vmem:[#allocation2 + $0x244] sm:$0x1]
        %v2900 = vld [vmem:[#allocation2 + $0x24c] sm:$0x1]
        %v2901 = vld [vmem:[#allocation2 + $0x254] sm:$0x1]
        %v2902 = vld [vmem:[#allocation2 + $0x25c] sm:$0x1]
        %v2903 = vld [vmem:[#allocation2 + $0x264] sm:$0x1]
        %v2904 = vld [vmem:[#allocation2 + $0x26c] sm:$0x1]
        %v2905 = vld [vmem:[#allocation2 + $0x274] sm:$0x1]
        %v2906 = vld [vmem:[#allocation2 + $0x27c] sm:$0x1]
        %v2907 = vld [vmem:[#allocation2 + $0x284] sm:$0x1]
        %v2908 = vld [vmem:[#allocation2 + $0x28c] sm:$0x1]
        %v2909 = vld [vmem:[#allocation2 + $0x294] sm:$0x1]
        %v2910 = vld [vmem:[#allocation2 + $0x29c] sm:$0x1]
        %v2911 = vld [vmem:[#allocation2 + $0x2a4] sm:$0x1]
        %v2912 = vld [vmem:[#allocation2 + $0x2ac] sm:$0x1]
        %v2913 = vld [vmem:[#allocation2 + $0x2b4] sm:$0x1]
        %v2914 = vld [vmem:[#allocation2 + $0x2bc] sm:$0x1]
        %v2915 = vld [vmem:[#allocation2 + $0x2c4] sm:$0x1]
        %v2916 = vld [vmem:[#allocation2 + $0x2cc] sm:$0x1]
        %v2917 = vld [vmem:[#allocation2 + $0x2d4] sm:$0x1]
        %v2918 = vld [vmem:[#allocation2 + $0x2dc] sm:$0x1]
        %v2919 = vld [vmem:[#allocation2 + $0x2e4] sm:$0x1]
        %v2920 = vld [vmem:[#allocation2 + $0x2ec] sm:$0x1]
        %v2921 = vld [vmem:[#allocation2 + $0x2f4] sm:$0x1]
        %v2922 = vld [vmem:[#allocation2 + $0x2fc] sm:$0x1]
        %v2923 = vld [vmem:[#allocation2 + $0x304] sm:$0x1]
        %v2924 = vld [vmem:[#allocation2 + $0x30c] sm:$0x1]
        %v2925 = vld [vmem:[#allocation2 + $0x314] sm:$0x1]
        %v2926 = vld [vmem:[#allocation2 + $0x31c] sm:$0x1]
        %v2927 = vld [vmem:[#allocation2 + $0x324] sm:$0x1]
        %v2928 = vld [vmem:[#allocation2 + $0x32c] sm:$0x1]
        %v2929 = vld [vmem:[#allocation2 + $0x334] sm:$0x1]
        %v2930 = vld [vmem:[#allocation2 + $0x33c] sm:$0x1]
        %v2931 = vld [vmem:[#allocation2 + $0x344] sm:$0x1]
        %v2932 = vld [vmem:[#allocation2 + $0x34c] sm:$0x1]
        %v2933 = vld [vmem:[#allocation2 + $0x354] sm:$0x1]
        %v2934 = vld [vmem:[#allocation2 + $0x35c] sm:$0x1]
        %v2935 = vld [vmem:[#allocation2 + $0x364] sm:$0x1]
        %v2936 = vld [vmem:[#allocation2 + $0x36c] sm:$0x1]
        %v2937 = vld [vmem:[#allocation2 + $0x374] sm:$0x1]
        %v2938 = vld [vmem:[#allocation2 + $0x37c] sm:$0x1]
        %v2939 = vld [vmem:[#allocation2 + $0x384] sm:$0x1]
        %v2940 = vld [vmem:[#allocation2 + $0x38c] sm:$0x1]
        %v2941 = vld [vmem:[#allocation2 + $0x394] sm:$0x1]
        %v2942 = vld [vmem:[#allocation2 + $0x39c] sm:$0x1]
        %v2943 = vld [vmem:[#allocation2 + $0x3a4] sm:$0x1]
        %v2944 = vld [vmem:[#allocation2 + $0x3ac] sm:$0x1]
        %v2945 = vld [vmem:[#allocation2 + $0x3b4] sm:$0x1]
        %v2946 = vld [vmem:[#allocation2 + $0x3bc] sm:$0x1]
        %v2947 = vld [vmem:[#allocation2 + $0x3c4] sm:$0x1]
        %v2948 = vld [vmem:[#allocation2 + $0x3cc] sm:$0x1]
        %v2949 = vld [vmem:[#allocation2 + $0x3d4] sm:$0x1]
        %v2950 = vld [vmem:[#allocation2 + $0x3dc] sm:$0x1]
        %v2951 = vld [vmem:[#allocation2 + $0x3e4] sm:$0x1]
        %v2952 = vld [vmem:[#allocation2 + $0x3ec] sm:$0x1]
        %v2953 = vld [vmem:[#allocation2 + $0x3f4] sm:$0x1]
        %v2954 = vld [vmem:[#allocation2 + $0x3fc] sm:$0x1]
        %v3083 = vrot.slane %v2828, 7
        %v3084 = vsel %vm930, %v3083, %v2827
        %v3085 = vrot.slane %v2829, 6
        %v3086 = vsel %vm933, %v3085, %v3084
        %v3087 = vrot.slane %v2830, 5
        %v3088 = vsel %vm936, %v3087, %v3086
        %v3089 = vrot.slane %v2831, 4
        %v3090 = vsel %vm939, %v3089, %v3088
        %v3091 = vrot.slane %v2832, 3
        %v3092 = vsel %vm942, %v3091, %v3090
        %v3093 = vrot.slane %v2833, 2
        %v3094 = vsel %vm945, %v3093, %v3092
        %v3095 = vrot.slane %v2834, 1
        %v3096 = vsel %vm948, %v3095, %v3094
        %v3097 = vrot.slane %v2836, 7
        %v3098 = vsel %vm930, %v3097, %v2835
        %v3099 = vrot.slane %v2837, 6
        %v3100 = vsel %vm933, %v3099, %v3098
        %v3101 = vrot.slane %v2838, 5
        %v3102 = vsel %vm936, %v3101, %v3100
        %v3103 = vrot.slane %v2839, 4
        %v3104 = vsel %vm939, %v3103, %v3102
        %v3105 = vrot.slane %v2840, 3
        %v3106 = vsel %vm942, %v3105, %v3104
        %v3107 = vrot.slane %v2841, 2
        %v3108 = vsel %vm945, %v3107, %v3106
        %v3109 = vrot.slane %v2842, 1
        %v3110 = vsel %vm948, %v3109, %v3108
        %v3111 = vrot.slane %v2844, 7
        %v3112 = vsel %vm930, %v3111, %v2843
        %v3113 = vrot.slane %v2845, 6
        %v3114 = vsel %vm933, %v3113, %v3112
        %v3115 = vrot.slane %v2846, 5
        %v3116 = vsel %vm936, %v3115, %v3114
        %v3117 = vrot.slane %v2847, 4
        %v3118 = vsel %vm939, %v3117, %v3116
        %v3119 = vrot.slane %v2848, 3
        %v3120 = vsel %vm942, %v3119, %v3118
        %v3121 = vrot.slane %v2849, 2
        %v3122 = vsel %vm945, %v3121, %v3120
        %v3123 = vrot.slane %v2850, 1
        %v3124 = vsel %vm948, %v3123, %v3122
        %v3125 = vrot.slane %v2852, 7
        %v3126 = vsel %vm930, %v3125, %v2851
        %v3127 = vrot.slane %v2853, 6
        %v3128 = vsel %vm933, %v3127, %v3126
        %v3129 = vrot.slane %v2854, 5
        %v3130 = vsel %vm936, %v3129, %v3128
        %v3131 = vrot.slane %v2855, 4
        %v3132 = vsel %vm939, %v3131, %v3130
        %v3133 = vrot.slane %v2856, 3
        %v3134 = vsel %vm942, %v3133, %v3132
        %v3135 = vrot.slane %v2857, 2
        %v3136 = vsel %vm945, %v3135, %v3134
        %v3137 = vrot.slane %v2858, 1
        %v3138 = vsel %vm948, %v3137, %v3136
        %v3139 = vrot.slane %v2860, 7
        %v3140 = vsel %vm930, %v3139, %v2859
        %v3141 = vrot.slane %v2861, 6
        %v3142 = vsel %vm933, %v3141, %v3140
        %v3143 = vrot.slane %v2862, 5
        %v3144 = vsel %vm936, %v3143, %v3142
        %v3145 = vrot.slane %v2863, 4
        %v3146 = vsel %vm939, %v3145, %v3144
        %v3147 = vrot.slane %v2864, 3
        %v3148 = vsel %vm942, %v3147, %v3146
        %v3149 = vrot.slane %v2865, 2
        %v3150 = vsel %vm945, %v3149, %v3148
        %v3151 = vrot.slane %v2866, 1
        %v3152 = vsel %vm948, %v3151, %v3150
        %v3153 = vrot.slane %v2868, 7
        %v3154 = vsel %vm930, %v3153, %v2867
        %v3155 = vrot.slane %v2869, 6
        %v3156 = vsel %vm933, %v3155, %v3154
        %v3157 = vrot.slane %v2870, 5
        %v3158 = vsel %vm936, %v3157, %v3156
        %v3159 = vrot.slane %v2871, 4
        %v3160 = vsel %vm939, %v3159, %v3158
        %v3161 = vrot.slane %v2872, 3
        %v3162 = vsel %vm942, %v3161, %v3160
        %v3163 = vrot.slane %v2873, 2
        %v3164 = vsel %vm945, %v3163, %v3162
        %v3165 = vrot.slane %v2874, 1
        %v3166 = vsel %vm948, %v3165, %v3164
        %v3167 = vrot.slane %v2876, 7
        %v3168 = vsel %vm930, %v3167, %v2875
        %v3169 = vrot.slane %v2877, 6
        %v3170 = vsel %vm933, %v3169, %v3168
        %v3171 = vrot.slane %v2878, 5
        %v3172 = vsel %vm936, %v3171, %v3170
        %v3173 = vrot.slane %v2879, 4
        %v3174 = vsel %vm939, %v3173, %v3172
        %v3175 = vrot.slane %v2880, 3
        %v3176 = vsel %vm942, %v3175, %v3174
        %v3177 = vrot.slane %v2881, 2
        %v3178 = vsel %vm945, %v3177, %v3176
        %v3179 = vrot.slane %v2882, 1
        %v3180 = vsel %vm948, %v3179, %v3178
        %v3181 = vrot.slane %v2884, 7
        %v3182 = vsel %vm930, %v3181, %v2883
        %v3183 = vrot.slane %v2885, 6
        %v3184 = vsel %vm933, %v3183, %v3182
        %v3185 = vrot.slane %v2886, 5
        %v3186 = vsel %vm936, %v3185, %v3184
        %v3187 = vrot.slane %v2887, 4
        %v3188 = vsel %vm939, %v3187, %v3186
        %v3189 = vrot.slane %v2888, 3
        %v3190 = vsel %vm942, %v3189, %v3188
        %v3191 = vrot.slane %v2889, 2
        %v3192 = vsel %vm945, %v3191, %v3190
        %v3193 = vrot.slane %v2890, 1
        %v3194 = vsel %vm948, %v3193, %v3192
        %v3195 = vrot.slane %v2892, 7
        %v3196 = vsel %vm930, %v3195, %v2891
        %v3197 = vrot.slane %v2893, 6
        %v3198 = vsel %vm933, %v3197, %v3196
        %v3199 = vrot.slane %v2894, 5
        %v3200 = vsel %vm936, %v3199, %v3198
        %v3201 = vrot.slane %v2895, 4
        %v3202 = vsel %vm939, %v3201, %v3200
        %v3203 = vrot.slane %v2896, 3
        %v3204 = vsel %vm942, %v3203, %v3202
        %v3205 = vrot.slane %v2897, 2
        %v3206 = vsel %vm945, %v3205, %v3204
        %v3207 = vrot.slane %v2898, 1
        %v3208 = vsel %vm948, %v3207, %v3206
        %v3209 = vrot.slane %v2900, 7
        %v3210 = vsel %vm930, %v3209, %v2899
        %v3211 = vrot.slane %v2901, 6
        %v3212 = vsel %vm933, %v3211, %v3210
        %v3213 = vrot.slane %v2902, 5
        %v3214 = vsel %vm936, %v3213, %v3212
        %v3215 = vrot.slane %v2903, 4
        %v3216 = vsel %vm939, %v3215, %v3214
        %v3217 = vrot.slane %v2904, 3
        %v3218 = vsel %vm942, %v3217, %v3216
        %v3219 = vrot.slane %v2905, 2
        %v3220 = vsel %vm945, %v3219, %v3218
        %v3221 = vrot.slane %v2906, 1
        %v3222 = vsel %vm948, %v3221, %v3220
        %v3223 = vrot.slane %v2908, 7
        %v3224 = vsel %vm930, %v3223, %v2907
        %v3225 = vrot.slane %v2909, 6
        %v3226 = vsel %vm933, %v3225, %v3224
        %v3227 = vrot.slane %v2910, 5
        %v3228 = vsel %vm936, %v3227, %v3226
        %v3229 = vrot.slane %v2911, 4
        %v3230 = vsel %vm939, %v3229, %v3228
        %v3231 = vrot.slane %v2912, 3
        %v3232 = vsel %vm942, %v3231, %v3230
        %v3233 = vrot.slane %v2913, 2
        %v3234 = vsel %vm945, %v3233, %v3232
        %v3235 = vrot.slane %v2914, 1
        %v3236 = vsel %vm948, %v3235, %v3234
        %v3237 = vrot.slane %v2916, 7
        %v3238 = vsel %vm930, %v3237, %v2915
        %v3239 = vrot.slane %v2917, 6
        %v3240 = vsel %vm933, %v3239, %v3238
        %v3241 = vrot.slane %v2918, 5
        %v3242 = vsel %vm936, %v3241, %v3240
        %v3243 = vrot.slane %v2919, 4
        %v3244 = vsel %vm939, %v3243, %v3242
        %v3245 = vrot.slane %v2920, 3
        %v3246 = vsel %vm942, %v3245, %v3244
        %v3247 = vrot.slane %v2921, 2
        %v3248 = vsel %vm945, %v3247, %v3246
        %v3249 = vrot.slane %v2922, 1
        %v3250 = vsel %vm948, %v3249, %v3248
        %v3251 = vrot.slane %v2924, 7
        %v3252 = vsel %vm930, %v3251, %v2923
        %v3253 = vrot.slane %v2925, 6
        %v3254 = vsel %vm933, %v3253, %v3252
        %v3255 = vrot.slane %v2926, 5
        %v3256 = vsel %vm936, %v3255, %v3254
        %v3257 = vrot.slane %v2927, 4
        %v3258 = vsel %vm939, %v3257, %v3256
        %v3259 = vrot.slane %v2928, 3
        %v3260 = vsel %vm942, %v3259, %v3258
        %v3261 = vrot.slane %v2929, 2
        %v3262 = vsel %vm945, %v3261, %v3260
        %v3263 = vrot.slane %v2930, 1
        %v3264 = vsel %vm948, %v3263, %v3262
        %v3265 = vrot.slane %v2932, 7
        %v3266 = vsel %vm930, %v3265, %v2931
        %v3267 = vrot.slane %v2933, 6
        %v3268 = vsel %vm933, %v3267, %v3266
        %v3269 = vrot.slane %v2934, 5
        %v3270 = vsel %vm936, %v3269, %v3268
        %v3271 = vrot.slane %v2935, 4
        %v3272 = vsel %vm939, %v3271, %v3270
        %v3273 = vrot.slane %v2936, 3
        %v3274 = vsel %vm942, %v3273, %v3272
        %v3275 = vrot.slane %v2937, 2
        %v3276 = vsel %vm945, %v3275, %v3274
        %v3277 = vrot.slane %v2938, 1
        %v3278 = vsel %vm948, %v3277, %v3276
        %v3279 = vrot.slane %v2940, 7
        %v3280 = vsel %vm930, %v3279, %v2939
        %v3281 = vrot.slane %v2941, 6
        %v3282 = vsel %vm933, %v3281, %v3280
        %v3283 = vrot.slane %v2942, 5
        %v3284 = vsel %vm936, %v3283, %v3282
        %v3285 = vrot.slane %v2943, 4
        %v3286 = vsel %vm939, %v3285, %v3284
        %v3287 = vrot.slane %v2944, 3
        %v3288 = vsel %vm942, %v3287, %v3286
        %v3289 = vrot.slane %v2945, 2
        %v3290 = vsel %vm945, %v3289, %v3288
        %v3291 = vrot.slane %v2946, 1
        %v3292 = vsel %vm948, %v3291, %v3290
        %v3293 = vrot.slane %v2948, 7
        %v3294 = vsel %vm930, %v3293, %v2947
        %v3295 = vrot.slane %v2949, 6
        %v3296 = vsel %vm933, %v3295, %v3294
        %v3297 = vrot.slane %v2950, 5
        %v3298 = vsel %vm936, %v3297, %v3296
        %v3299 = vrot.slane %v2951, 4
        %v3300 = vsel %vm939, %v3299, %v3298
        %v3301 = vrot.slane %v2952, 3
        %v3302 = vsel %vm942, %v3301, %v3300
        %v3303 = vrot.slane %v2953, 2
        %v3304 = vsel %vm945, %v3303, %v3302
        %v3305 = vrot.slane %v2954, 1
        %v3306 = vsel %vm948, %v3305, %v3304
        %3307 = vrot.lane.b32.xlu0 %v3096, 32
        %v3308 = vpop.permute.xlu0 %3307
        %3309 = vrot.lane.b32.xlu0 %v3110, 32
        %v3310 = vpop.permute.xlu0 %3309
        %3311 = vrot.lane.b32.xlu0 %v3124, 32
        %v3312 = vpop.permute.xlu0 %3311
        %3313 = vrot.lane.b32.xlu0 %v3138, 32
        %v3314 = vpop.permute.xlu0 %3313
        %3315 = vrot.lane.b32.xlu0 %v3152, 32
        %v3316 = vpop.permute.xlu0 %3315
        %3317 = vrot.lane.b32.xlu0 %v3166, 32
        %v3318 = vpop.permute.xlu0 %3317
        %3319 = vrot.lane.b32.xlu0 %v3180, 32
        %v3320 = vpop.permute.xlu0 %3319
        %3321 = vrot.lane.b32.xlu0 %v3194, 32
        %v3322 = vpop.permute.xlu0 %3321
        %3323 = vrot.lane.b32.xlu0 %v3208, 32
        %v3324 = vpop.permute.xlu0 %3323
        %3325 = vrot.lane.b32.xlu0 %v3222, 32
        %v3326 = vpop.permute.xlu0 %3325
        %3327 = vrot.lane.b32.xlu0 %v3236, 32
        %v3328 = vpop.permute.xlu0 %3327
        %3329 = vrot.lane.b32.xlu0 %v3250, 32
        %v3330 = vpop.permute.xlu0 %3329
        %3331 = vrot.lane.b32.xlu0 %v3264, 32
        %v3332 = vpop.permute.xlu0 %3331
        %3333 = vrot.lane.b32.xlu0 %v3278, 32
        %v3334 = vpop.permute.xlu0 %3333
        %3335 = vrot.lane.b32.xlu0 %v3292, 32
        %v3336 = vpop.permute.xlu0 %3335
        %3337 = vrot.lane.b32.xlu0 %v3306, 32
        %v3338 = vpop.permute.xlu0 %3337
        %vm3355 = vcmask 326912
        %3356 = vst.msk [vmem:[#allocation3] sm:$0xff] %vm3355, %v3308
        %3357 = vst.msk [vmem:[#allocation3 + $0x8] sm:$0xff] %vm3355, %v3310
        %3358 = vst.msk [vmem:[#allocation3 + $0x10] sm:$0xff] %vm3355, %v3312
        %3359 = vst.msk [vmem:[#allocation3 + $0x18] sm:$0xff] %vm3355, %v3314
        %3360 = vst.msk [vmem:[#allocation3 + $0x20] sm:$0xff] %vm3355, %v3316
        %3361 = vst.msk [vmem:[#allocation3 + $0x28] sm:$0xff] %vm3355, %v3318
        %3362 = vst.msk [vmem:[#allocation3 + $0x30] sm:$0xff] %vm3355, %v3320
        %3363 = vst.msk [vmem:[#allocation3 + $0x38] sm:$0xff] %vm3355, %v3322
        %3364 = vst.msk [vmem:[#allocation3 + $0x40] sm:$0xff] %vm3355, %v3324
        %3365 = vst.msk [vmem:[#allocation3 + $0x48] sm:$0xff] %vm3355, %v3326
        %3366 = vst.msk [vmem:[#allocation3 + $0x50] sm:$0xff] %vm3355, %v3328
        %3367 = vst.msk [vmem:[#allocation3 + $0x58] sm:$0xff] %vm3355, %v3330
        %3368 = vst.msk [vmem:[#allocation3 + $0x60] sm:$0xff] %vm3355, %v3332
        %3369 = vst.msk [vmem:[#allocation3 + $0x68] sm:$0xff] %vm3355, %v3334
        %3370 = vst.msk [vmem:[#allocation3 + $0x70] sm:$0xff] %vm3355, %v3336
        %3371 = vst.msk [vmem:[#allocation3 + $0x78] sm:$0xff] %vm3355, %v3338
        %v3372 = vld [vmem:[#allocation2 + $0x5] sm:$0x1]
        %v3373 = vld [vmem:[#allocation2 + $0xd] sm:$0x1]
        %v3374 = vld [vmem:[#allocation2 + $0x15] sm:$0x1]
        %v3375 = vld [vmem:[#allocation2 + $0x1d] sm:$0x1]
        %v3376 = vld [vmem:[#allocation2 + $0x25] sm:$0x1]
        %v3377 = vld [vmem:[#allocation2 + $0x2d] sm:$0x1]
        %v3378 = vld [vmem:[#allocation2 + $0x35] sm:$0x1]
        %v3379 = vld [vmem:[#allocation2 + $0x3d] sm:$0x1]
        %v3380 = vld [vmem:[#allocation2 + $0x45] sm:$0x1]
        %v3381 = vld [vmem:[#allocation2 + $0x4d] sm:$0x1]
        %v3382 = vld [vmem:[#allocation2 + $0x55] sm:$0x1]
        %v3383 = vld [vmem:[#allocation2 + $0x5d] sm:$0x1]
        %v3384 = vld [vmem:[#allocation2 + $0x65] sm:$0x1]
        %v3385 = vld [vmem:[#allocation2 + $0x6d] sm:$0x1]
        %v3386 = vld [vmem:[#allocation2 + $0x75] sm:$0x1]
        %v3387 = vld [vmem:[#allocation2 + $0x7d] sm:$0x1]
        %v3388 = vld [vmem:[#allocation2 + $0x85] sm:$0x1]
        %v3389 = vld [vmem:[#allocation2 + $0x8d] sm:$0x1]
        %v3390 = vld [vmem:[#allocation2 + $0x95] sm:$0x1]
        %v3391 = vld [vmem:[#allocation2 + $0x9d] sm:$0x1]
        %v3392 = vld [vmem:[#allocation2 + $0xa5] sm:$0x1]
        %v3393 = vld [vmem:[#allocation2 + $0xad] sm:$0x1]
        %v3394 = vld [vmem:[#allocation2 + $0xb5] sm:$0x1]
        %v3395 = vld [vmem:[#allocation2 + $0xbd] sm:$0x1]
        %v3396 = vld [vmem:[#allocation2 + $0xc5] sm:$0x1]
        %v3397 = vld [vmem:[#allocation2 + $0xcd] sm:$0x1]
        %v3398 = vld [vmem:[#allocation2 + $0xd5] sm:$0x1]
        %v3399 = vld [vmem:[#allocation2 + $0xdd] sm:$0x1]
        %v3400 = vld [vmem:[#allocation2 + $0xe5] sm:$0x1]
        %v3401 = vld [vmem:[#allocation2 + $0xed] sm:$0x1]
        %v3402 = vld [vmem:[#allocation2 + $0xf5] sm:$0x1]
        %v3403 = vld [vmem:[#allocation2 + $0xfd] sm:$0x1]
        %v3404 = vld [vmem:[#allocation2 + $0x105] sm:$0x1]
        %v3405 = vld [vmem:[#allocation2 + $0x10d] sm:$0x1]
        %v3406 = vld [vmem:[#allocation2 + $0x115] sm:$0x1]
        %v3407 = vld [vmem:[#allocation2 + $0x11d] sm:$0x1]
        %v3408 = vld [vmem:[#allocation2 + $0x125] sm:$0x1]
        %v3409 = vld [vmem:[#allocation2 + $0x12d] sm:$0x1]
        %v3410 = vld [vmem:[#allocation2 + $0x135] sm:$0x1]
        %v3411 = vld [vmem:[#allocation2 + $0x13d] sm:$0x1]
        %v3412 = vld [vmem:[#allocation2 + $0x145] sm:$0x1]
        %v3413 = vld [vmem:[#allocation2 + $0x14d] sm:$0x1]
        %v3414 = vld [vmem:[#allocation2 + $0x155] sm:$0x1]
        %v3415 = vld [vmem:[#allocation2 + $0x15d] sm:$0x1]
        %v3416 = vld [vmem:[#allocation2 + $0x165] sm:$0x1]
        %v3417 = vld [vmem:[#allocation2 + $0x16d] sm:$0x1]
        %v3418 = vld [vmem:[#allocation2 + $0x175] sm:$0x1]
        %v3419 = vld [vmem:[#allocation2 + $0x17d] sm:$0x1]
        %v3420 = vld [vmem:[#allocation2 + $0x185] sm:$0x1]
        %v3421 = vld [vmem:[#allocation2 + $0x18d] sm:$0x1]
        %v3422 = vld [vmem:[#allocation2 + $0x195] sm:$0x1]
        %v3423 = vld [vmem:[#allocation2 + $0x19d] sm:$0x1]
        %v3424 = vld [vmem:[#allocation2 + $0x1a5] sm:$0x1]
        %v3425 = vld [vmem:[#allocation2 + $0x1ad] sm:$0x1]
        %v3426 = vld [vmem:[#allocation2 + $0x1b5] sm:$0x1]
        %v3427 = vld [vmem:[#allocation2 + $0x1bd] sm:$0x1]
        %v3428 = vld [vmem:[#allocation2 + $0x1c5] sm:$0x1]
        %v3429 = vld [vmem:[#allocation2 + $0x1cd] sm:$0x1]
        %v3430 = vld [vmem:[#allocation2 + $0x1d5] sm:$0x1]
        %v3431 = vld [vmem:[#allocation2 + $0x1dd] sm:$0x1]
        %v3432 = vld [vmem:[#allocation2 + $0x1e5] sm:$0x1]
        %v3433 = vld [vmem:[#allocation2 + $0x1ed] sm:$0x1]
        %v3434 = vld [vmem:[#allocation2 + $0x1f5] sm:$0x1]
        %v3435 = vld [vmem:[#allocation2 + $0x1fd] sm:$0x1]
        %v3436 = vld [vmem:[#allocation2 + $0x205] sm:$0x1]
        %v3437 = vld [vmem:[#allocation2 + $0x20d] sm:$0x1]
        %v3438 = vld [vmem:[#allocation2 + $0x215] sm:$0x1]
        %v3439 = vld [vmem:[#allocation2 + $0x21d] sm:$0x1]
        %v3440 = vld [vmem:[#allocation2 + $0x225] sm:$0x1]
        %v3441 = vld [vmem:[#allocation2 + $0x22d] sm:$0x1]
        %v3442 = vld [vmem:[#allocation2 + $0x235] sm:$0x1]
        %v3443 = vld [vmem:[#allocation2 + $0x23d] sm:$0x1]
        %v3444 = vld [vmem:[#allocation2 + $0x245] sm:$0x1]
        %v3445 = vld [vmem:[#allocation2 + $0x24d] sm:$0x1]
        %v3446 = vld [vmem:[#allocation2 + $0x255] sm:$0x1]
        %v3447 = vld [vmem:[#allocation2 + $0x25d] sm:$0x1]
        %v3448 = vld [vmem:[#allocation2 + $0x265] sm:$0x1]
        %v3449 = vld [vmem:[#allocation2 + $0x26d] sm:$0x1]
        %v3450 = vld [vmem:[#allocation2 + $0x275] sm:$0x1]
        %v3451 = vld [vmem:[#allocation2 + $0x27d] sm:$0x1]
        %v3452 = vld [vmem:[#allocation2 + $0x285] sm:$0x1]
        %v3453 = vld [vmem:[#allocation2 + $0x28d] sm:$0x1]
        %v3454 = vld [vmem:[#allocation2 + $0x295] sm:$0x1]
        %v3455 = vld [vmem:[#allocation2 + $0x29d] sm:$0x1]
        %v3456 = vld [vmem:[#allocation2 + $0x2a5] sm:$0x1]
        %v3457 = vld [vmem:[#allocation2 + $0x2ad] sm:$0x1]
        %v3458 = vld [vmem:[#allocation2 + $0x2b5] sm:$0x1]
        %v3459 = vld [vmem:[#allocation2 + $0x2bd] sm:$0x1]
        %v3460 = vld [vmem:[#allocation2 + $0x2c5] sm:$0x1]
        %v3461 = vld [vmem:[#allocation2 + $0x2cd] sm:$0x1]
        %v3462 = vld [vmem:[#allocation2 + $0x2d5] sm:$0x1]
        %v3463 = vld [vmem:[#allocation2 + $0x2dd] sm:$0x1]
        %v3464 = vld [vmem:[#allocation2 + $0x2e5] sm:$0x1]
        %v3465 = vld [vmem:[#allocation2 + $0x2ed] sm:$0x1]
        %v3466 = vld [vmem:[#allocation2 + $0x2f5] sm:$0x1]
        %v3467 = vld [vmem:[#allocation2 + $0x2fd] sm:$0x1]
        %v3468 = vld [vmem:[#allocation2 + $0x305] sm:$0x1]
        %v3469 = vld [vmem:[#allocation2 + $0x30d] sm:$0x1]
        %v3470 = vld [vmem:[#allocation2 + $0x315] sm:$0x1]
        %v3471 = vld [vmem:[#allocation2 + $0x31d] sm:$0x1]
        %v3472 = vld [vmem:[#allocation2 + $0x325] sm:$0x1]
        %v3473 = vld [vmem:[#allocation2 + $0x32d] sm:$0x1]
        %v3474 = vld [vmem:[#allocation2 + $0x335] sm:$0x1]
        %v3475 = vld [vmem:[#allocation2 + $0x33d] sm:$0x1]
        %v3476 = vld [vmem:[#allocation2 + $0x345] sm:$0x1]
        %v3477 = vld [vmem:[#allocation2 + $0x34d] sm:$0x1]
        %v3478 = vld [vmem:[#allocation2 + $0x355] sm:$0x1]
        %v3479 = vld [vmem:[#allocation2 + $0x35d] sm:$0x1]
        %v3480 = vld [vmem:[#allocation2 + $0x365] sm:$0x1]
        %v3481 = vld [vmem:[#allocation2 + $0x36d] sm:$0x1]
        %v3482 = vld [vmem:[#allocation2 + $0x375] sm:$0x1]
        %v3483 = vld [vmem:[#allocation2 + $0x37d] sm:$0x1]
        %v3484 = vld [vmem:[#allocation2 + $0x385] sm:$0x1]
        %v3485 = vld [vmem:[#allocation2 + $0x38d] sm:$0x1]
        %v3486 = vld [vmem:[#allocation2 + $0x395] sm:$0x1]
        %v3487 = vld [vmem:[#allocation2 + $0x39d] sm:$0x1]
        %v3488 = vld [vmem:[#allocation2 + $0x3a5] sm:$0x1]
        %v3489 = vld [vmem:[#allocation2 + $0x3ad] sm:$0x1]
        %v3490 = vld [vmem:[#allocation2 + $0x3b5] sm:$0x1]
        %v3491 = vld [vmem:[#allocation2 + $0x3bd] sm:$0x1]
        %v3492 = vld [vmem:[#allocation2 + $0x3c5] sm:$0x1]
        %v3493 = vld [vmem:[#allocation2 + $0x3cd] sm:$0x1]
        %v3494 = vld [vmem:[#allocation2 + $0x3d5] sm:$0x1]
        %v3495 = vld [vmem:[#allocation2 + $0x3dd] sm:$0x1]
        %v3496 = vld [vmem:[#allocation2 + $0x3e5] sm:$0x1]
        %v3497 = vld [vmem:[#allocation2 + $0x3ed] sm:$0x1]
        %v3498 = vld [vmem:[#allocation2 + $0x3f5] sm:$0x1]
        %v3499 = vld [vmem:[#allocation2 + $0x3fd] sm:$0x1]
        %v3628 = vrot.slane %v3373, 7
        %v3629 = vsel %vm930, %v3628, %v3372
        %v3630 = vrot.slane %v3374, 6
        %v3631 = vsel %vm933, %v3630, %v3629
        %v3632 = vrot.slane %v3375, 5
        %v3633 = vsel %vm936, %v3632, %v3631
        %v3634 = vrot.slane %v3376, 4
        %v3635 = vsel %vm939, %v3634, %v3633
        %v3636 = vrot.slane %v3377, 3
        %v3637 = vsel %vm942, %v3636, %v3635
        %v3638 = vrot.slane %v3378, 2
        %v3639 = vsel %vm945, %v3638, %v3637
        %v3640 = vrot.slane %v3379, 1
        %v3641 = vsel %vm948, %v3640, %v3639
        %v3642 = vrot.slane %v3381, 7
        %v3643 = vsel %vm930, %v3642, %v3380
        %v3644 = vrot.slane %v3382, 6
        %v3645 = vsel %vm933, %v3644, %v3643
        %v3646 = vrot.slane %v3383, 5
        %v3647 = vsel %vm936, %v3646, %v3645
        %v3648 = vrot.slane %v3384, 4
        %v3649 = vsel %vm939, %v3648, %v3647
        %v3650 = vrot.slane %v3385, 3
        %v3651 = vsel %vm942, %v3650, %v3649
        %v3652 = vrot.slane %v3386, 2
        %v3653 = vsel %vm945, %v3652, %v3651
        %v3654 = vrot.slane %v3387, 1
        %v3655 = vsel %vm948, %v3654, %v3653
        %v3656 = vrot.slane %v3389, 7
        %v3657 = vsel %vm930, %v3656, %v3388
        %v3658 = vrot.slane %v3390, 6
        %v3659 = vsel %vm933, %v3658, %v3657
        %v3660 = vrot.slane %v3391, 5
        %v3661 = vsel %vm936, %v3660, %v3659
        %v3662 = vrot.slane %v3392, 4
        %v3663 = vsel %vm939, %v3662, %v3661
        %v3664 = vrot.slane %v3393, 3
        %v3665 = vsel %vm942, %v3664, %v3663
        %v3666 = vrot.slane %v3394, 2
        %v3667 = vsel %vm945, %v3666, %v3665
        %v3668 = vrot.slane %v3395, 1
        %v3669 = vsel %vm948, %v3668, %v3667
        %v3670 = vrot.slane %v3397, 7
        %v3671 = vsel %vm930, %v3670, %v3396
        %v3672 = vrot.slane %v3398, 6
        %v3673 = vsel %vm933, %v3672, %v3671
        %v3674 = vrot.slane %v3399, 5
        %v3675 = vsel %vm936, %v3674, %v3673
        %v3676 = vrot.slane %v3400, 4
        %v3677 = vsel %vm939, %v3676, %v3675
        %v3678 = vrot.slane %v3401, 3
        %v3679 = vsel %vm942, %v3678, %v3677
        %v3680 = vrot.slane %v3402, 2
        %v3681 = vsel %vm945, %v3680, %v3679
        %v3682 = vrot.slane %v3403, 1
        %v3683 = vsel %vm948, %v3682, %v3681
        %v3684 = vrot.slane %v3405, 7
        %v3685 = vsel %vm930, %v3684, %v3404
        %v3686 = vrot.slane %v3406, 6
        %v3687 = vsel %vm933, %v3686, %v3685
        %v3688 = vrot.slane %v3407, 5
        %v3689 = vsel %vm936, %v3688, %v3687
        %v3690 = vrot.slane %v3408, 4
        %v3691 = vsel %vm939, %v3690, %v3689
        %v3692 = vrot.slane %v3409, 3
        %v3693 = vsel %vm942, %v3692, %v3691
        %v3694 = vrot.slane %v3410, 2
        %v3695 = vsel %vm945, %v3694, %v3693
        %v3696 = vrot.slane %v3411, 1
        %v3697 = vsel %vm948, %v3696, %v3695
        %v3698 = vrot.slane %v3413, 7
        %v3699 = vsel %vm930, %v3698, %v3412
        %v3700 = vrot.slane %v3414, 6
        %v3701 = vsel %vm933, %v3700, %v3699
        %v3702 = vrot.slane %v3415, 5
        %v3703 = vsel %vm936, %v3702, %v3701
        %v3704 = vrot.slane %v3416, 4
        %v3705 = vsel %vm939, %v3704, %v3703
        %v3706 = vrot.slane %v3417, 3
        %v3707 = vsel %vm942, %v3706, %v3705
        %v3708 = vrot.slane %v3418, 2
        %v3709 = vsel %vm945, %v3708, %v3707
        %v3710 = vrot.slane %v3419, 1
        %v3711 = vsel %vm948, %v3710, %v3709
        %v3712 = vrot.slane %v3421, 7
        %v3713 = vsel %vm930, %v3712, %v3420
        %v3714 = vrot.slane %v3422, 6
        %v3715 = vsel %vm933, %v3714, %v3713
        %v3716 = vrot.slane %v3423, 5
        %v3717 = vsel %vm936, %v3716, %v3715
        %v3718 = vrot.slane %v3424, 4
        %v3719 = vsel %vm939, %v3718, %v3717
        %v3720 = vrot.slane %v3425, 3
        %v3721 = vsel %vm942, %v3720, %v3719
        %v3722 = vrot.slane %v3426, 2
        %v3723 = vsel %vm945, %v3722, %v3721
        %v3724 = vrot.slane %v3427, 1
        %v3725 = vsel %vm948, %v3724, %v3723
        %v3726 = vrot.slane %v3429, 7
        %v3727 = vsel %vm930, %v3726, %v3428
        %v3728 = vrot.slane %v3430, 6
        %v3729 = vsel %vm933, %v3728, %v3727
        %v3730 = vrot.slane %v3431, 5
        %v3731 = vsel %vm936, %v3730, %v3729
        %v3732 = vrot.slane %v3432, 4
        %v3733 = vsel %vm939, %v3732, %v3731
        %v3734 = vrot.slane %v3433, 3
        %v3735 = vsel %vm942, %v3734, %v3733
        %v3736 = vrot.slane %v3434, 2
        %v3737 = vsel %vm945, %v3736, %v3735
        %v3738 = vrot.slane %v3435, 1
        %v3739 = vsel %vm948, %v3738, %v3737
        %v3740 = vrot.slane %v3437, 7
        %v3741 = vsel %vm930, %v3740, %v3436
        %v3742 = vrot.slane %v3438, 6
        %v3743 = vsel %vm933, %v3742, %v3741
        %v3744 = vrot.slane %v3439, 5
        %v3745 = vsel %vm936, %v3744, %v3743
        %v3746 = vrot.slane %v3440, 4
        %v3747 = vsel %vm939, %v3746, %v3745
        %v3748 = vrot.slane %v3441, 3
        %v3749 = vsel %vm942, %v3748, %v3747
        %v3750 = vrot.slane %v3442, 2
        %v3751 = vsel %vm945, %v3750, %v3749
        %v3752 = vrot.slane %v3443, 1
        %v3753 = vsel %vm948, %v3752, %v3751
        %v3754 = vrot.slane %v3445, 7
        %v3755 = vsel %vm930, %v3754, %v3444
        %v3756 = vrot.slane %v3446, 6
        %v3757 = vsel %vm933, %v3756, %v3755
        %v3758 = vrot.slane %v3447, 5
        %v3759 = vsel %vm936, %v3758, %v3757
        %v3760 = vrot.slane %v3448, 4
        %v3761 = vsel %vm939, %v3760, %v3759
        %v3762 = vrot.slane %v3449, 3
        %v3763 = vsel %vm942, %v3762, %v3761
        %v3764 = vrot.slane %v3450, 2
        %v3765 = vsel %vm945, %v3764, %v3763
        %v3766 = vrot.slane %v3451, 1
        %v3767 = vsel %vm948, %v3766, %v3765
        %v3768 = vrot.slane %v3453, 7
        %v3769 = vsel %vm930, %v3768, %v3452
        %v3770 = vrot.slane %v3454, 6
        %v3771 = vsel %vm933, %v3770, %v3769
        %v3772 = vrot.slane %v3455, 5
        %v3773 = vsel %vm936, %v3772, %v3771
        %v3774 = vrot.slane %v3456, 4
        %v3775 = vsel %vm939, %v3774, %v3773
        %v3776 = vrot.slane %v3457, 3
        %v3777 = vsel %vm942, %v3776, %v3775
        %v3778 = vrot.slane %v3458, 2
        %v3779 = vsel %vm945, %v3778, %v3777
        %v3780 = vrot.slane %v3459, 1
        %v3781 = vsel %vm948, %v3780, %v3779
        %v3782 = vrot.slane %v3461, 7
        %v3783 = vsel %vm930, %v3782, %v3460
        %v3784 = vrot.slane %v3462, 6
        %v3785 = vsel %vm933, %v3784, %v3783
        %v3786 = vrot.slane %v3463, 5
        %v3787 = vsel %vm936, %v3786, %v3785
        %v3788 = vrot.slane %v3464, 4
        %v3789 = vsel %vm939, %v3788, %v3787
        %v3790 = vrot.slane %v3465, 3
        %v3791 = vsel %vm942, %v3790, %v3789
        %v3792 = vrot.slane %v3466, 2
        %v3793 = vsel %vm945, %v3792, %v3791
        %v3794 = vrot.slane %v3467, 1
        %v3795 = vsel %vm948, %v3794, %v3793
        %v3796 = vrot.slane %v3469, 7
        %v3797 = vsel %vm930, %v3796, %v3468
        %v3798 = vrot.slane %v3470, 6
        %v3799 = vsel %vm933, %v3798, %v3797
        %v3800 = vrot.slane %v3471, 5
        %v3801 = vsel %vm936, %v3800, %v3799
        %v3802 = vrot.slane %v3472, 4
        %v3803 = vsel %vm939, %v3802, %v3801
        %v3804 = vrot.slane %v3473, 3
        %v3805 = vsel %vm942, %v3804, %v3803
        %v3806 = vrot.slane %v3474, 2
        %v3807 = vsel %vm945, %v3806, %v3805
        %v3808 = vrot.slane %v3475, 1
        %v3809 = vsel %vm948, %v3808, %v3807
        %v3810 = vrot.slane %v3477, 7
        %v3811 = vsel %vm930, %v3810, %v3476
        %v3812 = vrot.slane %v3478, 6
        %v3813 = vsel %vm933, %v3812, %v3811
        %v3814 = vrot.slane %v3479, 5
        %v3815 = vsel %vm936, %v3814, %v3813
        %v3816 = vrot.slane %v3480, 4
        %v3817 = vsel %vm939, %v3816, %v3815
        %v3818 = vrot.slane %v3481, 3
        %v3819 = vsel %vm942, %v3818, %v3817
        %v3820 = vrot.slane %v3482, 2
        %v3821 = vsel %vm945, %v3820, %v3819
        %v3822 = vrot.slane %v3483, 1
        %v3823 = vsel %vm948, %v3822, %v3821
        %v3824 = vrot.slane %v3485, 7
        %v3825 = vsel %vm930, %v3824, %v3484
        %v3826 = vrot.slane %v3486, 6
        %v3827 = vsel %vm933, %v3826, %v3825
        %v3828 = vrot.slane %v3487, 5
        %v3829 = vsel %vm936, %v3828, %v3827
        %v3830 = vrot.slane %v3488, 4
        %v3831 = vsel %vm939, %v3830, %v3829
        %v3832 = vrot.slane %v3489, 3
        %v3833 = vsel %vm942, %v3832, %v3831
        %v3834 = vrot.slane %v3490, 2
        %v3835 = vsel %vm945, %v3834, %v3833
        %v3836 = vrot.slane %v3491, 1
        %v3837 = vsel %vm948, %v3836, %v3835
        %v3838 = vrot.slane %v3493, 7
        %v3839 = vsel %vm930, %v3838, %v3492
        %v3840 = vrot.slane %v3494, 6
        %v3841 = vsel %vm933, %v3840, %v3839
        %v3842 = vrot.slane %v3495, 5
        %v3843 = vsel %vm936, %v3842, %v3841
        %v3844 = vrot.slane %v3496, 4
        %v3845 = vsel %vm939, %v3844, %v3843
        %v3846 = vrot.slane %v3497, 3
        %v3847 = vsel %vm942, %v3846, %v3845
        %v3848 = vrot.slane %v3498, 2
        %v3849 = vsel %vm945, %v3848, %v3847
        %v3850 = vrot.slane %v3499, 1
        %v3851 = vsel %vm948, %v3850, %v3849
        %3852 = vrot.lane.b32.xlu0 %v3641, 40
        %v3853 = vpop.permute.xlu0 %3852
        %3854 = vrot.lane.b32.xlu0 %v3655, 40
        %v3855 = vpop.permute.xlu0 %3854
        %3856 = vrot.lane.b32.xlu0 %v3669, 40
        %v3857 = vpop.permute.xlu0 %3856
        %3858 = vrot.lane.b32.xlu0 %v3683, 40
        %v3859 = vpop.permute.xlu0 %3858
        %3860 = vrot.lane.b32.xlu0 %v3697, 40
        %v3861 = vpop.permute.xlu0 %3860
        %3862 = vrot.lane.b32.xlu0 %v3711, 40
        %v3863 = vpop.permute.xlu0 %3862
        %3864 = vrot.lane.b32.xlu0 %v3725, 40
        %v3865 = vpop.permute.xlu0 %3864
        %3866 = vrot.lane.b32.xlu0 %v3739, 40
        %v3867 = vpop.permute.xlu0 %3866
        %3868 = vrot.lane.b32.xlu0 %v3753, 40
        %v3869 = vpop.permute.xlu0 %3868
        %3870 = vrot.lane.b32.xlu0 %v3767, 40
        %v3871 = vpop.permute.xlu0 %3870
        %3872 = vrot.lane.b32.xlu0 %v3781, 40
        %v3873 = vpop.permute.xlu0 %3872
        %3874 = vrot.lane.b32.xlu0 %v3795, 40
        %v3875 = vpop.permute.xlu0 %3874
        %3876 = vrot.lane.b32.xlu0 %v3809, 40
        %v3877 = vpop.permute.xlu0 %3876
        %3878 = vrot.lane.b32.xlu0 %v3823, 40
        %v3879 = vpop.permute.xlu0 %3878
        %3880 = vrot.lane.b32.xlu0 %v3837, 40
        %v3881 = vpop.permute.xlu0 %3880
        %3882 = vrot.lane.b32.xlu0 %v3851, 40
        %v3883 = vpop.permute.xlu0 %3882
        %vm3900 = vcmask 392512
        %3901 = vst.msk [vmem:[#allocation3] sm:$0xff] %vm3900, %v3853
        %3902 = vst.msk [vmem:[#allocation3 + $0x8] sm:$0xff] %vm3900, %v3855
        %3903 = vst.msk [vmem:[#allocation3 + $0x10] sm:$0xff] %vm3900, %v3857
        %3904 = vst.msk [vmem:[#allocation3 + $0x18] sm:$0xff] %vm3900, %v3859
        %3905 = vst.msk [vmem:[#allocation3 + $0x20] sm:$0xff] %vm3900, %v3861
        %3906 = vst.msk [vmem:[#allocation3 + $0x28] sm:$0xff] %vm3900, %v3863
        %3907 = vst.msk [vmem:[#allocation3 + $0x30] sm:$0xff] %vm3900, %v3865
        %3908 = vst.msk [vmem:[#allocation3 + $0x38] sm:$0xff] %vm3900, %v3867
        %3909 = vst.msk [vmem:[#allocation3 + $0x40] sm:$0xff] %vm3900, %v3869
        %3910 = vst.msk [vmem:[#allocation3 + $0x48] sm:$0xff] %vm3900, %v3871
        %3911 = vst.msk [vmem:[#allocation3 + $0x50] sm:$0xff] %vm3900, %v3873
        %3912 = vst.msk [vmem:[#allocation3 + $0x58] sm:$0xff] %vm3900, %v3875
        %3913 = vst.msk [vmem:[#allocation3 + $0x60] sm:$0xff] %vm3900, %v3877
        %3914 = vst.msk [vmem:[#allocation3 + $0x68] sm:$0xff] %vm3900, %v3879
        %3915 = vst.msk [vmem:[#allocation3 + $0x70] sm:$0xff] %vm3900, %v3881
        %3916 = vst.msk [vmem:[#allocation3 + $0x78] sm:$0xff] %vm3900, %v3883
        %v3917 = vld [vmem:[#allocation2 + $0x6] sm:$0x1]
        %v3918 = vld [vmem:[#allocation2 + $0xe] sm:$0x1]
        %v3919 = vld [vmem:[#allocation2 + $0x16] sm:$0x1]
        %v3920 = vld [vmem:[#allocation2 + $0x1e] sm:$0x1]
        %v3921 = vld [vmem:[#allocation2 + $0x26] sm:$0x1]
        %v3922 = vld [vmem:[#allocation2 + $0x2e] sm:$0x1]
        %v3923 = vld [vmem:[#allocation2 + $0x36] sm:$0x1]
        %v3924 = vld [vmem:[#allocation2 + $0x3e] sm:$0x1]
        %v3925 = vld [vmem:[#allocation2 + $0x46] sm:$0x1]
        %v3926 = vld [vmem:[#allocation2 + $0x4e] sm:$0x1]
        %v3927 = vld [vmem:[#allocation2 + $0x56] sm:$0x1]
        %v3928 = vld [vmem:[#allocation2 + $0x5e] sm:$0x1]
        %v3929 = vld [vmem:[#allocation2 + $0x66] sm:$0x1]
        %v3930 = vld [vmem:[#allocation2 + $0x6e] sm:$0x1]
        %v3931 = vld [vmem:[#allocation2 + $0x76] sm:$0x1]
        %v3932 = vld [vmem:[#allocation2 + $0x7e] sm:$0x1]
        %v3933 = vld [vmem:[#allocation2 + $0x86] sm:$0x1]
        %v3934 = vld [vmem:[#allocation2 + $0x8e] sm:$0x1]
        %v3935 = vld [vmem:[#allocation2 + $0x96] sm:$0x1]
        %v3936 = vld [vmem:[#allocation2 + $0x9e] sm:$0x1]
        %v3937 = vld [vmem:[#allocation2 + $0xa6] sm:$0x1]
        %v3938 = vld [vmem:[#allocation2 + $0xae] sm:$0x1]
        %v3939 = vld [vmem:[#allocation2 + $0xb6] sm:$0x1]
        %v3940 = vld [vmem:[#allocation2 + $0xbe] sm:$0x1]
        %v3941 = vld [vmem:[#allocation2 + $0xc6] sm:$0x1]
        %v3942 = vld [vmem:[#allocation2 + $0xce] sm:$0x1]
        %v3943 = vld [vmem:[#allocation2 + $0xd6] sm:$0x1]
        %v3944 = vld [vmem:[#allocation2 + $0xde] sm:$0x1]
        %v3945 = vld [vmem:[#allocation2 + $0xe6] sm:$0x1]
        %v3946 = vld [vmem:[#allocation2 + $0xee] sm:$0x1]
        %v3947 = vld [vmem:[#allocation2 + $0xf6] sm:$0x1]
        %v3948 = vld [vmem:[#allocation2 + $0xfe] sm:$0x1]
        %v3949 = vld [vmem:[#allocation2 + $0x106] sm:$0x1]
        %v3950 = vld [vmem:[#allocation2 + $0x10e] sm:$0x1]
        %v3951 = vld [vmem:[#allocation2 + $0x116] sm:$0x1]
        %v3952 = vld [vmem:[#allocation2 + $0x11e] sm:$0x1]
        %v3953 = vld [vmem:[#allocation2 + $0x126] sm:$0x1]
        %v3954 = vld [vmem:[#allocation2 + $0x12e] sm:$0x1]
        %v3955 = vld [vmem:[#allocation2 + $0x136] sm:$0x1]
        %v3956 = vld [vmem:[#allocation2 + $0x13e] sm:$0x1]
        %v3957 = vld [vmem:[#allocation2 + $0x146] sm:$0x1]
        %v3958 = vld [vmem:[#allocation2 + $0x14e] sm:$0x1]
        %v3959 = vld [vmem:[#allocation2 + $0x156] sm:$0x1]
        %v3960 = vld [vmem:[#allocation2 + $0x15e] sm:$0x1]
        %v3961 = vld [vmem:[#allocation2 + $0x166] sm:$0x1]
        %v3962 = vld [vmem:[#allocation2 + $0x16e] sm:$0x1]
        %v3963 = vld [vmem:[#allocation2 + $0x176] sm:$0x1]
        %v3964 = vld [vmem:[#allocation2 + $0x17e] sm:$0x1]
        %v3965 = vld [vmem:[#allocation2 + $0x186] sm:$0x1]
        %v3966 = vld [vmem:[#allocation2 + $0x18e] sm:$0x1]
        %v3967 = vld [vmem:[#allocation2 + $0x196] sm:$0x1]
        %v3968 = vld [vmem:[#allocation2 + $0x19e] sm:$0x1]
        %v3969 = vld [vmem:[#allocation2 + $0x1a6] sm:$0x1]
        %v3970 = vld [vmem:[#allocation2 + $0x1ae] sm:$0x1]
        %v3971 = vld [vmem:[#allocation2 + $0x1b6] sm:$0x1]
        %v3972 = vld [vmem:[#allocation2 + $0x1be] sm:$0x1]
        %v3973 = vld [vmem:[#allocation2 + $0x1c6] sm:$0x1]
        %v3974 = vld [vmem:[#allocation2 + $0x1ce] sm:$0x1]
        %v3975 = vld [vmem:[#allocation2 + $0x1d6] sm:$0x1]
        %v3976 = vld [vmem:[#allocation2 + $0x1de] sm:$0x1]
        %v3977 = vld [vmem:[#allocation2 + $0x1e6] sm:$0x1]
        %v3978 = vld [vmem:[#allocation2 + $0x1ee] sm:$0x1]
        %v3979 = vld [vmem:[#allocation2 + $0x1f6] sm:$0x1]
        %v3980 = vld [vmem:[#allocation2 + $0x1fe] sm:$0x1]
        %v3981 = vld [vmem:[#allocation2 + $0x206] sm:$0x1]
        %v3982 = vld [vmem:[#allocation2 + $0x20e] sm:$0x1]
        %v3983 = vld [vmem:[#allocation2 + $0x216] sm:$0x1]
        %v3984 = vld [vmem:[#allocation2 + $0x21e] sm:$0x1]
        %v3985 = vld [vmem:[#allocation2 + $0x226] sm:$0x1]
        %v3986 = vld [vmem:[#allocation2 + $0x22e] sm:$0x1]
        %v3987 = vld [vmem:[#allocation2 + $0x236] sm:$0x1]
        %v3988 = vld [vmem:[#allocation2 + $0x23e] sm:$0x1]
        %v3989 = vld [vmem:[#allocation2 + $0x246] sm:$0x1]
        %v3990 = vld [vmem:[#allocation2 + $0x24e] sm:$0x1]
        %v3991 = vld [vmem:[#allocation2 + $0x256] sm:$0x1]
        %v3992 = vld [vmem:[#allocation2 + $0x25e] sm:$0x1]
        %v3993 = vld [vmem:[#allocation2 + $0x266] sm:$0x1]
        %v3994 = vld [vmem:[#allocation2 + $0x26e] sm:$0x1]
        %v3995 = vld [vmem:[#allocation2 + $0x276] sm:$0x1]
        %v3996 = vld [vmem:[#allocation2 + $0x27e] sm:$0x1]
        %v3997 = vld [vmem:[#allocation2 + $0x286] sm:$0x1]
        %v3998 = vld [vmem:[#allocation2 + $0x28e] sm:$0x1]
        %v3999 = vld [vmem:[#allocation2 + $0x296] sm:$0x1]
        %v4000 = vld [vmem:[#allocation2 + $0x29e] sm:$0x1]
        %v4001 = vld [vmem:[#allocation2 + $0x2a6] sm:$0x1]
        %v4002 = vld [vmem:[#allocation2 + $0x2ae] sm:$0x1]
        %v4003 = vld [vmem:[#allocation2 + $0x2b6] sm:$0x1]
        %v4004 = vld [vmem:[#allocation2 + $0x2be] sm:$0x1]
        %v4005 = vld [vmem:[#allocation2 + $0x2c6] sm:$0x1]
        %v4006 = vld [vmem:[#allocation2 + $0x2ce] sm:$0x1]
        %v4007 = vld [vmem:[#allocation2 + $0x2d6] sm:$0x1]
        %v4008 = vld [vmem:[#allocation2 + $0x2de] sm:$0x1]
        %v4009 = vld [vmem:[#allocation2 + $0x2e6] sm:$0x1]
        %v4010 = vld [vmem:[#allocation2 + $0x2ee] sm:$0x1]
        %v4011 = vld [vmem:[#allocation2 + $0x2f6] sm:$0x1]
        %v4012 = vld [vmem:[#allocation2 + $0x2fe] sm:$0x1]
        %v4013 = vld [vmem:[#allocation2 + $0x306] sm:$0x1]
        %v4014 = vld [vmem:[#allocation2 + $0x30e] sm:$0x1]
        %v4015 = vld [vmem:[#allocation2 + $0x316] sm:$0x1]
        %v4016 = vld [vmem:[#allocation2 + $0x31e] sm:$0x1]
        %v4017 = vld [vmem:[#allocation2 + $0x326] sm:$0x1]
        %v4018 = vld [vmem:[#allocation2 + $0x32e] sm:$0x1]
        %v4019 = vld [vmem:[#allocation2 + $0x336] sm:$0x1]
        %v4020 = vld [vmem:[#allocation2 + $0x33e] sm:$0x1]
        %v4021 = vld [vmem:[#allocation2 + $0x346] sm:$0x1]
        %v4022 = vld [vmem:[#allocation2 + $0x34e] sm:$0x1]
        %v4023 = vld [vmem:[#allocation2 + $0x356] sm:$0x1]
        %v4024 = vld [vmem:[#allocation2 + $0x35e] sm:$0x1]
        %v4025 = vld [vmem:[#allocation2 + $0x366] sm:$0x1]
        %v4026 = vld [vmem:[#allocation2 + $0x36e] sm:$0x1]
        %v4027 = vld [vmem:[#allocation2 + $0x376] sm:$0x1]
        %v4028 = vld [vmem:[#allocation2 + $0x37e] sm:$0x1]
        %v4029 = vld [vmem:[#allocation2 + $0x386] sm:$0x1]
        %v4030 = vld [vmem:[#allocation2 + $0x38e] sm:$0x1]
        %v4031 = vld [vmem:[#allocation2 + $0x396] sm:$0x1]
        %v4032 = vld [vmem:[#allocation2 + $0x39e] sm:$0x1]
        %v4033 = vld [vmem:[#allocation2 + $0x3a6] sm:$0x1]
        %v4034 = vld [vmem:[#allocation2 + $0x3ae] sm:$0x1]
        %v4035 = vld [vmem:[#allocation2 + $0x3b6] sm:$0x1]
        %v4036 = vld [vmem:[#allocation2 + $0x3be] sm:$0x1]
        %v4037 = vld [vmem:[#allocation2 + $0x3c6] sm:$0x1]
        %v4038 = vld [vmem:[#allocation2 + $0x3ce] sm:$0x1]
        %v4039 = vld [vmem:[#allocation2 + $0x3d6] sm:$0x1]
        %v4040 = vld [vmem:[#allocation2 + $0x3de] sm:$0x1]
        %v4041 = vld [vmem:[#allocation2 + $0x3e6] sm:$0x1]
        %v4042 = vld [vmem:[#allocation2 + $0x3ee] sm:$0x1]
        %v4043 = vld [vmem:[#allocation2 + $0x3f6] sm:$0x1]
        %v4044 = vld [vmem:[#allocation2 + $0x3fe] sm:$0x1]
        %v4173 = vrot.slane %v3918, 7
        %v4174 = vsel %vm930, %v4173, %v3917
        %v4175 = vrot.slane %v3919, 6
        %v4176 = vsel %vm933, %v4175, %v4174
        %v4177 = vrot.slane %v3920, 5
        %v4178 = vsel %vm936, %v4177, %v4176
        %v4179 = vrot.slane %v3921, 4
        %v4180 = vsel %vm939, %v4179, %v4178
        %v4181 = vrot.slane %v3922, 3
        %v4182 = vsel %vm942, %v4181, %v4180
        %v4183 = vrot.slane %v3923, 2
        %v4184 = vsel %vm945, %v4183, %v4182
        %v4185 = vrot.slane %v3924, 1
        %v4186 = vsel %vm948, %v4185, %v4184
        %v4187 = vrot.slane %v3926, 7
        %v4188 = vsel %vm930, %v4187, %v3925
        %v4189 = vrot.slane %v3927, 6
        %v4190 = vsel %vm933, %v4189, %v4188
        %v4191 = vrot.slane %v3928, 5
        %v4192 = vsel %vm936, %v4191, %v4190
        %v4193 = vrot.slane %v3929, 4
        %v4194 = vsel %vm939, %v4193, %v4192
        %v4195 = vrot.slane %v3930, 3
        %v4196 = vsel %vm942, %v4195, %v4194
        %v4197 = vrot.slane %v3931, 2
        %v4198 = vsel %vm945, %v4197, %v4196
        %v4199 = vrot.slane %v3932, 1
        %v4200 = vsel %vm948, %v4199, %v4198
        %v4201 = vrot.slane %v3934, 7
        %v4202 = vsel %vm930, %v4201, %v3933
        %v4203 = vrot.slane %v3935, 6
        %v4204 = vsel %vm933, %v4203, %v4202
        %v4205 = vrot.slane %v3936, 5
        %v4206 = vsel %vm936, %v4205, %v4204
        %v4207 = vrot.slane %v3937, 4
        %v4208 = vsel %vm939, %v4207, %v4206
        %v4209 = vrot.slane %v3938, 3
        %v4210 = vsel %vm942, %v4209, %v4208
        %v4211 = vrot.slane %v3939, 2
        %v4212 = vsel %vm945, %v4211, %v4210
        %v4213 = vrot.slane %v3940, 1
        %v4214 = vsel %vm948, %v4213, %v4212
        %v4215 = vrot.slane %v3942, 7
        %v4216 = vsel %vm930, %v4215, %v3941
        %v4217 = vrot.slane %v3943, 6
        %v4218 = vsel %vm933, %v4217, %v4216
        %v4219 = vrot.slane %v3944, 5
        %v4220 = vsel %vm936, %v4219, %v4218
        %v4221 = vrot.slane %v3945, 4
        %v4222 = vsel %vm939, %v4221, %v4220
        %v4223 = vrot.slane %v3946, 3
        %v4224 = vsel %vm942, %v4223, %v4222
        %v4225 = vrot.slane %v3947, 2
        %v4226 = vsel %vm945, %v4225, %v4224
        %v4227 = vrot.slane %v3948, 1
        %v4228 = vsel %vm948, %v4227, %v4226
        %v4229 = vrot.slane %v3950, 7
        %v4230 = vsel %vm930, %v4229, %v3949
        %v4231 = vrot.slane %v3951, 6
        %v4232 = vsel %vm933, %v4231, %v4230
        %v4233 = vrot.slane %v3952, 5
        %v4234 = vsel %vm936, %v4233, %v4232
        %v4235 = vrot.slane %v3953, 4
        %v4236 = vsel %vm939, %v4235, %v4234
        %v4237 = vrot.slane %v3954, 3
        %v4238 = vsel %vm942, %v4237, %v4236
        %v4239 = vrot.slane %v3955, 2
        %v4240 = vsel %vm945, %v4239, %v4238
        %v4241 = vrot.slane %v3956, 1
        %v4242 = vsel %vm948, %v4241, %v4240
        %v4243 = vrot.slane %v3958, 7
        %v4244 = vsel %vm930, %v4243, %v3957
        %v4245 = vrot.slane %v3959, 6
        %v4246 = vsel %vm933, %v4245, %v4244
        %v4247 = vrot.slane %v3960, 5
        %v4248 = vsel %vm936, %v4247, %v4246
        %v4249 = vrot.slane %v3961, 4
        %v4250 = vsel %vm939, %v4249, %v4248
        %v4251 = vrot.slane %v3962, 3
        %v4252 = vsel %vm942, %v4251, %v4250
        %v4253 = vrot.slane %v3963, 2
        %v4254 = vsel %vm945, %v4253, %v4252
        %v4255 = vrot.slane %v3964, 1
        %v4256 = vsel %vm948, %v4255, %v4254
        %v4257 = vrot.slane %v3966, 7
        %v4258 = vsel %vm930, %v4257, %v3965
        %v4259 = vrot.slane %v3967, 6
        %v4260 = vsel %vm933, %v4259, %v4258
        %v4261 = vrot.slane %v3968, 5
        %v4262 = vsel %vm936, %v4261, %v4260
        %v4263 = vrot.slane %v3969, 4
        %v4264 = vsel %vm939, %v4263, %v4262
        %v4265 = vrot.slane %v3970, 3
        %v4266 = vsel %vm942, %v4265, %v4264
        %v4267 = vrot.slane %v3971, 2
        %v4268 = vsel %vm945, %v4267, %v4266
        %v4269 = vrot.slane %v3972, 1
        %v4270 = vsel %vm948, %v4269, %v4268
        %v4271 = vrot.slane %v3974, 7
        %v4272 = vsel %vm930, %v4271, %v3973
        %v4273 = vrot.slane %v3975, 6
        %v4274 = vsel %vm933, %v4273, %v4272
        %v4275 = vrot.slane %v3976, 5
        %v4276 = vsel %vm936, %v4275, %v4274
        %v4277 = vrot.slane %v3977, 4
        %v4278 = vsel %vm939, %v4277, %v4276
        %v4279 = vrot.slane %v3978, 3
        %v4280 = vsel %vm942, %v4279, %v4278
        %v4281 = vrot.slane %v3979, 2
        %v4282 = vsel %vm945, %v4281, %v4280
        %v4283 = vrot.slane %v3980, 1
        %v4284 = vsel %vm948, %v4283, %v4282
        %v4285 = vrot.slane %v3982, 7
        %v4286 = vsel %vm930, %v4285, %v3981
        %v4287 = vrot.slane %v3983, 6
        %v4288 = vsel %vm933, %v4287, %v4286
        %v4289 = vrot.slane %v3984, 5
        %v4290 = vsel %vm936, %v4289, %v4288
        %v4291 = vrot.slane %v3985, 4
        %v4292 = vsel %vm939, %v4291, %v4290
        %v4293 = vrot.slane %v3986, 3
        %v4294 = vsel %vm942, %v4293, %v4292
        %v4295 = vrot.slane %v3987, 2
        %v4296 = vsel %vm945, %v4295, %v4294
        %v4297 = vrot.slane %v3988, 1
        %v4298 = vsel %vm948, %v4297, %v4296
        %v4299 = vrot.slane %v3990, 7
        %v4300 = vsel %vm930, %v4299, %v3989
        %v4301 = vrot.slane %v3991, 6
        %v4302 = vsel %vm933, %v4301, %v4300
        %v4303 = vrot.slane %v3992, 5
        %v4304 = vsel %vm936, %v4303, %v4302
        %v4305 = vrot.slane %v3993, 4
        %v4306 = vsel %vm939, %v4305, %v4304
        %v4307 = vrot.slane %v3994, 3
        %v4308 = vsel %vm942, %v4307, %v4306
        %v4309 = vrot.slane %v3995, 2
        %v4310 = vsel %vm945, %v4309, %v4308
        %v4311 = vrot.slane %v3996, 1
        %v4312 = vsel %vm948, %v4311, %v4310
        %v4313 = vrot.slane %v3998, 7
        %v4314 = vsel %vm930, %v4313, %v3997
        %v4315 = vrot.slane %v3999, 6
        %v4316 = vsel %vm933, %v4315, %v4314
        %v4317 = vrot.slane %v4000, 5
        %v4318 = vsel %vm936, %v4317, %v4316
        %v4319 = vrot.slane %v4001, 4
        %v4320 = vsel %vm939, %v4319, %v4318
        %v4321 = vrot.slane %v4002, 3
        %v4322 = vsel %vm942, %v4321, %v4320
        %v4323 = vrot.slane %v4003, 2
        %v4324 = vsel %vm945, %v4323, %v4322
        %v4325 = vrot.slane %v4004, 1
        %v4326 = vsel %vm948, %v4325, %v4324
        %v4327 = vrot.slane %v4006, 7
        %v4328 = vsel %vm930, %v4327, %v4005
        %v4329 = vrot.slane %v4007, 6
        %v4330 = vsel %vm933, %v4329, %v4328
        %v4331 = vrot.slane %v4008, 5
        %v4332 = vsel %vm936, %v4331, %v4330
        %v4333 = vrot.slane %v4009, 4
        %v4334 = vsel %vm939, %v4333, %v4332
        %v4335 = vrot.slane %v4010, 3
        %v4336 = vsel %vm942, %v4335, %v4334
        %v4337 = vrot.slane %v4011, 2
        %v4338 = vsel %vm945, %v4337, %v4336
        %v4339 = vrot.slane %v4012, 1
        %v4340 = vsel %vm948, %v4339, %v4338
        %v4341 = vrot.slane %v4014, 7
        %v4342 = vsel %vm930, %v4341, %v4013
        %v4343 = vrot.slane %v4015, 6
        %v4344 = vsel %vm933, %v4343, %v4342
        %v4345 = vrot.slane %v4016, 5
        %v4346 = vsel %vm936, %v4345, %v4344
        %v4347 = vrot.slane %v4017, 4
        %v4348 = vsel %vm939, %v4347, %v4346
        %v4349 = vrot.slane %v4018, 3
        %v4350 = vsel %vm942, %v4349, %v4348
        %v4351 = vrot.slane %v4019, 2
        %v4352 = vsel %vm945, %v4351, %v4350
        %v4353 = vrot.slane %v4020, 1
        %v4354 = vsel %vm948, %v4353, %v4352
        %v4355 = vrot.slane %v4022, 7
        %v4356 = vsel %vm930, %v4355, %v4021
        %v4357 = vrot.slane %v4023, 6
        %v4358 = vsel %vm933, %v4357, %v4356
        %v4359 = vrot.slane %v4024, 5
        %v4360 = vsel %vm936, %v4359, %v4358
        %v4361 = vrot.slane %v4025, 4
        %v4362 = vsel %vm939, %v4361, %v4360
        %v4363 = vrot.slane %v4026, 3
        %v4364 = vsel %vm942, %v4363, %v4362
        %v4365 = vrot.slane %v4027, 2
        %v4366 = vsel %vm945, %v4365, %v4364
        %v4367 = vrot.slane %v4028, 1
        %v4368 = vsel %vm948, %v4367, %v4366
        %v4369 = vrot.slane %v4030, 7
        %v4370 = vsel %vm930, %v4369, %v4029
        %v4371 = vrot.slane %v4031, 6
        %v4372 = vsel %vm933, %v4371, %v4370
        %v4373 = vrot.slane %v4032, 5
        %v4374 = vsel %vm936, %v4373, %v4372
        %v4375 = vrot.slane %v4033, 4
        %v4376 = vsel %vm939, %v4375, %v4374
        %v4377 = vrot.slane %v4034, 3
        %v4378 = vsel %vm942, %v4377, %v4376
        %v4379 = vrot.slane %v4035, 2
        %v4380 = vsel %vm945, %v4379, %v4378
        %v4381 = vrot.slane %v4036, 1
        %v4382 = vsel %vm948, %v4381, %v4380
        %v4383 = vrot.slane %v4038, 7
        %v4384 = vsel %vm930, %v4383, %v4037
        %v4385 = vrot.slane %v4039, 6
        %v4386 = vsel %vm933, %v4385, %v4384
        %v4387 = vrot.slane %v4040, 5
        %v4388 = vsel %vm936, %v4387, %v4386
        %v4389 = vrot.slane %v4041, 4
        %v4390 = vsel %vm939, %v4389, %v4388
        %v4391 = vrot.slane %v4042, 3
        %v4392 = vsel %vm942, %v4391, %v4390
        %v4393 = vrot.slane %v4043, 2
        %v4394 = vsel %vm945, %v4393, %v4392
        %v4395 = vrot.slane %v4044, 1
        %v4396 = vsel %vm948, %v4395, %v4394
        %4397 = vrot.lane.b32.xlu0 %v4186, 48
        %v4398 = vpop.permute.xlu0 %4397
        %4399 = vrot.lane.b32.xlu0 %v4200, 48
        %v4400 = vpop.permute.xlu0 %4399
        %4401 = vrot.lane.b32.xlu0 %v4214, 48
        %v4402 = vpop.permute.xlu0 %4401
        %4403 = vrot.lane.b32.xlu0 %v4228, 48
        %v4404 = vpop.permute.xlu0 %4403
        %4405 = vrot.lane.b32.xlu0 %v4242, 48
        %v4406 = vpop.permute.xlu0 %4405
        %4407 = vrot.lane.b32.xlu0 %v4256, 48
        %v4408 = vpop.permute.xlu0 %4407
        %4409 = vrot.lane.b32.xlu0 %v4270, 48
        %v4410 = vpop.permute.xlu0 %4409
        %4411 = vrot.lane.b32.xlu0 %v4284, 48
        %v4412 = vpop.permute.xlu0 %4411
        %4413 = vrot.lane.b32.xlu0 %v4298, 48
        %v4414 = vpop.permute.xlu0 %4413
        %4415 = vrot.lane.b32.xlu0 %v4312, 48
        %v4416 = vpop.permute.xlu0 %4415
        %4417 = vrot.lane.b32.xlu0 %v4326, 48
        %v4418 = vpop.permute.xlu0 %4417
        %4419 = vrot.lane.b32.xlu0 %v4340, 48
        %v4420 = vpop.permute.xlu0 %4419
        %4421 = vrot.lane.b32.xlu0 %v4354, 48
        %v4422 = vpop.permute.xlu0 %4421
        %4423 = vrot.lane.b32.xlu0 %v4368, 48
        %v4424 = vpop.permute.xlu0 %4423
        %4425 = vrot.lane.b32.xlu0 %v4382, 48
        %v4426 = vpop.permute.xlu0 %4425
        %4427 = vrot.lane.b32.xlu0 %v4396, 48
        %v4428 = vpop.permute.xlu0 %4427
        %vm4445 = vcmask 458112
        %4446 = vst.msk [vmem:[#allocation3] sm:$0xff] %vm4445, %v4398
        %4447 = vst.msk [vmem:[#allocation3 + $0x8] sm:$0xff] %vm4445, %v4400
        %4448 = vst.msk [vmem:[#allocation3 + $0x10] sm:$0xff] %vm4445, %v4402
        %4449 = vst.msk [vmem:[#allocation3 + $0x18] sm:$0xff] %vm4445, %v4404
        %4450 = vst.msk [vmem:[#allocation3 + $0x20] sm:$0xff] %vm4445, %v4406
        %4451 = vst.msk [vmem:[#allocation3 + $0x28] sm:$0xff] %vm4445, %v4408
        %4452 = vst.msk [vmem:[#allocation3 + $0x30] sm:$0xff] %vm4445, %v4410
        %4453 = vst.msk [vmem:[#allocation3 + $0x38] sm:$0xff] %vm4445, %v4412
        %4454 = vst.msk [vmem:[#allocation3 + $0x40] sm:$0xff] %vm4445, %v4414
        %4455 = vst.msk [vmem:[#allocation3 + $0x48] sm:$0xff] %vm4445, %v4416
        %4456 = vst.msk [vmem:[#allocation3 + $0x50] sm:$0xff] %vm4445, %v4418
        %4457 = vst.msk [vmem:[#allocation3 + $0x58] sm:$0xff] %vm4445, %v4420
        %4458 = vst.msk [vmem:[#allocation3 + $0x60] sm:$0xff] %vm4445, %v4422
        %4459 = vst.msk [vmem:[#allocation3 + $0x68] sm:$0xff] %vm4445, %v4424
        %4460 = vst.msk [vmem:[#allocation3 + $0x70] sm:$0xff] %vm4445, %v4426
        %4461 = vst.msk [vmem:[#allocation3 + $0x78] sm:$0xff] %vm4445, %v4428
        %v4462 = vld [vmem:[#allocation2 + $0x7] sm:$0x1]
        %v4463 = vld [vmem:[#allocation2 + $0xf] sm:$0x1]
        %v4464 = vld [vmem:[#allocation2 + $0x17] sm:$0x1]
        %v4465 = vld [vmem:[#allocation2 + $0x1f] sm:$0x1]
        %v4466 = vld [vmem:[#allocation2 + $0x27] sm:$0x1]
        %v4467 = vld [vmem:[#allocation2 + $0x2f] sm:$0x1]
        %v4468 = vld [vmem:[#allocation2 + $0x37] sm:$0x1]
        %v4469 = vld [vmem:[#allocation2 + $0x3f] sm:$0x1]
        %v4470 = vld [vmem:[#allocation2 + $0x47] sm:$0x1]
        %v4471 = vld [vmem:[#allocation2 + $0x4f] sm:$0x1]
        %v4472 = vld [vmem:[#allocation2 + $0x57] sm:$0x1]
        %v4473 = vld [vmem:[#allocation2 + $0x5f] sm:$0x1]
        %v4474 = vld [vmem:[#allocation2 + $0x67] sm:$0x1]
        %v4475 = vld [vmem:[#allocation2 + $0x6f] sm:$0x1]
        %v4476 = vld [vmem:[#allocation2 + $0x77] sm:$0x1]
        %v4477 = vld [vmem:[#allocation2 + $0x7f] sm:$0x1]
        %v4478 = vld [vmem:[#allocation2 + $0x87] sm:$0x1]
        %v4479 = vld [vmem:[#allocation2 + $0x8f] sm:$0x1]
        %v4480 = vld [vmem:[#allocation2 + $0x97] sm:$0x1]
        %v4481 = vld [vmem:[#allocation2 + $0x9f] sm:$0x1]
        %v4482 = vld [vmem:[#allocation2 + $0xa7] sm:$0x1]
        %v4483 = vld [vmem:[#allocation2 + $0xaf] sm:$0x1]
        %v4484 = vld [vmem:[#allocation2 + $0xb7] sm:$0x1]
        %v4485 = vld [vmem:[#allocation2 + $0xbf] sm:$0x1]
        %v4486 = vld [vmem:[#allocation2 + $0xc7] sm:$0x1]
        %v4487 = vld [vmem:[#allocation2 + $0xcf] sm:$0x1]
        %v4488 = vld [vmem:[#allocation2 + $0xd7] sm:$0x1]
        %v4489 = vld [vmem:[#allocation2 + $0xdf] sm:$0x1]
        %v4490 = vld [vmem:[#allocation2 + $0xe7] sm:$0x1]
        %v4491 = vld [vmem:[#allocation2 + $0xef] sm:$0x1]
        %v4492 = vld [vmem:[#allocation2 + $0xf7] sm:$0x1]
        %v4493 = vld [vmem:[#allocation2 + $0xff] sm:$0x1]
        %v4494 = vld [vmem:[#allocation2 + $0x107] sm:$0x1]
        %v4495 = vld [vmem:[#allocation2 + $0x10f] sm:$0x1]
        %v4496 = vld [vmem:[#allocation2 + $0x117] sm:$0x1]
        %v4497 = vld [vmem:[#allocation2 + $0x11f] sm:$0x1]
        %v4498 = vld [vmem:[#allocation2 + $0x127] sm:$0x1]
        %v4499 = vld [vmem:[#allocation2 + $0x12f] sm:$0x1]
        %v4500 = vld [vmem:[#allocation2 + $0x137] sm:$0x1]
        %v4501 = vld [vmem:[#allocation2 + $0x13f] sm:$0x1]
        %v4502 = vld [vmem:[#allocation2 + $0x147] sm:$0x1]
        %v4503 = vld [vmem:[#allocation2 + $0x14f] sm:$0x1]
        %v4504 = vld [vmem:[#allocation2 + $0x157] sm:$0x1]
        %v4505 = vld [vmem:[#allocation2 + $0x15f] sm:$0x1]
        %v4506 = vld [vmem:[#allocation2 + $0x167] sm:$0x1]
        %v4507 = vld [vmem:[#allocation2 + $0x16f] sm:$0x1]
        %v4508 = vld [vmem:[#allocation2 + $0x177] sm:$0x1]
        %v4509 = vld [vmem:[#allocation2 + $0x17f] sm:$0x1]
        %v4510 = vld [vmem:[#allocation2 + $0x187] sm:$0x1]
        %v4511 = vld [vmem:[#allocation2 + $0x18f] sm:$0x1]
        %v4512 = vld [vmem:[#allocation2 + $0x197] sm:$0x1]
        %v4513 = vld [vmem:[#allocation2 + $0x19f] sm:$0x1]
        %v4514 = vld [vmem:[#allocation2 + $0x1a7] sm:$0x1]
        %v4515 = vld [vmem:[#allocation2 + $0x1af] sm:$0x1]
        %v4516 = vld [vmem:[#allocation2 + $0x1b7] sm:$0x1]
        %v4517 = vld [vmem:[#allocation2 + $0x1bf] sm:$0x1]
        %v4518 = vld [vmem:[#allocation2 + $0x1c7] sm:$0x1]
        %v4519 = vld [vmem:[#allocation2 + $0x1cf] sm:$0x1]
        %v4520 = vld [vmem:[#allocation2 + $0x1d7] sm:$0x1]
        %v4521 = vld [vmem:[#allocation2 + $0x1df] sm:$0x1]
        %v4522 = vld [vmem:[#allocation2 + $0x1e7] sm:$0x1]
        %v4523 = vld [vmem:[#allocation2 + $0x1ef] sm:$0x1]
        %v4524 = vld [vmem:[#allocation2 + $0x1f7] sm:$0x1]
        %v4525 = vld [vmem:[#allocation2 + $0x1ff] sm:$0x1]
        %v4526 = vld [vmem:[#allocation2 + $0x207] sm:$0x1]
        %v4527 = vld [vmem:[#allocation2 + $0x20f] sm:$0x1]
        %v4528 = vld [vmem:[#allocation2 + $0x217] sm:$0x1]
        %v4529 = vld [vmem:[#allocation2 + $0x21f] sm:$0x1]
        %v4530 = vld [vmem:[#allocation2 + $0x227] sm:$0x1]
        %v4531 = vld [vmem:[#allocation2 + $0x22f] sm:$0x1]
        %v4532 = vld [vmem:[#allocation2 + $0x237] sm:$0x1]
        %v4533 = vld [vmem:[#allocation2 + $0x23f] sm:$0x1]
        %v4534 = vld [vmem:[#allocation2 + $0x247] sm:$0x1]
        %v4535 = vld [vmem:[#allocation2 + $0x24f] sm:$0x1]
        %v4536 = vld [vmem:[#allocation2 + $0x257] sm:$0x1]
        %v4537 = vld [vmem:[#allocation2 + $0x25f] sm:$0x1]
        %v4538 = vld [vmem:[#allocation2 + $0x267] sm:$0x1]
        %v4539 = vld [vmem:[#allocation2 + $0x26f] sm:$0x1]
        %v4540 = vld [vmem:[#allocation2 + $0x277] sm:$0x1]
        %v4541 = vld [vmem:[#allocation2 + $0x27f] sm:$0x1]
        %v4542 = vld [vmem:[#allocation2 + $0x287] sm:$0x1]
        %v4543 = vld [vmem:[#allocation2 + $0x28f] sm:$0x1]
        %v4544 = vld [vmem:[#allocation2 + $0x297] sm:$0x1]
        %v4545 = vld [vmem:[#allocation2 + $0x29f] sm:$0x1]
        %v4546 = vld [vmem:[#allocation2 + $0x2a7] sm:$0x1]
        %v4547 = vld [vmem:[#allocation2 + $0x2af] sm:$0x1]
        %v4548 = vld [vmem:[#allocation2 + $0x2b7] sm:$0x1]
        %v4549 = vld [vmem:[#allocation2 + $0x2bf] sm:$0x1]
        %v4550 = vld [vmem:[#allocation2 + $0x2c7] sm:$0x1]
        %v4551 = vld [vmem:[#allocation2 + $0x2cf] sm:$0x1]
        %v4552 = vld [vmem:[#allocation2 + $0x2d7] sm:$0x1]
        %v4553 = vld [vmem:[#allocation2 + $0x2df] sm:$0x1]
        %v4554 = vld [vmem:[#allocation2 + $0x2e7] sm:$0x1]
        %v4555 = vld [vmem:[#allocation2 + $0x2ef] sm:$0x1]
        %v4556 = vld [vmem:[#allocation2 + $0x2f7] sm:$0x1]
        %v4557 = vld [vmem:[#allocation2 + $0x2ff] sm:$0x1]
        %v4558 = vld [vmem:[#allocation2 + $0x307] sm:$0x1]
        %v4559 = vld [vmem:[#allocation2 + $0x30f] sm:$0x1]
        %v4560 = vld [vmem:[#allocation2 + $0x317] sm:$0x1]
        %v4561 = vld [vmem:[#allocation2 + $0x31f] sm:$0x1]
        %v4562 = vld [vmem:[#allocation2 + $0x327] sm:$0x1]
        %v4563 = vld [vmem:[#allocation2 + $0x32f] sm:$0x1]
        %v4564 = vld [vmem:[#allocation2 + $0x337] sm:$0x1]
        %v4565 = vld [vmem:[#allocation2 + $0x33f] sm:$0x1]
        %v4566 = vld [vmem:[#allocation2 + $0x347] sm:$0x1]
        %v4567 = vld [vmem:[#allocation2 + $0x34f] sm:$0x1]
        %v4568 = vld [vmem:[#allocation2 + $0x357] sm:$0x1]
        %v4569 = vld [vmem:[#allocation2 + $0x35f] sm:$0x1]
        %v4570 = vld [vmem:[#allocation2 + $0x367] sm:$0x1]
        %v4571 = vld [vmem:[#allocation2 + $0x36f] sm:$0x1]
        %v4572 = vld [vmem:[#allocation2 + $0x377] sm:$0x1]
        %v4573 = vld [vmem:[#allocation2 + $0x37f] sm:$0x1]
        %v4574 = vld [vmem:[#allocation2 + $0x387] sm:$0x1]
        %v4575 = vld [vmem:[#allocation2 + $0x38f] sm:$0x1]
        %v4576 = vld [vmem:[#allocation2 + $0x397] sm:$0x1]
        %v4577 = vld [vmem:[#allocation2 + $0x39f] sm:$0x1]
        %v4578 = vld [vmem:[#allocation2 + $0x3a7] sm:$0x1]
        %v4579 = vld [vmem:[#allocation2 + $0x3af] sm:$0x1]
        %v4580 = vld [vmem:[#allocation2 + $0x3b7] sm:$0x1]
        %v4581 = vld [vmem:[#allocation2 + $0x3bf] sm:$0x1]
        %v4582 = vld [vmem:[#allocation2 + $0x3c7] sm:$0x1]
        %v4583 = vld [vmem:[#allocation2 + $0x3cf] sm:$0x1]
        %v4584 = vld [vmem:[#allocation2 + $0x3d7] sm:$0x1]
        %v4585 = vld [vmem:[#allocation2 + $0x3df] sm:$0x1]
        %v4586 = vld [vmem:[#allocation2 + $0x3e7] sm:$0x1]
        %v4587 = vld [vmem:[#allocation2 + $0x3ef] sm:$0x1]
        %v4588 = vld [vmem:[#allocation2 + $0x3f7] sm:$0x1]
        %v4589 = vld [vmem:[#allocation2 + $0x3ff] sm:$0x1]
        %v4718 = vrot.slane %v4463, 7
        %v4719 = vsel %vm930, %v4718, %v4462
        %v4720 = vrot.slane %v4464, 6
        %v4721 = vsel %vm933, %v4720, %v4719
        %v4722 = vrot.slane %v4465, 5
        %v4723 = vsel %vm936, %v4722, %v4721
        %v4724 = vrot.slane %v4466, 4
        %v4725 = vsel %vm939, %v4724, %v4723
        %v4726 = vrot.slane %v4467, 3
        %v4727 = vsel %vm942, %v4726, %v4725
        %v4728 = vrot.slane %v4468, 2
        %v4729 = vsel %vm945, %v4728, %v4727
        %v4730 = vrot.slane %v4469, 1
        %v4731 = vsel %vm948, %v4730, %v4729
        %v4732 = vrot.slane %v4471, 7
        %v4733 = vsel %vm930, %v4732, %v4470
        %v4734 = vrot.slane %v4472, 6
        %v4735 = vsel %vm933, %v4734, %v4733
        %v4736 = vrot.slane %v4473, 5
        %v4737 = vsel %vm936, %v4736, %v4735
        %v4738 = vrot.slane %v4474, 4
        %v4739 = vsel %vm939, %v4738, %v4737
        %v4740 = vrot.slane %v4475, 3
        %v4741 = vsel %vm942, %v4740, %v4739
        %v4742 = vrot.slane %v4476, 2
        %v4743 = vsel %vm945, %v4742, %v4741
        %v4744 = vrot.slane %v4477, 1
        %v4745 = vsel %vm948, %v4744, %v4743
        %v4746 = vrot.slane %v4479, 7
        %v4747 = vsel %vm930, %v4746, %v4478
        %v4748 = vrot.slane %v4480, 6
        %v4749 = vsel %vm933, %v4748, %v4747
        %v4750 = vrot.slane %v4481, 5
        %v4751 = vsel %vm936, %v4750, %v4749
        %v4752 = vrot.slane %v4482, 4
        %v4753 = vsel %vm939, %v4752, %v4751
        %v4754 = vrot.slane %v4483, 3
        %v4755 = vsel %vm942, %v4754, %v4753
        %v4756 = vrot.slane %v4484, 2
        %v4757 = vsel %vm945, %v4756, %v4755
        %v4758 = vrot.slane %v4485, 1
        %v4759 = vsel %vm948, %v4758, %v4757
        %v4760 = vrot.slane %v4487, 7
        %v4761 = vsel %vm930, %v4760, %v4486
        %v4762 = vrot.slane %v4488, 6
        %v4763 = vsel %vm933, %v4762, %v4761
        %v4764 = vrot.slane %v4489, 5
        %v4765 = vsel %vm936, %v4764, %v4763
        %v4766 = vrot.slane %v4490, 4
        %v4767 = vsel %vm939, %v4766, %v4765
        %v4768 = vrot.slane %v4491, 3
        %v4769 = vsel %vm942, %v4768, %v4767
        %v4770 = vrot.slane %v4492, 2
        %v4771 = vsel %vm945, %v4770, %v4769
        %v4772 = vrot.slane %v4493, 1
        %v4773 = vsel %vm948, %v4772, %v4771
        %v4774 = vrot.slane %v4495, 7
        %v4775 = vsel %vm930, %v4774, %v4494
        %v4776 = vrot.slane %v4496, 6
        %v4777 = vsel %vm933, %v4776, %v4775
        %v4778 = vrot.slane %v4497, 5
        %v4779 = vsel %vm936, %v4778, %v4777
        %v4780 = vrot.slane %v4498, 4
        %v4781 = vsel %vm939, %v4780, %v4779
        %v4782 = vrot.slane %v4499, 3
        %v4783 = vsel %vm942, %v4782, %v4781
        %v4784 = vrot.slane %v4500, 2
        %v4785 = vsel %vm945, %v4784, %v4783
        %v4786 = vrot.slane %v4501, 1
        %v4787 = vsel %vm948, %v4786, %v4785
        %v4788 = vrot.slane %v4503, 7
        %v4789 = vsel %vm930, %v4788, %v4502
        %v4790 = vrot.slane %v4504, 6
        %v4791 = vsel %vm933, %v4790, %v4789
        %v4792 = vrot.slane %v4505, 5
        %v4793 = vsel %vm936, %v4792, %v4791
        %v4794 = vrot.slane %v4506, 4
        %v4795 = vsel %vm939, %v4794, %v4793
        %v4796 = vrot.slane %v4507, 3
        %v4797 = vsel %vm942, %v4796, %v4795
        %v4798 = vrot.slane %v4508, 2
        %v4799 = vsel %vm945, %v4798, %v4797
        %v4800 = vrot.slane %v4509, 1
        %v4801 = vsel %vm948, %v4800, %v4799
        %v4802 = vrot.slane %v4511, 7
        %v4803 = vsel %vm930, %v4802, %v4510
        %v4804 = vrot.slane %v4512, 6
        %v4805 = vsel %vm933, %v4804, %v4803
        %v4806 = vrot.slane %v4513, 5
        %v4807 = vsel %vm936, %v4806, %v4805
        %v4808 = vrot.slane %v4514, 4
        %v4809 = vsel %vm939, %v4808, %v4807
        %v4810 = vrot.slane %v4515, 3
        %v4811 = vsel %vm942, %v4810, %v4809
        %v4812 = vrot.slane %v4516, 2
        %v4813 = vsel %vm945, %v4812, %v4811
        %v4814 = vrot.slane %v4517, 1
        %v4815 = vsel %vm948, %v4814, %v4813
        %v4816 = vrot.slane %v4519, 7
        %v4817 = vsel %vm930, %v4816, %v4518
        %v4818 = vrot.slane %v4520, 6
        %v4819 = vsel %vm933, %v4818, %v4817
        %v4820 = vrot.slane %v4521, 5
        %v4821 = vsel %vm936, %v4820, %v4819
        %v4822 = vrot.slane %v4522, 4
        %v4823 = vsel %vm939, %v4822, %v4821
        %v4824 = vrot.slane %v4523, 3
        %v4825 = vsel %vm942, %v4824, %v4823
        %v4826 = vrot.slane %v4524, 2
        %v4827 = vsel %vm945, %v4826, %v4825
        %v4828 = vrot.slane %v4525, 1
        %v4829 = vsel %vm948, %v4828, %v4827
        %v4830 = vrot.slane %v4527, 7
        %v4831 = vsel %vm930, %v4830, %v4526
        %v4832 = vrot.slane %v4528, 6
        %v4833 = vsel %vm933, %v4832, %v4831
        %v4834 = vrot.slane %v4529, 5
        %v4835 = vsel %vm936, %v4834, %v4833
        %v4836 = vrot.slane %v4530, 4
        %v4837 = vsel %vm939, %v4836, %v4835
        %v4838 = vrot.slane %v4531, 3
        %v4839 = vsel %vm942, %v4838, %v4837
        %v4840 = vrot.slane %v4532, 2
        %v4841 = vsel %vm945, %v4840, %v4839
        %v4842 = vrot.slane %v4533, 1
        %v4843 = vsel %vm948, %v4842, %v4841
        %v4844 = vrot.slane %v4535, 7
        %v4845 = vsel %vm930, %v4844, %v4534
        %v4846 = vrot.slane %v4536, 6
        %v4847 = vsel %vm933, %v4846, %v4845
        %v4848 = vrot.slane %v4537, 5
        %v4849 = vsel %vm936, %v4848, %v4847
        %v4850 = vrot.slane %v4538, 4
        %v4851 = vsel %vm939, %v4850, %v4849
        %v4852 = vrot.slane %v4539, 3
        %v4853 = vsel %vm942, %v4852, %v4851
        %v4854 = vrot.slane %v4540, 2
        %v4855 = vsel %vm945, %v4854, %v4853
        %v4856 = vrot.slane %v4541, 1
        %v4857 = vsel %vm948, %v4856, %v4855
        %v4858 = vrot.slane %v4543, 7
        %v4859 = vsel %vm930, %v4858, %v4542
        %v4860 = vrot.slane %v4544, 6
        %v4861 = vsel %vm933, %v4860, %v4859
        %v4862 = vrot.slane %v4545, 5
        %v4863 = vsel %vm936, %v4862, %v4861
        %v4864 = vrot.slane %v4546, 4
        %v4865 = vsel %vm939, %v4864, %v4863
        %v4866 = vrot.slane %v4547, 3
        %v4867 = vsel %vm942, %v4866, %v4865
        %v4868 = vrot.slane %v4548, 2
        %v4869 = vsel %vm945, %v4868, %v4867
        %v4870 = vrot.slane %v4549, 1
        %v4871 = vsel %vm948, %v4870, %v4869
        %v4872 = vrot.slane %v4551, 7
        %v4873 = vsel %vm930, %v4872, %v4550
        %v4874 = vrot.slane %v4552, 6
        %v4875 = vsel %vm933, %v4874, %v4873
        %v4876 = vrot.slane %v4553, 5
        %v4877 = vsel %vm936, %v4876, %v4875
        %v4878 = vrot.slane %v4554, 4
        %v4879 = vsel %vm939, %v4878, %v4877
        %v4880 = vrot.slane %v4555, 3
        %v4881 = vsel %vm942, %v4880, %v4879
        %v4882 = vrot.slane %v4556, 2
        %v4883 = vsel %vm945, %v4882, %v4881
        %v4884 = vrot.slane %v4557, 1
        %v4885 = vsel %vm948, %v4884, %v4883
        %v4886 = vrot.slane %v4559, 7
        %v4887 = vsel %vm930, %v4886, %v4558
        %v4888 = vrot.slane %v4560, 6
        %v4889 = vsel %vm933, %v4888, %v4887
        %v4890 = vrot.slane %v4561, 5
        %v4891 = vsel %vm936, %v4890, %v4889
        %v4892 = vrot.slane %v4562, 4
        %v4893 = vsel %vm939, %v4892, %v4891
        %v4894 = vrot.slane %v4563, 3
        %v4895 = vsel %vm942, %v4894, %v4893
        %v4896 = vrot.slane %v4564, 2
        %v4897 = vsel %vm945, %v4896, %v4895
        %v4898 = vrot.slane %v4565, 1
        %v4899 = vsel %vm948, %v4898, %v4897
        %v4900 = vrot.slane %v4567, 7
        %v4901 = vsel %vm930, %v4900, %v4566
        %v4902 = vrot.slane %v4568, 6
        %v4903 = vsel %vm933, %v4902, %v4901
        %v4904 = vrot.slane %v4569, 5
        %v4905 = vsel %vm936, %v4904, %v4903
        %v4906 = vrot.slane %v4570, 4
        %v4907 = vsel %vm939, %v4906, %v4905
        %v4908 = vrot.slane %v4571, 3
        %v4909 = vsel %vm942, %v4908, %v4907
        %v4910 = vrot.slane %v4572, 2
        %v4911 = vsel %vm945, %v4910, %v4909
        %v4912 = vrot.slane %v4573, 1
        %v4913 = vsel %vm948, %v4912, %v4911
        %v4914 = vrot.slane %v4575, 7
        %v4915 = vsel %vm930, %v4914, %v4574
        %v4916 = vrot.slane %v4576, 6
        %v4917 = vsel %vm933, %v4916, %v4915
        %v4918 = vrot.slane %v4577, 5
        %v4919 = vsel %vm936, %v4918, %v4917
        %v4920 = vrot.slane %v4578, 4
        %v4921 = vsel %vm939, %v4920, %v4919
        %v4922 = vrot.slane %v4579, 3
        %v4923 = vsel %vm942, %v4922, %v4921
        %v4924 = vrot.slane %v4580, 2
        %v4925 = vsel %vm945, %v4924, %v4923
        %v4926 = vrot.slane %v4581, 1
        %v4927 = vsel %vm948, %v4926, %v4925
        %v4928 = vrot.slane %v4583, 7
        %v4929 = vsel %vm930, %v4928, %v4582
        %v4930 = vrot.slane %v4584, 6
        %v4931 = vsel %vm933, %v4930, %v4929
        %v4932 = vrot.slane %v4585, 5
        %v4933 = vsel %vm936, %v4932, %v4931
        %v4934 = vrot.slane %v4586, 4
        %v4935 = vsel %vm939, %v4934, %v4933
        %v4936 = vrot.slane %v4587, 3
        %v4937 = vsel %vm942, %v4936, %v4935
        %v4938 = vrot.slane %v4588, 2
        %v4939 = vsel %vm945, %v4938, %v4937
        %v4940 = vrot.slane %v4589, 1
        %v4941 = vsel %vm948, %v4940, %v4939
        %4942 = vrot.lane.b32.xlu0 %v4731, 56
        %v4943 = vpop.permute.xlu0 %4942
        %4944 = vrot.lane.b32.xlu0 %v4745, 56
        %v4945 = vpop.permute.xlu0 %4944
        %4946 = vrot.lane.b32.xlu0 %v4759, 56
        %v4947 = vpop.permute.xlu0 %4946
        %4948 = vrot.lane.b32.xlu0 %v4773, 56
        %v4949 = vpop.permute.xlu0 %4948
        %4950 = vrot.lane.b32.xlu0 %v4787, 56
        %v4951 = vpop.permute.xlu0 %4950
        %4952 = vrot.lane.b32.xlu0 %v4801, 56
        %v4953 = vpop.permute.xlu0 %4952
        %4954 = vrot.lane.b32.xlu0 %v4815, 56
        %v4955 = vpop.permute.xlu0 %4954
        %4956 = vrot.lane.b32.xlu0 %v4829, 56
        %v4957 = vpop.permute.xlu0 %4956
        %4958 = vrot.lane.b32.xlu0 %v4843, 56
        %v4959 = vpop.permute.xlu0 %4958
        %4960 = vrot.lane.b32.xlu0 %v4857, 56
        %v4961 = vpop.permute.xlu0 %4960
        %4962 = vrot.lane.b32.xlu0 %v4871, 56
        %v4963 = vpop.permute.xlu0 %4962
        %4964 = vrot.lane.b32.xlu0 %v4885, 56
        %v4965 = vpop.permute.xlu0 %4964
        %4966 = vrot.lane.b32.xlu0 %v4899, 56
        %v4967 = vpop.permute.xlu0 %4966
        %4968 = vrot.lane.b32.xlu0 %v4913, 56
        %v4969 = vpop.permute.xlu0 %4968
        %4970 = vrot.lane.b32.xlu0 %v4927, 56
        %v4971 = vpop.permute.xlu0 %4970
        %4972 = vrot.lane.b32.xlu0 %v4941, 56
        %v4973 = vpop.permute.xlu0 %4972
        %vm4990 = vcmask 523712
        %4991 = vst.msk [vmem:[#allocation3] sm:$0xff] %vm4990, %v4943
        %4992 = vst.msk [vmem:[#allocation3 + $0x8] sm:$0xff] %vm4990, %v4945
        %4993 = vst.msk [vmem:[#allocation3 + $0x10] sm:$0xff] %vm4990, %v4947
        %4994 = vst.msk [vmem:[#allocation3 + $0x18] sm:$0xff] %vm4990, %v4949
        %4995 = vst.msk [vmem:[#allocation3 + $0x20] sm:$0xff] %vm4990, %v4951
        %4996 = vst.msk [vmem:[#allocation3 + $0x28] sm:$0xff] %vm4990, %v4953
        %4997 = vst.msk [vmem:[#allocation3 + $0x30] sm:$0xff] %vm4990, %v4955
        %4998 = vst.msk [vmem:[#allocation3 + $0x38] sm:$0xff] %vm4990, %v4957
        %4999 = vst.msk [vmem:[#allocation3 + $0x40] sm:$0xff] %vm4990, %v4959
        %5000 = vst.msk [vmem:[#allocation3 + $0x48] sm:$0xff] %vm4990, %v4961
        %5001 = vst.msk [vmem:[#allocation3 + $0x50] sm:$0xff] %vm4990, %v4963
        %5002 = vst.msk [vmem:[#allocation3 + $0x58] sm:$0xff] %vm4990, %v4965
        %5003 = vst.msk [vmem:[#allocation3 + $0x60] sm:$0xff] %vm4990, %v4967
        %5004 = vst.msk [vmem:[#allocation3 + $0x68] sm:$0xff] %vm4990, %v4969
        %5005 = vst.msk [vmem:[#allocation3 + $0x70] sm:$0xff] %vm4990, %v4971
        %5006 = vst.msk [vmem:[#allocation3 + $0x78] sm:$0xff] %vm4990, %v4973
        %vm5007 = vcmask 523264
        %5008 = vst.msk [vmem:[#allocation3 + $0x52] sm:$0xff] %vm5007, 0.0
        %5009 = vst.msk [vmem:[#allocation3 + $0x5a] sm:$0xff] %vm5007, 0.0
        %5010 = vst.msk [vmem:[#allocation3 + $0x62] sm:$0xff] %vm5007, 0.0
        %5011 = vst.msk [vmem:[#allocation3 + $0x6a] sm:$0xff] %vm5007, 0.0
        %5012 = vst.msk [vmem:[#allocation3 + $0x72] sm:$0xff] %vm5007, 0.0
        %vm5013 = vcmask 521216
        %5014 = vst.msk [vmem:[#allocation3 + $0x7a] sm:$0x3f] %vm5013, 0.0
        %vm5015 = vcmask 516096
        %5016 = vst.msk [vmem:[#allocation3 + $0x51] sm:$0x1] %vm5015, 1.0
        %v5017 = vld [vmem:[#allocation3] sm:$0xff]
        %v5018 = vld [vmem:[#allocation3 + $0x8] sm:$0xff]
        %v5019 = vld [vmem:[#allocation3 + $0x10] sm:$0xff]
        %v5020 = vld [vmem:[#allocation3 + $0x18] sm:$0xff]
        %v5021 = vld [vmem:[#allocation3 + $0x20] sm:$0xff]
        %v5022 = vld [vmem:[#allocation3 + $0x28] sm:$0xff]
        %v5023 = vld [vmem:[#allocation3 + $0x30] sm:$0xff]
        %v5024 = vld [vmem:[#allocation3 + $0x38] sm:$0xff]
        %v5025 = vld [vmem:[#allocation3 + $0x40] sm:$0xff]
        %v5026 = vld [vmem:[#allocation3 + $0x48] sm:$0xff]
        %v5027 = vld [vmem:[#allocation3 + $0x50] sm:$0xff]
        %v5028 = vld [vmem:[#allocation3 + $0x58] sm:$0xff]
        %v5029 = vld [vmem:[#allocation3 + $0x60] sm:$0xff]
        %v5030 = vld [vmem:[#allocation3 + $0x68] sm:$0xff]
        %v5031 = vld [vmem:[#allocation3 + $0x70] sm:$0xff]
        %v5032 = vld [vmem:[#allocation3 + $0x78] sm:$0xff]
        %5033 = vxpose.xlu0.b32.start [1/16] %v5017, 128
        %5034 = vxpose.xlu0.b32.cont [2/16] %v5018, 128
        %5035 = vxpose.xlu0.b32.cont [3/16] %v5019, 128
        %5036 = vxpose.xlu0.b32.cont [4/16] %v5020, 128
        %5037 = vxpose.xlu0.b32.cont [5/16] %v5021, 128
        %5038 = vxpose.xlu0.b32.cont [6/16] %v5022, 128
        %5039 = vxpose.xlu0.b32.cont [7/16] %v5023, 128
        %5040 = vxpose.xlu0.b32.cont [8/16] %v5024, 128
        %5041 = vxpose.xlu0.b32.cont [9/16] %v5025, 128
        %5042 = vxpose.xlu0.b32.cont [10/16] %v5026, 128
        %5043 = vxpose.xlu0.b32.cont [11/16] %v5027, 128
        %5044 = vxpose.xlu0.b32.cont [12/16] %v5028, 128
        %5045 = vxpose.xlu0.b32.cont [13/16] %v5029, 128
        %5046 = vxpose.xlu0.b32.cont [14/16] %v5030, 128
        %5047 = vxpose.xlu0.b32.cont [15/16] %v5031, 128
        %5048 = vxpose.xlu0.b32.end [16/16] %v5032, 128
        %v5049 = vpop.trf.xlu0
        %v5050 = vpop.trf.xlu0
        %v5051 = vpop.trf.xlu0
        %v5052 = vpop.trf.xlu0
        %v5053 = vpop.trf.xlu0
        %v5054 = vpop.trf.xlu0
        %v5055 = vpop.trf.xlu0
        %v5056 = vpop.trf.xlu0
        %v5057 = vpop.trf.xlu0
        %v5058 = vpop.trf.xlu0
        %v5059 = vpop.trf.xlu0
        %v5060 = vpop.trf.xlu0
        %v5061 = vpop.trf.xlu0
        %v5062 = vpop.trf.xlu0
        %v5063 = vpop.trf.xlu0
        %v5064 = vpop.trf.xlu0
        %v5065 = vpack.c.bf16 %v5050, %v5049
        %v5066 = vpack.c.bf16 %v5052, %v5051
        %v5067 = vpack.c.bf16 %v5054, %v5053
        %v5068 = vpack.c.bf16 %v5056, %v5055
        %v5069 = vld [vmem:[%s1] sm:$0xff]
        %v5070 = vld [vmem:[%s1 + $0x8] sm:$0xff]
        %v5071 = vld [vmem:[%s1 + $0x10] sm:$0xff]
        %v5072 = vld [vmem:[%s1 + $0x18] sm:$0xff]
        %v5073 = vld [vmem:[%s1 + $0x20] sm:$0xff]
        %v5074 = vld [vmem:[%s1 + $0x28] sm:$0xff]
        %v5075 = vld [vmem:[%s1 + $0x30] sm:$0xff]
        %v5076 = vld [vmem:[%s1 + $0x38] sm:$0xff]
        %v5077 = vld [vmem:[%s1 + $0x40] sm:$0xff]
        %v5078 = vld [vmem:[%s1 + $0x48] sm:$0xff]
        %v5079 = vld [vmem:[%s1 + $0x50] sm:$0xff]
        %v5080 = vld [vmem:[%s1 + $0x58] sm:$0xff]
        %v5081 = vld [vmem:[%s1 + $0x60] sm:$0xff]
        %v5082 = vld [vmem:[%s1 + $0x68] sm:$0xff]
        %v5083 = vld [vmem:[%s1 + $0x70] sm:$0xff]
        %v5084 = vld [vmem:[%s1 + $0x78] sm:$0xff]
        %v5101 = vunpack.c.l.b16 %v5069
        %v5102 = vunpack.c.h.b16 %v5069
        %v5103 = vunpack.c.l.b16 %v5070
        %v5104 = vunpack.c.h.b16 %v5070
        %v5105 = vunpack.c.l.b16 %v5071
        %v5106 = vunpack.c.h.b16 %v5071
        %v5107 = vunpack.c.l.b16 %v5072
        %v5108 = vunpack.c.h.b16 %v5072
        %v5109 = vunpack.c.l.b16 %v5073
        %v5110 = vunpack.c.h.b16 %v5073
        %v5111 = vunpack.c.l.b16 %v5074
        %v5112 = vunpack.c.h.b16 %v5074
        %v5113 = vunpack.c.l.b16 %v5075
        %v5114 = vunpack.c.h.b16 %v5075
        %v5115 = vunpack.c.l.b16 %v5076
        %v5116 = vunpack.c.h.b16 %v5076
        %v5117 = vunpack.c.l.b16 %v5077
        %v5118 = vunpack.c.h.b16 %v5077
        %v5119 = vunpack.c.l.b16 %v5078
        %v5120 = vunpack.c.h.b16 %v5078
        %v5121 = vunpack.c.l.b16 %v5079
        %v5122 = vunpack.c.h.b16 %v5079
        %v5123 = vunpack.c.l.b16 %v5080
        %v5124 = vunpack.c.h.b16 %v5080
        %v5125 = vunpack.c.l.b16 %v5081
        %v5126 = vunpack.c.h.b16 %v5081
        %v5127 = vunpack.c.l.b16 %v5082
        %v5128 = vunpack.c.h.b16 %v5082
        %v5129 = vunpack.c.l.b16 %v5083
        %v5130 = vunpack.c.h.b16 %v5083
        %v5131 = vunpack.c.l.b16 %v5084
        %v5132 = vunpack.c.h.b16 %v5084
        %v5133 = vpack.c.b16 %v5103, %v5101
        %v5134 = vpack.c.b16 %v5104, %v5102
        %v5135 = vpack.c.b16 %v5107, %v5105
        %v5136 = vpack.c.b16 %v5108, %v5106
        %v5137 = vpack.c.b16 %v5111, %v5109
        %v5138 = vpack.c.b16 %v5112, %v5110
        %v5139 = vpack.c.b16 %v5115, %v5113
        %v5140 = vpack.c.b16 %v5116, %v5114
        %v5141 = vpack.c.b16 %v5119, %v5117
        %v5142 = vpack.c.b16 %v5120, %v5118
        %v5143 = vpack.c.b16 %v5123, %v5121
        %v5144 = vpack.c.b16 %v5124, %v5122
        %v5145 = vpack.c.b16 %v5127, %v5125
        %v5146 = vpack.c.b16 %v5128, %v5126
        %v5147 = vpack.c.b16 %v5131, %v5129
        %v5148 = vpack.c.b16 %v5132, %v5130
        %5165 = vmatpush.bf16.msra.mxu0 %v5147
        %5166 = vmatpush.bf16.msra.mxu0 %v5145
        %5167 = vmatpush.bf16.msra.mxu0 %v5143
        %5168 = vmatpush.bf16.msra.mxu0 %v5141
        %5169 = vmatpush.bf16.msra.mxu0 %v5139
        %5170 = vmatpush.bf16.msra.mxu0 %v5137
        %5171 = vmatpush.bf16.msra.mxu0 %v5135
        %5172 = vmatpush.bf16.msra.mxu0 %v5133
        %5173 = vmatmul.bf16.gmra.mxu0 %v5065
        %v5174 = vpop.f32.mrf.mxu0
        %v5175 = vadd.f32 0.0, %v5174
        %v5176 = vpop.f32.mrf.mxu0
        %v5177 = vadd.f32 0.0, %v5176
        %5178 = vmatmul.bf16.gmra.mxu0 %v5066
        %v5179 = vpop.f32.mrf.mxu0
        %v5180 = vadd.f32 0.0, %v5179
        %v5181 = vpop.f32.mrf.mxu0
        %v5182 = vadd.f32 0.0, %v5181
        %5183 = vmatmul.bf16.gmra.mxu0 %v5067
        %v5184 = vpop.f32.mrf.mxu0
        %v5185 = vadd.f32 0.0, %v5184
        %v5186 = vpop.f32.mrf.mxu0
        %v5187 = vadd.f32 0.0, %v5186
        %5188 = vmatmul.bf16.gmra.mxu0 %v5068
        %v5189 = vpop.f32.mrf.mxu0
        %v5190 = vadd.f32 0.0, %v5189
        %v5191 = vpop.f32.mrf.mxu0
        %v5192 = vadd.f32 0.0, %v5191
        %5193 = vdwg.mxu0
        %5194 = vmatpush.bf16.msra.mxu0 %v5148
        %5195 = vmatpush.bf16.msra.mxu0 %v5146
        %5196 = vmatpush.bf16.msra.mxu0 %v5144
        %5197 = vmatpush.bf16.msra.mxu0 %v5142
        %5198 = vmatpush.bf16.msra.mxu0 %v5140
        %5199 = vmatpush.bf16.msra.mxu0 %v5138
        %5200 = vmatpush.bf16.msra.mxu0 %v5136
        %5201 = vmatpush.bf16.msra.mxu0 %v5134
        %5202 = vmatmul.bf16.gmra.mxu0 %v5065
        %v5203 = vpop.f32.mrf.mxu0
        %v5204 = vadd.f32 0.0, %v5203
        %v5205 = vpop.f32.mrf.mxu0
        %v5206 = vadd.f32 0.0, %v5205
        %5207 = vmatmul.bf16.gmra.mxu0 %v5066
        %v5208 = vpop.f32.mrf.mxu0
        %v5209 = vadd.f32 0.0, %v5208
        %v5210 = vpop.f32.mrf.mxu0
        %v5211 = vadd.f32 0.0, %v5210
        %5212 = vmatmul.bf16.gmra.mxu0 %v5067
        %v5213 = vpop.f32.mrf.mxu0
        %v5214 = vadd.f32 0.0, %v5213
        %v5215 = vpop.f32.mrf.mxu0
        %v5216 = vadd.f32 0.0, %v5215
        %5217 = vmatmul.bf16.gmra.mxu0 %v5068
        %v5218 = vpop.f32.mrf.mxu0
        %v5219 = vadd.f32 0.0, %v5218
        %v5220 = vpop.f32.mrf.mxu0
        %v5221 = vadd.f32 0.0, %v5220
        %5222 = vdwg.mxu0
        %v5223 = vmax.f32 %v5175, 0.0
        %v5224 = vmax.f32 %v5204, 0.0
        %v5225 = vmax.f32 %v5177, 0.0
        %v5226 = vmax.f32 %v5206, 0.0
        %v5227 = vmax.f32 %v5180, 0.0
        %v5228 = vmax.f32 %v5209, 0.0
        %v5229 = vmax.f32 %v5182, 0.0
        %v5230 = vmax.f32 %v5211, 0.0
        %v5231 = vmax.f32 %v5185, 0.0
        %v5232 = vmax.f32 %v5214, 0.0
        %v5233 = vmax.f32 %v5187, 0.0
        %v5234 = vmax.f32 %v5216, 0.0
        %v5235 = vmax.f32 %v5190, 0.0
        %v5236 = vmax.f32 %v5219, 0.0
        %v5237 = vmax.f32 %v5192, 0.0
        %v5238 = vmax.f32 %v5221, 0.0
        %5239 = vst [vmem:[%s136] sm:$0xff] %v5223
        %5240 = vst [vmem:[%s136 + $0x8] sm:$0xff] %v5224
        %5241 = vst [vmem:[%s136 + $0x10] sm:$0xff] %v5225
        %5242 = vst [vmem:[%s136 + $0x18] sm:$0xff] %v5226
        %5243 = vst [vmem:[%s136 + $0x20] sm:$0xff] %v5227
        %5244 = vst [vmem:[%s136 + $0x28] sm:$0xff] %v5228
        %5245 = vst [vmem:[%s136 + $0x30] sm:$0xff] %v5229
        %5246 = vst [vmem:[%s136 + $0x38] sm:$0xff] %v5230
        %5247 = vst [vmem:[%s136 + $0x40] sm:$0xff] %v5231
        %5248 = vst [vmem:[%s136 + $0x48] sm:$0xff] %v5232
        %5249 = vst [vmem:[%s136 + $0x50] sm:$0xff] %v5233
        %5250 = vst [vmem:[%s136 + $0x58] sm:$0xff] %v5234
        %5251 = vst [vmem:[%s136 + $0x60] sm:$0xff] %v5235
        %5252 = vst [vmem:[%s136 + $0x68] sm:$0xff] %v5236
        %5253 = vst [vmem:[%s136 + $0x70] sm:$0xff] %v5237
        %5254 = vst [vmem:[%s136 + $0x78] sm:$0xff] %v5238
        %s5255 = sand.u32 %s71, 1
        %s5256 = scalar_lea.sflag [#allocation5], %s5255
        %s5257 = sand.u32 %s71, 1
        %s5258 = smul.addr %s5257, 128
        %s5259 = scalar_lea.vmem [#allocation4], %s5258
        // Predicated region
        $region29: #{conv_layer_forward.1} parent=27 // pred_check
          %p5260 = pneg %p81
        $region30: #{conv_layer_forward.1} parent=27 // pred_check_branch
          %5262 = sbr.rel (%p5260) target = $region32
        $region31: #{conv_layer_forward.1} parent=27 // pred_region
          %5264 = vsyncadd %s5256, 0
          %s5265 = smul.addr %s16, 16
          %s5266 = smul.addr %s5265, 8
          %s5267 = scalar_lea.hbm %s2, %s5266
          %s5268 = sshll.u32 %s5259, 4
          %s5269 = int_to_ptr.vmem [resolvable:$true] %s5268
          %s5270 = sshll.u32 %s5267, 4
          %s5271 = int_to_ptr.hbm [resolvable:$true] %s5270
          %5276 = dma.vmem_to_hbm [thread:$0]  %s5269, 2048, %s5271, %s5256, 256, 256, 16
        $region32: #{conv_layer_forward.1} parent=27 // pred_fallthru
          _
      $region28: #{conv_layer_forward.1} parent=5 // pred_fallthru
        _
      %p5277 = scmp.le.s32.totalorder 2, %s11
      // Predicated region
      $region33: #{conv_layer_forward.1} parent=5 // pred_check
        %p5278 = pneg %p5277
      $region34: #{conv_layer_forward.1} parent=5 // pred_check_branch
        %5280 = sbr.rel (%p5278) target = $region36
      $region35: #{conv_layer_forward.1} parent=5 // pred_region
        %s5281 = ssub.s32 %s11, 2
        // Predicated region
        $region37: #{conv_layer_forward.1} parent=35 // pred_check
          %p5282 = pneg %p87
        $region38: #{conv_layer_forward.1} parent=35 // pred_check_branch
          %5284 = sbr.rel (%p5282) target = $region40
        $region39: #{conv_layer_forward.1} parent=35 // pred_region
          %s5285 = sand.u32 %s72, 1
          %s5286 = scalar_lea.sflag [#allocation5], %s5285
          %s5287 = sand.u32 %s72, 1
          %s5288 = smul.addr %s5287, 128
          %s5289 = scalar_lea.vmem [#allocation4], %s5288
          %5291 = dma.done %s5286, 2048
        $region40: #{conv_layer_forward.1} parent=35 // pred_fallthru
          _
      $region36: #{conv_layer_forward.1} parent=5 // pred_fallthru
        _
    $region6: #{conv_layer_forward.1} parent=1 // loop_footer
      %s15 = sadd.s32 1, %s11
    $region7: #{conv_layer_forward.1} parent=1 // loop_footer_branch
      %10 = sbr.rel target = $region3
    $region8: #{conv_layer_forward.1} parent=1 // loop_exit
      _
    %5292 = vsyncpa [#allocation5], 1
    %s5293 = scalar_lea.sflag [#allocation5], 1
    %5294 = vsyncpa %s5293, 1

</llo_original>
